<compile_context>
chip_gen: v6e
topology: v6e:2x2x1
jax: 0.10.0
libtpu: 0.0.40
codegen_flags: <defaults>
</compile_context>

<pallas_src>
import functools

import jax
import jax.numpy as jnp
from jax import lax
from jax.experimental import pallas as pl
from jax.experimental.pallas import tpu as pltpu

EPS = 1e-5  # nn.GroupNorm default eps


def convblock_kernel(x_ref, w_ref, gamma_ref, beta_ref, o_ref, patch_ref, *,
                     k, s, Hout, Wout, act):
    # x_ref:     (NB, Hp, Wp, Cin)  bf16  zero-padded NHWC input block
    # w_ref:     (Cout, K)          bf16  K = k*k*Cin, ordered (kh, kw, cin)
    # gamma_ref: (Cout, 1)          f32
    # beta_ref:  (Cout, 1)          f32
    # o_ref:     (NB, Cout, P)      f32   P = Hout*Wout (NCHW-contiguous)
    # patch_ref: (P, K)             bf16  VMEM scratch (im2col patch, per sample)
    NB, Cout, P = o_ref.shape
    Cin = x_ref.shape[-1]
    n = float(Cout * P)

    w2 = w_ref[...]          # (Cout, K) bf16 -- loaded once, reused for all samples
    gamma = gamma_ref[...]   # (Cout, 1) f32
    beta = beta_ref[...]

    for nb in range(NB):
        # --- im2col into VMEM: patch[p, (kh*k+kw)*Cin + cin] = xpad[ho+kh, wo+kw, cin]
        # With Wout % 8 == 0 the (Hout, Wout, Cin) -> (P, Cin) reshape is a pure
        # retiling (sublane-merge), so each tap store is cheap shift work, not a
        # full relayout.
        for kh in range(k):
            for kw in range(k):
                t = kh * k + kw
                if s == 1:
                    win = x_ref[nb, kh:kh + Hout, kw:kw + Wout, :]
                else:
                    # TODO(synk): strided taps (s > 1) rely on pl.ds stride
                    # support on spatial dims; untested.
                    win = x_ref[nb, pl.ds(kh, Hout, stride=s),
                                pl.ds(kw, Wout, stride=s), :]
                patch_ref[:, t * Cin:(t + 1) * Cin] = win.reshape(P, Cin)

        # --- conv: one bf16 MXU contraction over K, f32 accumulation.
        # out (Cout, P) = W (Cout, K) . patch (P, K)^T  (minor-dim contraction)
        acc = lax.dot_general(
            w2, patch_ref[...],
            dimension_numbers=(((1,), (1,)), ((), ())),
            preferred_element_type=jnp.float32)              # (Cout, P) f32

        # --- GroupNorm(num_groups=1): stats over all (C, H, W) of this sample.
        # Two-pass mean/var (avoids sumsq - mean^2 cancellation); f32 throughout.
        mean = jnp.sum(acc) / n
        centered = acc - mean
        var = jnp.sum(centered * centered) / n
        y = centered * lax.rsqrt(var + EPS)
        y = y * gamma + beta          # per-channel affine, sublane broadcast
        if act:
            y = jnp.maximum(y, 0.0)
        o_ref[nb] = y                 # lane-dense f32 store, already NCHW layout


def conv_block(x_nchw, weight, gamma, beta, *, k, s=1, p=0, g=1, act=True):
    """Pallas implementation of ConvBlock.forward.

    x_nchw: (B, Cin, H, W)   weight: (Cout, Cin, k, k)   gamma/beta: (Cout,)
    returns: (B, Cout, Hout, Wout) float32
    """
    assert g == 1  # TODO(synk): grouped conv (g > 1) not implemented in this kernel.
    B, Cin, H, W = x_nchw.shape
    Cout = weight.shape[0]
    Hout = (H + 2 * p - k) // s + 1
    Wout = (W + 2 * p - k) // s + 1
    P = Hout * Wout
    Hp, Wp = H + 2 * p, W + 2 * p
    K = k * k * Cin

    # Batch block size: amortize per-grid-step overhead, but keep >= 2 grid
    # steps when B allows so both v7x TensorCores get work.
    NB = min(8, max(1, B // 2))
    while B % NB:
        NB -= 1

    # --- glue: NCHW -> NHWC, spatial zero-pad, bf16 cast. XLA fuses these into
    # a single tiny copy; all output-side passes are handled by the kernel layout.
    x = jnp.transpose(x_nchw, (0, 2, 3, 1))
    x = jnp.pad(x, ((0, 0), (p, p), (p, p), (0, 0))).astype(jnp.bfloat16)

    # weight (Cout, Cin, kh, kw) -> (Cout, K) with K ordered (kh, kw, cin),
    # matching the in-kernel patch column order.
    w2 = jnp.transpose(weight, (0, 2, 3, 1)).reshape(Cout, K).astype(jnp.bfloat16)
    gamma2 = gamma.astype(jnp.float32).reshape(Cout, 1)
    beta2 = beta.astype(jnp.float32).reshape(Cout, 1)

    kern = functools.partial(convblock_kernel, k=k, s=s, Hout=Hout, Wout=Wout,
                             act=act)
    out = pl.pallas_call(
        kern,
        out_shape=jax.ShapeDtypeStruct((B, Cout, P), jnp.float32),
        grid=(B // NB,),
        in_specs=[
            pl.BlockSpec((NB, Hp, Wp, Cin), lambda b: (b, 0, 0, 0)),
            pl.BlockSpec((Cout, K), lambda b: (0, 0)),
            pl.BlockSpec((Cout, 1), lambda b: (0, 0)),
            pl.BlockSpec((Cout, 1), lambda b: (0, 0)),
        ],
        out_specs=pl.BlockSpec((NB, Cout, P), lambda b: (b, 0, 0)),
        scratch_shapes=[pltpu.VMEM((P, K), jnp.bfloat16)],
        compiler_params=pltpu.CompilerParams(
            dimension_semantics=("parallel",),
            # Actual footprint here is well under 1 MiB; 32 MiB also fits the
            # v7x 64 MiB budget with headroom.
            vmem_limit_bytes=32 * 1024 * 1024,
        ),
    )(x, w2, gamma2, beta2)

    # (B, Cout, P) is already NCHW-contiguous: this reshape is metadata-only.
    return out.reshape(B, Cout, Hout, Wout)


def reference_conv_block(x, weight, gamma, beta, *, k, s, p, act):
    """Pure-JAX reference (mirrors the PyTorch module semantics)."""
    y = lax.conv_general_dilated(
        x, weight, window_strides=(s, s), padding=[(p, p), (p, p)],
        dimension_numbers=("NCHW", "OIHW", "NCHW"),
        precision=lax.Precision.HIGHEST)
    mean = jnp.mean(y, axis=(1, 2, 3), keepdims=True)
    var = jnp.mean(jnp.square(y - mean), axis=(1, 2, 3), keepdims=True)
    yn = (y - mean) / jnp.sqrt(var + EPS)
    yn = yn * gamma.reshape(1, -1, 1, 1) + beta.reshape(1, -1, 1, 1)
    if act:
        yn = jnp.maximum(yn, 0.0)
    return yn


if __name__ == "__main__":
    # Shapes consistent with ConvBlock(inp=4, outp=8, k=3, s=1, p=1, g=1, act=True)
    B, Cin, H, W = 2, 4, 16, 16
    Cout, k, s, p = 8, 3, 1, 1

    key = jax.random.PRNGKey(0)
    kx, kw_, kg, kb = jax.random.split(key, 4)

    x = jax.random.normal(kx, (B, Cin, H, W), dtype=jnp.float32)
    fan_in = Cin * k * k
    weight = jax.random.normal(kw_, (Cout, Cin, k, k), dtype=jnp.float32) / jnp.sqrt(fan_in)
    gamma = 1.0 + 0.1 * jax.random.normal(kg, (Cout,), dtype=jnp.float32)
    beta = 0.1 * jax.random.normal(kb, (Cout,), dtype=jnp.float32)

    out = conv_block(x, weight, gamma, beta, k=k, s=s, p=p, g=1, act=True)
    out = jax.block_until_ready(out)

    ref = reference_conv_block(x, weight, gamma, beta, k=k, s=s, p=p, act=True)
    assert out.shape == (B, Cout, H, W), out.shape
    max_err = float(jnp.max(jnp.abs(out - ref)))
    # bf16 matmul operands vs f32 reference -> slightly looser tolerance.
    assert jnp.allclose(out, ref, atol=2e-2, rtol=2e-2), max_err

    print("KERNEL_OK")
</pallas_src>

<mosaic_0001>
module attributes {stable_mosaic.version = 11 : i64} {
  func.func @convblock_kernel(%arg0: i32, %arg1: memref<1x18x18x4xbf16, #tpu.memory_space<vmem>>, %arg2: memref<8x36xbf16, #tpu.memory_space<vmem>>, %arg3: memref<8x1xf32, #tpu.memory_space<vmem>>, %arg4: memref<8x1xf32, #tpu.memory_space<vmem>>, %arg5: memref<1x8x256xf32, #tpu.memory_space<vmem>>, %arg6: memref<256x36xbf16, #tpu.memory_space<vmem>>) attributes {dimension_semantics = [#tpu.dimension_semantics<parallel>], iteration_bounds = array<i64: 2>, scalar_prefetch = 0 : i64, scratch_operands = 1 : i64, tpu.core_type = #tpu.core_type<tc>, window_params = [{transform_indices = @transform_0, window_bounds = array<i64: 1, 18, 18, 4>}, {pipeline_mode = #tpu.pipeline_mode<synchronous>, transform_indices = @transform_1, window_bounds = array<i64: 8, 36>}, {pipeline_mode = #tpu.pipeline_mode<synchronous>, transform_indices = @transform_2, window_bounds = array<i64: 8, 1>}, {pipeline_mode = #tpu.pipeline_mode<synchronous>, transform_indices = @transform_3, window_bounds = array<i64: 8, 1>}, {transform_indices = @transform_4, window_bounds = array<i64: 1, 8, 256>}]} {
    %c0 = arith.constant 0 : index
    %c0_0 = arith.constant 0 : index
    %0 = vector.load %arg2[%c0, %c0_0] : memref<8x36xbf16, #tpu.memory_space<vmem>>, vector<8x36xbf16>
    %c0_1 = arith.constant 0 : index
    %c0_2 = arith.constant 0 : index
    %1 = vector.load %arg3[%c0_1, %c0_2] : memref<8x1xf32, #tpu.memory_space<vmem>>, vector<8x1xf32>
    %c0_3 = arith.constant 0 : index
    %c0_4 = arith.constant 0 : index
    %2 = vector.load %arg4[%c0_3, %c0_4] : memref<8x1xf32, #tpu.memory_space<vmem>>, vector<8x1xf32>
    %c0_5 = arith.constant 0 : index
    %c0_6 = arith.constant 0 : index
    %c0_7 = arith.constant 0 : index
    %c0_8 = arith.constant 0 : index
    %3 = vector.load %arg1[%c0_5, %c0_6, %c0_7, %c0_8] : memref<1x18x18x4xbf16, #tpu.memory_space<vmem>>, vector<1x16x16x4xbf16>
    %4 = vector.shape_cast %3 : vector<1x16x16x4xbf16> to vector<16x16x4xbf16>
    %5 = vector.shape_cast %4 : vector<16x16x4xbf16> to vector<256x4xbf16>
    %c0_9 = arith.constant 0 : index
    %c0_10 = arith.constant 0 : index
    %6 = vector.load %arg6[%c0_9, %c0_10] : memref<256x36xbf16, #tpu.memory_space<vmem>>, vector<256x4xbf16>
    tpu.vector_store %arg6[%c0_9, %c0_10], %5 {strides = array<i32>} : memref<256x36xbf16, #tpu.memory_space<vmem>>, vector<256x4xbf16>,
    %c0_11 = arith.constant 0 : index
    %c0_12 = arith.constant 0 : index
    %c1 = arith.constant 1 : index
    %c0_13 = arith.constant 0 : index
    %7 = vector.load %arg1[%c0_11, %c0_12, %c1, %c0_13] : memref<1x18x18x4xbf16, #tpu.memory_space<vmem>>, vector<1x16x16x4xbf16>
    %8 = vector.shape_cast %7 : vector<1x16x16x4xbf16> to vector<16x16x4xbf16>
    %9 = vector.shape_cast %8 : vector<16x16x4xbf16> to vector<256x4xbf16>
    %c0_14 = arith.constant 0 : index
    %c4 = arith.constant 4 : index
    %10 = vector.load %arg6[%c0_14, %c4] : memref<256x36xbf16, #tpu.memory_space<vmem>>, vector<256x4xbf16>
    tpu.vector_store %arg6[%c0_14, %c4], %9 {strides = array<i32>} : memref<256x36xbf16, #tpu.memory_space<vmem>>, vector<256x4xbf16>,
    %c0_15 = arith.constant 0 : index
    %c0_16 = arith.constant 0 : index
    %c2 = arith.constant 2 : index
    %c0_17 = arith.constant 0 : index
    %11 = vector.load %arg1[%c0_15, %c0_16, %c2, %c0_17] : memref<1x18x18x4xbf16, #tpu.memory_space<vmem>>, vector<1x16x16x4xbf16>
    %12 = vector.shape_cast %11 : vector<1x16x16x4xbf16> to vector<16x16x4xbf16>
    %13 = vector.shape_cast %12 : vector<16x16x4xbf16> to vector<256x4xbf16>
    %c0_18 = arith.constant 0 : index
    %c8 = arith.constant 8 : index
    %14 = vector.load %arg6[%c0_18, %c8] : memref<256x36xbf16, #tpu.memory_space<vmem>>, vector<256x4xbf16>
    tpu.vector_store %arg6[%c0_18, %c8], %13 {strides = array<i32>} : memref<256x36xbf16, #tpu.memory_space<vmem>>, vector<256x4xbf16>,
    %c0_19 = arith.constant 0 : index
    %c1_20 = arith.constant 1 : index
    %c0_21 = arith.constant 0 : index
    %c0_22 = arith.constant 0 : index
    %15 = vector.load %arg1[%c0_19, %c1_20, %c0_21, %c0_22] : memref<1x18x18x4xbf16, #tpu.memory_space<vmem>>, vector<1x16x16x4xbf16>
    %16 = vector.shape_cast %15 : vector<1x16x16x4xbf16> to vector<16x16x4xbf16>
    %17 = vector.shape_cast %16 : vector<16x16x4xbf16> to vector<256x4xbf16>
    %c0_23 = arith.constant 0 : index
    %c12 = arith.constant 12 : index
    %18 = vector.load %arg6[%c0_23, %c12] : memref<256x36xbf16, #tpu.memory_space<vmem>>, vector<256x4xbf16>
    tpu.vector_store %arg6[%c0_23, %c12], %17 {strides = array<i32>} : memref<256x36xbf16, #tpu.memory_space<vmem>>, vector<256x4xbf16>,
    %c0_24 = arith.constant 0 : index
    %c1_25 = arith.constant 1 : index
    %c1_26 = arith.constant 1 : index
    %c0_27 = arith.constant 0 : index
    %19 = vector.load %arg1[%c0_24, %c1_25, %c1_26, %c0_27] : memref<1x18x18x4xbf16, #tpu.memory_space<vmem>>, vector<1x16x16x4xbf16>
    %20 = vector.shape_cast %19 : vector<1x16x16x4xbf16> to vector<16x16x4xbf16>
    %21 = vector.shape_cast %20 : vector<16x16x4xbf16> to vector<256x4xbf16>
    %c0_28 = arith.constant 0 : index
    %c16 = arith.constant 16 : index
    %22 = vector.load %arg6[%c0_28, %c16] : memref<256x36xbf16, #tpu.memory_space<vmem>>, vector<256x4xbf16>
    tpu.vector_store %arg6[%c0_28, %c16], %21 {strides = array<i32>} : memref<256x36xbf16, #tpu.memory_space<vmem>>, vector<256x4xbf16>,
    %c0_29 = arith.constant 0 : index
    %c1_30 = arith.constant 1 : index
    %c2_31 = arith.constant 2 : index
    %c0_32 = arith.constant 0 : index
    %23 = vector.load %arg1[%c0_29, %c1_30, %c2_31, %c0_32] : memref<1x18x18x4xbf16, #tpu.memory_space<vmem>>, vector<1x16x16x4xbf16>
    %24 = vector.shape_cast %23 : vector<1x16x16x4xbf16> to vector<16x16x4xbf16>
    %25 = vector.shape_cast %24 : vector<16x16x4xbf16> to vector<256x4xbf16>
    %c0_33 = arith.constant 0 : index
    %c20 = arith.constant 20 : index
    %26 = vector.load %arg6[%c0_33, %c20] : memref<256x36xbf16, #tpu.memory_space<vmem>>, vector<256x4xbf16>
    tpu.vector_store %arg6[%c0_33, %c20], %25 {strides = array<i32>} : memref<256x36xbf16, #tpu.memory_space<vmem>>, vector<256x4xbf16>,
    %c0_34 = arith.constant 0 : index
    %c2_35 = arith.constant 2 : index
    %c0_36 = arith.constant 0 : index
    %c0_37 = arith.constant 0 : index
    %27 = vector.load %arg1[%c0_34, %c2_35, %c0_36, %c0_37] : memref<1x18x18x4xbf16, #tpu.memory_space<vmem>>, vector<1x16x16x4xbf16>
    %28 = vector.shape_cast %27 : vector<1x16x16x4xbf16> to vector<16x16x4xbf16>
    %29 = vector.shape_cast %28 : vector<16x16x4xbf16> to vector<256x4xbf16>
    %c0_38 = arith.constant 0 : index
    %c24 = arith.constant 24 : index
    %30 = vector.load %arg6[%c0_38, %c24] : memref<256x36xbf16, #tpu.memory_space<vmem>>, vector<256x4xbf16>
    tpu.vector_store %arg6[%c0_38, %c24], %29 {strides = array<i32>} : memref<256x36xbf16, #tpu.memory_space<vmem>>, vector<256x4xbf16>,
    %c0_39 = arith.constant 0 : index
    %c2_40 = arith.constant 2 : index
    %c1_41 = arith.constant 1 : index
    %c0_42 = arith.constant 0 : index
    %31 = vector.load %arg1[%c0_39, %c2_40, %c1_41, %c0_42] : memref<1x18x18x4xbf16, #tpu.memory_space<vmem>>, vector<1x16x16x4xbf16>
    %32 = vector.shape_cast %31 : vector<1x16x16x4xbf16> to vector<16x16x4xbf16>
    %33 = vector.shape_cast %32 : vector<16x16x4xbf16> to vector<256x4xbf16>
    %c0_43 = arith.constant 0 : index
    %c28 = arith.constant 28 : index
    %34 = vector.load %arg6[%c0_43, %c28] : memref<256x36xbf16, #tpu.memory_space<vmem>>, vector<256x4xbf16>
    tpu.vector_store %arg6[%c0_43, %c28], %33 {strides = array<i32>} : memref<256x36xbf16, #tpu.memory_space<vmem>>, vector<256x4xbf16>,
    %c0_44 = arith.constant 0 : index
    %c2_45 = arith.constant 2 : index
    %c2_46 = arith.constant 2 : index
    %c0_47 = arith.constant 0 : index
    %35 = vector.load %arg1[%c0_44, %c2_45, %c2_46, %c0_47] : memref<1x18x18x4xbf16, #tpu.memory_space<vmem>>, vector<1x16x16x4xbf16>
    %36 = vector.shape_cast %35 : vector<1x16x16x4xbf16> to vector<16x16x4xbf16>
    %37 = vector.shape_cast %36 : vector<16x16x4xbf16> to vector<256x4xbf16>
    %c0_48 = arith.constant 0 : index
    %c32 = arith.constant 32 : index
    %38 = vector.load %arg6[%c0_48, %c32] : memref<256x36xbf16, #tpu.memory_space<vmem>>, vector<256x4xbf16>
    tpu.vector_store %arg6[%c0_48, %c32], %37 {strides = array<i32>} : memref<256x36xbf16, #tpu.memory_space<vmem>>, vector<256x4xbf16>,
    %c0_49 = arith.constant 0 : index
    %c0_50 = arith.constant 0 : index
    %39 = vector.load %arg6[%c0_49, %c0_50] : memref<256x36xbf16, #tpu.memory_space<vmem>>, vector<256x36xbf16>
    %cst = arith.constant dense<0.000000e+00> : vector<8x256xf32>
    %40 = tpu.matmul %0, %39, %cst {dimension_numbers = #tpu.dot_dimension_numbers<[1], [1], [0], [0], [0, 0, 1, 0], [], []>} : vector<8x36xbf16>, vector<256x36xbf16>, vector<8x256xf32> -> vector<8x256xf32>
    %41 = vector.shape_cast %40 : vector<8x256xf32> to vector<1x8x256xf32>
    %cst_51 = arith.constant dense<0.000000e+00> : vector<1xf32>
    %42 = vector.multi_reduction <add>, %41, %cst_51 [1, 2] : vector<1x8x256xf32> to vector<1xf32>
    %43 = vector.shape_cast %42 : vector<1xf32> to vector<1x1x1xf32>
    %44 = vector.extract %43[0, 0, 0] : f32 from vector<1x1x1xf32>
    %cst_52 = arith.constant 2.048000e+03 : f32
    %45 = arith.divf %44, %cst_52 : f32
    %46 = vector.broadcast %45 : f32 to vector<8x256xf32>
    %47 = arith.subf %40, %46 : vector<8x256xf32>
    %48 = arith.mulf %47, %47 : vector<8x256xf32>
    %49 = vector.shape_cast %48 : vector<8x256xf32> to vector<1x8x256xf32>
    %cst_53 = arith.constant dense<0.000000e+00> : vector<1xf32>
    %50 = vector.multi_reduction <add>, %49, %cst_53 [1, 2] : vector<1x8x256xf32> to vector<1xf32>
    %51 = vector.shape_cast %50 : vector<1xf32> to vector<1x1x1xf32>
    %52 = vector.extract %51[0, 0, 0] : f32 from vector<1x1x1xf32>
    %cst_54 = arith.constant 2.048000e+03 : f32
    %53 = arith.divf %52, %cst_54 : f32
    %cst_55 = arith.constant 9.99999974E-6 : f32
    %54 = arith.addf %53, %cst_55 : f32
    %55 = math.rsqrt %54 : f32
    %56 = vector.broadcast %55 : f32 to vector<8x256xf32>
    %57 = arith.mulf %47, %56 : vector<8x256xf32>
    %58 = vector.broadcast %1 : vector<8x1xf32> to vector<8x256xf32>
    %59 = arith.mulf %57, %58 : vector<8x256xf32>
    %60 = vector.broadcast %2 : vector<8x1xf32> to vector<8x256xf32>
    %61 = arith.addf %59, %60 : vector<8x256xf32>
    %cst_56 = arith.constant 0.000000e+00 : f32
    %62 = vector.broadcast %cst_56 : f32 to vector<8x256xf32>
    %63 = arith.maximumf %61, %62 : vector<8x256xf32>
    %c0_57 = arith.constant 0 : index
    %c0_58 = arith.constant 0 : index
    %c0_59 = arith.constant 0 : index
    %64 = vector.load %arg5[%c0_57, %c0_58, %c0_59] : memref<1x8x256xf32, #tpu.memory_space<vmem>>, vector<1x8x256xf32>
    %65 = vector.shape_cast %64 : vector<1x8x256xf32> to vector<8x256xf32>
    %66 = vector.shape_cast %63 : vector<8x256xf32> to vector<1x8x256xf32>
    tpu.vector_store %arg5[%c0_57, %c0_58, %c0_59], %66 {strides = array<i32>} : memref<1x8x256xf32, #tpu.memory_space<vmem>>, vector<1x8x256xf32>,
    return
  }
  func.func @transform_0(%arg0: i32) -> (i32, i32, i32, i32) {
    %c0_i32 = arith.constant 0 : i32
    %c0_i32_0 = arith.constant 0 : i32
    %c0_i32_1 = arith.constant 0 : i32
    %c0_i32_2 = arith.constant 0 : i32
    return %arg0, %c0_i32, %c0_i32_0, %c0_i32_1 : i32, i32, i32, i32
  }
  func.func @transform_1(%arg0: i32) -> (i32, i32) {
    %c0_i32 = arith.constant 0 : i32
    %c0_i32_0 = arith.constant 0 : i32
    %c0_i32_1 = arith.constant 0 : i32
    return %c0_i32, %c0_i32_0 : i32, i32
  }
  func.func @transform_2(%arg0: i32) -> (i32, i32) {
    %c0_i32 = arith.constant 0 : i32
    %c0_i32_0 = arith.constant 0 : i32
    %c0_i32_1 = arith.constant 0 : i32
    return %c0_i32, %c0_i32_0 : i32, i32
  }
  func.func @transform_3(%arg0: i32) -> (i32, i32) {
    %c0_i32 = arith.constant 0 : i32
    %c0_i32_0 = arith.constant 0 : i32
    %c0_i32_1 = arith.constant 0 : i32
    return %c0_i32, %c0_i32_0 : i32, i32
  }
  func.func @transform_4(%arg0: i32) -> (i32, i32, i32) {
    %c0_i32 = arith.constant 0 : i32
    %c0_i32_0 = arith.constant 0 : i32
    %c0_i32_1 = arith.constant 0 : i32
    return %arg0, %c0_i32, %c0_i32_0 : i32, i32, i32
  }
}

</mosaic_0001>

<llo_original>
// kernel: tpu_custom_call.1
$region0: #{tpu_custom_call.1}
  #allocation0 [shape = 'u32[]', space=smem, size = 0x4, offset = 0x4, fixed_abs, tag = 'smem constant byte address 0x4 - core index']
  #allocation1 [shape = 'u32[144,128]{1,0:T(1,128)}', space=vmem, size = 0x12000, scoped, tag = 'internal scratch']
  #allocation2 [shape = 'bf16[256,36]{1,0:T(8,128)(2,1)}', space=vmem, size = 0x10000, scoped, tag = 'scratch operand']
  %s0 = inlined_call_operand.vmem [shape: bf16[2,18,18,4], index: 0, kind: input, shape index: {}]
  %s1 = inlined_call_operand.vmem [shape: bf16[8,36], index: 1, kind: input, shape index: {}]
  %s2 = inlined_call_operand.vmem [shape: f32[8,1], index: 2, kind: input, shape index: {}]
  %s3 = inlined_call_operand.vmem [shape: f32[8,1], index: 3, kind: input, shape index: {}]
  %s4 = inlined_call_operand.hbm [shape: f32[2,8,256], index: 4, kind: output, shape index: {}]
  %s5 = sld [smem:[#allocation0]]
  $region49: #{tpu_custom_call.1} parent=0
    _
  %s7 = ssub.s32 1, %s5
  %s8 = scalar_select 0, %s7, %s5
  $region1: #{tpu_custom_call.1} parent=0
    #allocation3 [shape = 'u8[16384]{0}', space=vmem, size = 0x4000, scoped, tag = 'output window, operand 0']
    #allocation4 [shape = 's32[2]{0}', space=sflag, size = 0x8, scoped, tag = 'scoped memory for tpu_custom_call.1']
    %9 = vsyncpa [#allocation4], 0
    %s10 = scalar_lea.sflag [#allocation4], 1
    %11 = vsyncpa %s10, 0
    loop: start=0, step=1, limit=4
    $region2: #{tpu_custom_call.1} parent=1 // loop_pre_header
      _
    $region3: #{tpu_custom_call.1} parent=1 // loop_header
      %s13 = sphi 0, %s17
      %p14 = scmp.ge.s32.totalorder %s13, 4
      %s23 = sphi 0, %s25
      %s26 = sphi 0, %s23
      %s27 = sphi 0, %s26
      %s43 = sphi 0, %s27
      %s47 = sphi 0, %s47
      %s49 = sphi 0, %s47
      %s50 = sphi 0, %s49
      %s64 = sphi 0, %s50
      %s68 = sphi 0, %s68
      %s70 = sphi 0, %s68
      %s71 = sphi 0, %s70
      %s85 = sphi 0, %s71
      %s89 = sphi 0, %s89
      %s91 = sphi 0, %s89
      %s92 = sphi 0, %s91
      %s106 = sphi 0, %s92
      %s112 = sphi 0, %s114
      %s115 = sphi 0, %s112
      %s116 = sphi 0, %s115
      %s132 = sphi 0, %s116
    $region4: #{tpu_custom_call.1} parent=1 // loop_header_branch
      %16 = sbr.rel (%p14) target = $region8
    $region5: #{tpu_custom_call.1} parent=1 // loop_body
      %s18 = ssub.s32 %s13, 1
      %s19 = ssub.s32 %s13, 2
      %s20 = sadd.s32 %s13, 1
      %s21 = ssub.s32 %s13, %s20
      %p22 = scmp.eq.s32.totalorder %s21, 0
      %s24 = sadd.s32 %s23, 1
      %s25 = scalar_select %p22, %s23, %s24
      %p28 = pneg %p22
      %p29 = scmp.eq.s32.totalorder %s13, 1
      %p30 = por %p28, %p29
      %p31 = scmp.ne.s32.totalorder %s23, %s26
      %p32 = scmp.eq.s32.totalorder %s13, 0
      %p33 = por %p31, %p32
      %p34 = scmp.ne.s32.totalorder %s23, %s26
      %p35 = scmp.eq.s32.totalorder %s18, 1
      %p36 = por %p34, %p35
      %p37 = scmp.ne.s32.totalorder %s26, %s27
      %p38 = scmp.eq.s32.totalorder %s18, 0
      %p39 = por %p37, %p38
      %p40 = scmp.ne.s32.totalorder %s26, %s27
      %p41 = scmp.eq.s32.totalorder %s19, 1
      %p42 = por %p40, %p41
      %p44 = scmp.ne.s32.totalorder %s27, %s43
      %p45 = scmp.eq.s32.totalorder %s19, 0
      %p46 = por %p44, %p45
      %s48 = sadd.s32 %s47, 1
      %p51 = scmp.eq.s32.totalorder %s13, 1
      %p52 = scmp.ne.s32.totalorder %s47, %s49
      %p53 = scmp.eq.s32.totalorder %s13, 0
      %p54 = por %p52, %p53
      %p55 = scmp.ne.s32.totalorder %s47, %s49
      %p56 = scmp.eq.s32.totalorder %s18, 1
      %p57 = por %p55, %p56
      %p58 = scmp.ne.s32.totalorder %s49, %s50
      %p59 = scmp.eq.s32.totalorder %s18, 0
      %p60 = por %p58, %p59
      %p61 = scmp.ne.s32.totalorder %s49, %s50
      %p62 = scmp.eq.s32.totalorder %s19, 1
      %p63 = por %p61, %p62
      %p65 = scmp.ne.s32.totalorder %s50, %s64
      %p66 = scmp.eq.s32.totalorder %s19, 0
      %p67 = por %p65, %p66
      %s69 = sadd.s32 %s68, 1
      %p72 = scmp.eq.s32.totalorder %s13, 1
      %p73 = scmp.ne.s32.totalorder %s68, %s70
      %p74 = scmp.eq.s32.totalorder %s13, 0
      %p75 = por %p73, %p74
      %p76 = scmp.ne.s32.totalorder %s68, %s70
      %p77 = scmp.eq.s32.totalorder %s18, 1
      %p78 = por %p76, %p77
      %p79 = scmp.ne.s32.totalorder %s70, %s71
      %p80 = scmp.eq.s32.totalorder %s18, 0
      %p81 = por %p79, %p80
      %p82 = scmp.ne.s32.totalorder %s70, %s71
      %p83 = scmp.eq.s32.totalorder %s19, 1
      %p84 = por %p82, %p83
      %p86 = scmp.ne.s32.totalorder %s71, %s85
      %p87 = scmp.eq.s32.totalorder %s19, 0
      %p88 = por %p86, %p87
      %s90 = sadd.s32 %s89, 1
      %p93 = scmp.eq.s32.totalorder %s13, 1
      %p94 = scmp.ne.s32.totalorder %s89, %s91
      %p95 = scmp.eq.s32.totalorder %s13, 0
      %p96 = por %p94, %p95
      %p97 = scmp.ne.s32.totalorder %s89, %s91
      %p98 = scmp.eq.s32.totalorder %s18, 1
      %p99 = por %p97, %p98
      %p100 = scmp.ne.s32.totalorder %s91, %s92
      %p101 = scmp.eq.s32.totalorder %s18, 0
      %p102 = por %p100, %p101
      %p103 = scmp.ne.s32.totalorder %s91, %s92
      %p104 = scmp.eq.s32.totalorder %s19, 1
      %p105 = por %p103, %p104
      %p107 = scmp.ne.s32.totalorder %s92, %s106
      %p108 = scmp.eq.s32.totalorder %s19, 0
      %p109 = por %p107, %p108
      %s110 = ssub.s32 %s13, %s20
      %p111 = scmp.eq.s32.totalorder %s110, 0
      %s113 = sadd.s32 %s112, 1
      %s114 = scalar_select %p111, %s112, %s113
      %p117 = pneg %p111
      %p118 = scmp.eq.s32.totalorder %s13, 1
      %p119 = por %p117, %p118
      %p120 = scmp.ne.s32.totalorder %s112, %s115
      %p121 = scmp.eq.s32.totalorder %s13, 0
      %p122 = por %p120, %p121
      %p123 = scmp.ne.s32.totalorder %s112, %s115
      %p124 = scmp.eq.s32.totalorder %s18, 1
      %p125 = por %p123, %p124
      %p126 = scmp.ne.s32.totalorder %s115, %s116
      %p127 = scmp.eq.s32.totalorder %s18, 0
      %p128 = por %p126, %p127
      %p129 = scmp.ne.s32.totalorder %s115, %s116
      %p130 = scmp.eq.s32.totalorder %s19, 1
      %p131 = por %p129, %p130
      %p133 = scmp.ne.s32.totalorder %s116, %s132
      %p134 = scmp.eq.s32.totalorder %s19, 0
      %p135 = por %p133, %p134
      %p136 = scmp.le.s32.totalorder 1, %s13
      %p137 = scmp.lt.s32.totalorder %s13, 3
      %p138 = pnand %p136, %p137
      %p139 = pneg %p138
      // Predicated region
      $region9: #{tpu_custom_call.1} parent=5 // pred_check
        _
      $region10: #{tpu_custom_call.1} parent=5 // pred_check_branch
        %141 = sbr.rel (%p138) target = $region12
      $region11: #{tpu_custom_call.1} parent=5 // pred_region
        %s142 = ssub.s32 %s13, 1
        // Predicated region
        $region13: #{tpu_custom_call.1} parent=11 // pred_check
          %p143 = pneg %p60
        $region14: #{tpu_custom_call.1} parent=11 // pred_check_branch
          %145 = sbr.rel (%p143) target = $region16
        $region15: #{tpu_custom_call.1} parent=11 // pred_region
          _
        $region16: #{tpu_custom_call.1} parent=11 // pred_fallthru
          _
        // Predicated region
        $region17: #{tpu_custom_call.1} parent=11 // pred_check
          %p146 = pneg %p81
        $region18: #{tpu_custom_call.1} parent=11 // pred_check_branch
          %148 = sbr.rel (%p146) target = $region20
        $region19: #{tpu_custom_call.1} parent=11 // pred_region
          _
        $region20: #{tpu_custom_call.1} parent=11 // pred_fallthru
          _
        // Predicated region
        $region21: #{tpu_custom_call.1} parent=11 // pred_check
          %p149 = pneg %p102
        $region22: #{tpu_custom_call.1} parent=11 // pred_check_branch
          %151 = sbr.rel (%p149) target = $region24
        $region23: #{tpu_custom_call.1} parent=11 // pred_region
          _
        $region24: #{tpu_custom_call.1} parent=11 // pred_fallthru
          _
      $region12: #{tpu_custom_call.1} parent=5 // pred_fallthru
        _
      %p152 = scmp.lt.s32.totalorder %s13, 2
      // Predicated region
      $region25: #{tpu_custom_call.1} parent=5 // pred_check
        %p153 = pneg %p152
      $region26: #{tpu_custom_call.1} parent=5 // pred_check_branch
        %155 = sbr.rel (%p153) target = $region28
      $region27: #{tpu_custom_call.1} parent=5 // pred_region
        // Predicated region
        $region29: #{tpu_custom_call.1} parent=27 // pred_check
          %p156 = pneg %p33
        $region30: #{tpu_custom_call.1} parent=27 // pred_check_branch
          %158 = sbr.rel (%p156) target = $region32
        $region31: #{tpu_custom_call.1} parent=27 // pred_region
          %p159 = scmp.lt.s32.totalorder %s13, 1
          %s160 = scalar_select %p159, %s13, 1
          %s161 = smul.addr %s160, 54
          %s162 = smul.addr %s161, 4
          %s163 = scalar_lea.vmem %s0, %s162
        $region32: #{tpu_custom_call.1} parent=27 // pred_fallthru
          _
      $region28: #{tpu_custom_call.1} parent=5 // pred_fallthru
        _
      %p164 = scmp.le.s32.totalorder 1, %s13
      %p165 = scmp.lt.s32.totalorder %s13, 3
      %p166 = pnand %p164, %p165
      %p167 = pneg %p166
      // Predicated region
      $region33: #{tpu_custom_call.1} parent=5 // pred_check
        _
      $region34: #{tpu_custom_call.1} parent=5 // pred_check_branch
        %169 = sbr.rel (%p166) target = $region36
      $region35: #{tpu_custom_call.1} parent=5 // pred_region
        %s170 = ssub.s32 %s13, 1
        %p171 = scmp.lt.s32.totalorder %s18, 1
        %s172 = scalar_select %p171, %s18, 1
        %s173 = smul.addr %s172, 54
        %s174 = smul.addr %s173, 4
        %s175 = scalar_lea.vmem %s0, %s174
        %p176 = pneg %p39
        %p177 = pneg %p36
        %p178 = pneg %p60
        %p179 = pneg %p57
        %p180 = pneg %p81
        %p181 = pneg %p78
        %p182 = pneg %p102
        %p183 = pneg %p99
        %p184 = pneg %p128
        %p185 = pneg %p125
        %s186 = sand.u32 %s115, 1
        %s187 = scalar_lea.sflag [#allocation4], %s186
        %s188 = sand.u32 %s115, 1
        %s189 = smul.addr %s188, 16
        %s190 = scalar_lea.vmem [#allocation3], %s189
        %p191 = scmp.lt.s32.totalorder %s18, 1
        %s192 = scalar_select %p191, %s18, 1
        %s193 = smul.addr %s192, 54
        %s194 = smul.addr %s193, 4
        %s195 = scalar_lea.vmem %s0, %s194
        %v197 = vld [vmem:[%s1] sm:$0xf]
        %v198 = vld [vmem:[%s2] sm:$0xff]
        %v199 = vld [vmem:[%s3] sm:$0xff]
        %v200 = vld [vmem:[%s195] sm:$0xf]
        %v201 = vld [vmem:[%s195 + $0x4] sm:$0xf]
        %v202 = vld [vmem:[%s195 + $0xc] sm:$0xf]
        %v203 = vld [vmem:[%s195 + $0x10] sm:$0xf]
        %v204 = vld [vmem:[%s195 + $0x18] sm:$0xf]
        %v205 = vld [vmem:[%s195 + $0x1c] sm:$0xf]
        %v206 = vld [vmem:[%s195 + $0x24] sm:$0xf]
        %v207 = vld [vmem:[%s195 + $0x28] sm:$0xf]
        %v208 = vld [vmem:[%s195 + $0x30] sm:$0xf]
        %v209 = vld [vmem:[%s195 + $0x34] sm:$0xf]
        %v210 = vld [vmem:[%s195 + $0x3c] sm:$0xf]
        %v211 = vld [vmem:[%s195 + $0x40] sm:$0xf]
        %v212 = vld [vmem:[%s195 + $0x48] sm:$0xf]
        %v213 = vld [vmem:[%s195 + $0x4c] sm:$0xf]
        %v214 = vld [vmem:[%s195 + $0x54] sm:$0xf]
        %v215 = vld [vmem:[%s195 + $0x58] sm:$0xf]
        %v216 = vld [vmem:[%s195 + $0x60] sm:$0xf]
        %v217 = vld [vmem:[%s195 + $0x64] sm:$0xf]
        %v218 = vld [vmem:[%s195 + $0x6c] sm:$0xf]
        %v219 = vld [vmem:[%s195 + $0x70] sm:$0xf]
        %v220 = vld [vmem:[%s195 + $0x78] sm:$0xf]
        %v221 = vld [vmem:[%s195 + $0x7c] sm:$0xf]
        %v222 = vld [vmem:[%s195 + $0x84] sm:$0xf]
        %v223 = vld [vmem:[%s195 + $0x88] sm:$0xf]
        %v224 = vld [vmem:[%s195 + $0x90] sm:$0xf]
        %v225 = vld [vmem:[%s195 + $0x94] sm:$0xf]
        %v226 = vld [vmem:[%s195 + $0x9c] sm:$0xf]
        %v227 = vld [vmem:[%s195 + $0xa0] sm:$0xf]
        %v228 = vld [vmem:[%s195 + $0xa8] sm:$0xf]
        %v229 = vld [vmem:[%s195 + $0xac] sm:$0xf]
        %v230 = vld [vmem:[%s195 + $0xb4] sm:$0xf]
        %v231 = vld [vmem:[%s195 + $0xb8] sm:$0xf]
        %vm232 = vcmask 27648
        %233 = vst.msk [vmem:[#allocation2] sm:$0xf] %vm232, %v200
        %234 = vst.msk [vmem:[#allocation2 + $0x4] sm:$0xf] %vm232, %v201
        %235 = vst.msk [vmem:[#allocation2 + $0x8] sm:$0xf] %vm232, %v202
        %236 = vst.msk [vmem:[#allocation2 + $0xc] sm:$0xf] %vm232, %v203
        %237 = vst.msk [vmem:[#allocation2 + $0x10] sm:$0xf] %vm232, %v204
        %238 = vst.msk [vmem:[#allocation2 + $0x14] sm:$0xf] %vm232, %v205
        %239 = vst.msk [vmem:[#allocation2 + $0x18] sm:$0xf] %vm232, %v206
        %240 = vst.msk [vmem:[#allocation2 + $0x1c] sm:$0xf] %vm232, %v207
        %241 = vst.msk [vmem:[#allocation2 + $0x20] sm:$0xf] %vm232, %v208
        %242 = vst.msk [vmem:[#allocation2 + $0x24] sm:$0xf] %vm232, %v209
        %243 = vst.msk [vmem:[#allocation2 + $0x28] sm:$0xf] %vm232, %v210
        %244 = vst.msk [vmem:[#allocation2 + $0x2c] sm:$0xf] %vm232, %v211
        %245 = vst.msk [vmem:[#allocation2 + $0x30] sm:$0xf] %vm232, %v212
        %246 = vst.msk [vmem:[#allocation2 + $0x34] sm:$0xf] %vm232, %v213
        %247 = vst.msk [vmem:[#allocation2 + $0x38] sm:$0xf] %vm232, %v214
        %248 = vst.msk [vmem:[#allocation2 + $0x3c] sm:$0xf] %vm232, %v215
        %249 = vst.msk [vmem:[#allocation2 + $0x40] sm:$0xf] %vm232, %v216
        %250 = vst.msk [vmem:[#allocation2 + $0x44] sm:$0xf] %vm232, %v217
        %251 = vst.msk [vmem:[#allocation2 + $0x48] sm:$0xf] %vm232, %v218
        %252 = vst.msk [vmem:[#allocation2 + $0x4c] sm:$0xf] %vm232, %v219
        %253 = vst.msk [vmem:[#allocation2 + $0x50] sm:$0xf] %vm232, %v220
        %254 = vst.msk [vmem:[#allocation2 + $0x54] sm:$0xf] %vm232, %v221
        %255 = vst.msk [vmem:[#allocation2 + $0x58] sm:$0xf] %vm232, %v222
        %256 = vst.msk [vmem:[#allocation2 + $0x5c] sm:$0xf] %vm232, %v223
        %257 = vst.msk [vmem:[#allocation2 + $0x60] sm:$0xf] %vm232, %v224
        %258 = vst.msk [vmem:[#allocation2 + $0x64] sm:$0xf] %vm232, %v225
        %259 = vst.msk [vmem:[#allocation2 + $0x68] sm:$0xf] %vm232, %v226
        %260 = vst.msk [vmem:[#allocation2 + $0x6c] sm:$0xf] %vm232, %v227
        %261 = vst.msk [vmem:[#allocation2 + $0x70] sm:$0xf] %vm232, %v228
        %262 = vst.msk [vmem:[#allocation2 + $0x74] sm:$0xf] %vm232, %v229
        %263 = vst.msk [vmem:[#allocation2 + $0x78] sm:$0xf] %vm232, %v230
        %264 = vst.msk [vmem:[#allocation2 + $0x7c] sm:$0xf] %vm232, %v231
        %v265 = vld [vmem:[%s195] sm:$0xf]
        %v266 = vld [vmem:[%s195 + $0x4] sm:$0xf]
        %v267 = vld [vmem:[%s195 + $0x8] sm:$0x1]
        %v268 = vld [vmem:[%s195 + $0xc] sm:$0xf]
        %v269 = vld [vmem:[%s195 + $0x10] sm:$0xf]
        %v270 = vld [vmem:[%s195 + $0x14] sm:$0x1]
        %v271 = vld [vmem:[%s195 + $0x18] sm:$0xf]
        %v272 = vld [vmem:[%s195 + $0x1c] sm:$0xf]
        %v273 = vld [vmem:[%s195 + $0x20] sm:$0x1]
        %v274 = vld [vmem:[%s195 + $0x24] sm:$0xf]
        %v275 = vld [vmem:[%s195 + $0x28] sm:$0xf]
        %v276 = vld [vmem:[%s195 + $0x2c] sm:$0x1]
        %v277 = vld [vmem:[%s195 + $0x30] sm:$0xf]
        %v278 = vld [vmem:[%s195 + $0x34] sm:$0xf]
        %v279 = vld [vmem:[%s195 + $0x38] sm:$0x1]
        %v280 = vld [vmem:[%s195 + $0x3c] sm:$0xf]
        %v281 = vld [vmem:[%s195 + $0x40] sm:$0xf]
        %v282 = vld [vmem:[%s195 + $0x44] sm:$0x1]
        %v283 = vld [vmem:[%s195 + $0x48] sm:$0xf]
        %v284 = vld [vmem:[%s195 + $0x4c] sm:$0xf]
        %v285 = vld [vmem:[%s195 + $0x50] sm:$0x1]
        %v286 = vld [vmem:[%s195 + $0x54] sm:$0xf]
        %v287 = vld [vmem:[%s195 + $0x58] sm:$0xf]
        %v288 = vld [vmem:[%s195 + $0x5c] sm:$0x1]
        %v289 = vld [vmem:[%s195 + $0x60] sm:$0xf]
        %v290 = vld [vmem:[%s195 + $0x64] sm:$0xf]
        %v291 = vld [vmem:[%s195 + $0x68] sm:$0x1]
        %v292 = vld [vmem:[%s195 + $0x6c] sm:$0xf]
        %v293 = vld [vmem:[%s195 + $0x70] sm:$0xf]
        %v294 = vld [vmem:[%s195 + $0x74] sm:$0x1]
        %v295 = vld [vmem:[%s195 + $0x78] sm:$0xf]
        %v296 = vld [vmem:[%s195 + $0x7c] sm:$0xf]
        %v297 = vld [vmem:[%s195 + $0x80] sm:$0x1]
        %v298 = vld [vmem:[%s195 + $0x84] sm:$0xf]
        %v299 = vld [vmem:[%s195 + $0x88] sm:$0xf]
        %v300 = vld [vmem:[%s195 + $0x8c] sm:$0x1]
        %v301 = vld [vmem:[%s195 + $0x90] sm:$0xf]
        %v302 = vld [vmem:[%s195 + $0x94] sm:$0xf]
        %v303 = vld [vmem:[%s195 + $0x98] sm:$0x1]
        %v304 = vld [vmem:[%s195 + $0x9c] sm:$0xf]
        %v305 = vld [vmem:[%s195 + $0xa0] sm:$0xf]
        %v306 = vld [vmem:[%s195 + $0xa4] sm:$0x1]
        %v307 = vld [vmem:[%s195 + $0xa8] sm:$0xf]
        %v308 = vld [vmem:[%s195 + $0xac] sm:$0xf]
        %v309 = vld [vmem:[%s195 + $0xb0] sm:$0x1]
        %v310 = vld [vmem:[%s195 + $0xb4] sm:$0xf]
        %v311 = vld [vmem:[%s195 + $0xb8] sm:$0xf]
        %v312 = vld [vmem:[%s195 + $0xbc] sm:$0x1]
        %vm313 = vsmask.f32 3328
        %vm314 = vsmask.f32 7440
        %vm315 = vmor %vm313, %vm314
        %v317 = vshrl.u32 %v265, 16
        %v319 = vrot.slane %v317, 4
        %v320 = vshll.u32 %v265, 16
        %v322 = vrot.slane %v320, 5
        %v323 = vor.u32 %v319, %v322
        %v324 = vrot.slane %v323, 4
        %v326 = vshll.u32 %v266, 16
        %v328 = vrot.slane %v326, 5
        %v329 = vsel %vm315, %v324, %v328
        %v330 = vshrl.u32 %v266, 16
        %v332 = vrot.slane %v330, 4
        %v333 = vor.u32 %v332, %v328
        %v334 = vrot.slane %v333, 4
        %v336 = vshll.u32 %v267, 16
        %v338 = vrot.slane %v336, 5
        %v339 = vsel %vm315, %v334, %v338
        %v341 = vshrl.u32 %v268, 16
        %v343 = vrot.slane %v341, 4
        %v344 = vshll.u32 %v268, 16
        %v346 = vrot.slane %v344, 5
        %v347 = vor.u32 %v343, %v346
        %v348 = vrot.slane %v347, 4
        %v350 = vshll.u32 %v269, 16
        %v352 = vrot.slane %v350, 5
        %v353 = vsel %vm315, %v348, %v352
        %v354 = vshrl.u32 %v269, 16
        %v356 = vrot.slane %v354, 4
        %v357 = vor.u32 %v356, %v352
        %v358 = vrot.slane %v357, 4
        %v360 = vshll.u32 %v270, 16
        %v362 = vrot.slane %v360, 5
        %v363 = vsel %vm315, %v358, %v362
        %v365 = vshrl.u32 %v271, 16
        %v367 = vrot.slane %v365, 4
        %v368 = vshll.u32 %v271, 16
        %v370 = vrot.slane %v368, 5
        %v371 = vor.u32 %v367, %v370
        %v372 = vrot.slane %v371, 4
        %v374 = vshll.u32 %v272, 16
        %v376 = vrot.slane %v374, 5
        %v377 = vsel %vm315, %v372, %v376
        %v378 = vshrl.u32 %v272, 16
        %v380 = vrot.slane %v378, 4
        %v381 = vor.u32 %v380, %v376
        %v382 = vrot.slane %v381, 4
        %v384 = vshll.u32 %v273, 16
        %v386 = vrot.slane %v384, 5
        %v387 = vsel %vm315, %v382, %v386
        %v389 = vshrl.u32 %v274, 16
        %v391 = vrot.slane %v389, 4
        %v392 = vshll.u32 %v274, 16
        %v394 = vrot.slane %v392, 5
        %v395 = vor.u32 %v391, %v394
        %v396 = vrot.slane %v395, 4
        %v398 = vshll.u32 %v275, 16
        %v400 = vrot.slane %v398, 5
        %v401 = vsel %vm315, %v396, %v400
        %v402 = vshrl.u32 %v275, 16
        %v404 = vrot.slane %v402, 4
        %v405 = vor.u32 %v404, %v400
        %v406 = vrot.slane %v405, 4
        %v408 = vshll.u32 %v276, 16
        %v410 = vrot.slane %v408, 5
        %v411 = vsel %vm315, %v406, %v410
        %v413 = vshrl.u32 %v277, 16
        %v415 = vrot.slane %v413, 4
        %v416 = vshll.u32 %v277, 16
        %v418 = vrot.slane %v416, 5
        %v419 = vor.u32 %v415, %v418
        %v420 = vrot.slane %v419, 4
        %v422 = vshll.u32 %v278, 16
        %v424 = vrot.slane %v422, 5
        %v425 = vsel %vm315, %v420, %v424
        %v426 = vshrl.u32 %v278, 16
        %v428 = vrot.slane %v426, 4
        %v429 = vor.u32 %v428, %v424
        %v430 = vrot.slane %v429, 4
        %v432 = vshll.u32 %v279, 16
        %v434 = vrot.slane %v432, 5
        %v435 = vsel %vm315, %v430, %v434
        %v437 = vshrl.u32 %v280, 16
        %v439 = vrot.slane %v437, 4
        %v440 = vshll.u32 %v280, 16
        %v442 = vrot.slane %v440, 5
        %v443 = vor.u32 %v439, %v442
        %v444 = vrot.slane %v443, 4
        %v446 = vshll.u32 %v281, 16
        %v448 = vrot.slane %v446, 5
        %v449 = vsel %vm315, %v444, %v448
        %v450 = vshrl.u32 %v281, 16
        %v452 = vrot.slane %v450, 4
        %v453 = vor.u32 %v452, %v448
        %v454 = vrot.slane %v453, 4
        %v456 = vshll.u32 %v282, 16
        %v458 = vrot.slane %v456, 5
        %v459 = vsel %vm315, %v454, %v458
        %v461 = vshrl.u32 %v283, 16
        %v463 = vrot.slane %v461, 4
        %v464 = vshll.u32 %v283, 16
        %v466 = vrot.slane %v464, 5
        %v467 = vor.u32 %v463, %v466
        %v468 = vrot.slane %v467, 4
        %v470 = vshll.u32 %v284, 16
        %v472 = vrot.slane %v470, 5
        %v473 = vsel %vm315, %v468, %v472
        %v474 = vshrl.u32 %v284, 16
        %v476 = vrot.slane %v474, 4
        %v477 = vor.u32 %v476, %v472
        %v478 = vrot.slane %v477, 4
        %v480 = vshll.u32 %v285, 16
        %v482 = vrot.slane %v480, 5
        %v483 = vsel %vm315, %v478, %v482
        %v485 = vshrl.u32 %v286, 16
        %v487 = vrot.slane %v485, 4
        %v488 = vshll.u32 %v286, 16
        %v490 = vrot.slane %v488, 5
        %v491 = vor.u32 %v487, %v490
        %v492 = vrot.slane %v491, 4
        %v494 = vshll.u32 %v287, 16
        %v496 = vrot.slane %v494, 5
        %v497 = vsel %vm315, %v492, %v496
        %v498 = vshrl.u32 %v287, 16
        %v500 = vrot.slane %v498, 4
        %v501 = vor.u32 %v500, %v496
        %v502 = vrot.slane %v501, 4
        %v504 = vshll.u32 %v288, 16
        %v506 = vrot.slane %v504, 5
        %v507 = vsel %vm315, %v502, %v506
        %v509 = vshrl.u32 %v289, 16
        %v511 = vrot.slane %v509, 4
        %v512 = vshll.u32 %v289, 16
        %v514 = vrot.slane %v512, 5
        %v515 = vor.u32 %v511, %v514
        %v516 = vrot.slane %v515, 4
        %v518 = vshll.u32 %v290, 16
        %v520 = vrot.slane %v518, 5
        %v521 = vsel %vm315, %v516, %v520
        %v522 = vshrl.u32 %v290, 16
        %v524 = vrot.slane %v522, 4
        %v525 = vor.u32 %v524, %v520
        %v526 = vrot.slane %v525, 4
        %v528 = vshll.u32 %v291, 16
        %v530 = vrot.slane %v528, 5
        %v531 = vsel %vm315, %v526, %v530
        %v533 = vshrl.u32 %v292, 16
        %v535 = vrot.slane %v533, 4
        %v536 = vshll.u32 %v292, 16
        %v538 = vrot.slane %v536, 5
        %v539 = vor.u32 %v535, %v538
        %v540 = vrot.slane %v539, 4
        %v542 = vshll.u32 %v293, 16
        %v544 = vrot.slane %v542, 5
        %v545 = vsel %vm315, %v540, %v544
        %v546 = vshrl.u32 %v293, 16
        %v548 = vrot.slane %v546, 4
        %v549 = vor.u32 %v548, %v544
        %v550 = vrot.slane %v549, 4
        %v552 = vshll.u32 %v294, 16
        %v554 = vrot.slane %v552, 5
        %v555 = vsel %vm315, %v550, %v554
        %v557 = vshrl.u32 %v295, 16
        %v559 = vrot.slane %v557, 4
        %v560 = vshll.u32 %v295, 16
        %v562 = vrot.slane %v560, 5
        %v563 = vor.u32 %v559, %v562
        %v564 = vrot.slane %v563, 4
        %v566 = vshll.u32 %v296, 16
        %v568 = vrot.slane %v566, 5
        %v569 = vsel %vm315, %v564, %v568
        %v570 = vshrl.u32 %v296, 16
        %v572 = vrot.slane %v570, 4
        %v573 = vor.u32 %v572, %v568
        %v574 = vrot.slane %v573, 4
        %v576 = vshll.u32 %v297, 16
        %v578 = vrot.slane %v576, 5
        %v579 = vsel %vm315, %v574, %v578
        %v581 = vshrl.u32 %v298, 16
        %v583 = vrot.slane %v581, 4
        %v584 = vshll.u32 %v298, 16
        %v586 = vrot.slane %v584, 5
        %v587 = vor.u32 %v583, %v586
        %v588 = vrot.slane %v587, 4
        %v590 = vshll.u32 %v299, 16
        %v592 = vrot.slane %v590, 5
        %v593 = vsel %vm315, %v588, %v592
        %v594 = vshrl.u32 %v299, 16
        %v596 = vrot.slane %v594, 4
        %v597 = vor.u32 %v596, %v592
        %v598 = vrot.slane %v597, 4
        %v600 = vshll.u32 %v300, 16
        %v602 = vrot.slane %v600, 5
        %v603 = vsel %vm315, %v598, %v602
        %v605 = vshrl.u32 %v301, 16
        %v607 = vrot.slane %v605, 4
        %v608 = vshll.u32 %v301, 16
        %v610 = vrot.slane %v608, 5
        %v611 = vor.u32 %v607, %v610
        %v612 = vrot.slane %v611, 4
        %v614 = vshll.u32 %v302, 16
        %v616 = vrot.slane %v614, 5
        %v617 = vsel %vm315, %v612, %v616
        %v618 = vshrl.u32 %v302, 16
        %v620 = vrot.slane %v618, 4
        %v621 = vor.u32 %v620, %v616
        %v622 = vrot.slane %v621, 4
        %v624 = vshll.u32 %v303, 16
        %v626 = vrot.slane %v624, 5
        %v627 = vsel %vm315, %v622, %v626
        %v629 = vshrl.u32 %v304, 16
        %v631 = vrot.slane %v629, 4
        %v632 = vshll.u32 %v304, 16
        %v634 = vrot.slane %v632, 5
        %v635 = vor.u32 %v631, %v634
        %v636 = vrot.slane %v635, 4
        %v638 = vshll.u32 %v305, 16
        %v640 = vrot.slane %v638, 5
        %v641 = vsel %vm315, %v636, %v640
        %v642 = vshrl.u32 %v305, 16
        %v644 = vrot.slane %v642, 4
        %v645 = vor.u32 %v644, %v640
        %v646 = vrot.slane %v645, 4
        %v648 = vshll.u32 %v306, 16
        %v650 = vrot.slane %v648, 5
        %v651 = vsel %vm315, %v646, %v650
        %v653 = vshrl.u32 %v307, 16
        %v655 = vrot.slane %v653, 4
        %v656 = vshll.u32 %v307, 16
        %v658 = vrot.slane %v656, 5
        %v659 = vor.u32 %v655, %v658
        %v660 = vrot.slane %v659, 4
        %v662 = vshll.u32 %v308, 16
        %v664 = vrot.slane %v662, 5
        %v665 = vsel %vm315, %v660, %v664
        %v666 = vshrl.u32 %v308, 16
        %v668 = vrot.slane %v666, 4
        %v669 = vor.u32 %v668, %v664
        %v670 = vrot.slane %v669, 4
        %v672 = vshll.u32 %v309, 16
        %v674 = vrot.slane %v672, 5
        %v675 = vsel %vm315, %v670, %v674
        %v677 = vshrl.u32 %v310, 16
        %v679 = vrot.slane %v677, 4
        %v680 = vshll.u32 %v310, 16
        %v682 = vrot.slane %v680, 5
        %v683 = vor.u32 %v679, %v682
        %v684 = vrot.slane %v683, 4
        %v686 = vshll.u32 %v311, 16
        %v688 = vrot.slane %v686, 5
        %v689 = vsel %vm315, %v684, %v688
        %v690 = vshrl.u32 %v311, 16
        %v692 = vrot.slane %v690, 4
        %v693 = vor.u32 %v692, %v688
        %v694 = vrot.slane %v693, 4
        %v696 = vshll.u32 %v312, 16
        %v698 = vrot.slane %v696, 5
        %v699 = vsel %vm315, %v694, %v698
        %700 = vrot.lane.b32.xlu0 %v329, 4
        %v701 = vpop.permute.xlu0 %700
        %702 = vrot.lane.b32.xlu0 %v339, 4
        %v703 = vpop.permute.xlu0 %702
        %704 = vrot.lane.b32.xlu0 %v353, 4
        %v705 = vpop.permute.xlu0 %704
        %706 = vrot.lane.b32.xlu0 %v363, 4
        %v707 = vpop.permute.xlu0 %706
        %708 = vrot.lane.b32.xlu0 %v377, 4
        %v709 = vpop.permute.xlu0 %708
        %710 = vrot.lane.b32.xlu0 %v387, 4
        %v711 = vpop.permute.xlu0 %710
        %712 = vrot.lane.b32.xlu0 %v401, 4
        %v713 = vpop.permute.xlu0 %712
        %714 = vrot.lane.b32.xlu0 %v411, 4
        %v715 = vpop.permute.xlu0 %714
        %716 = vrot.lane.b32.xlu0 %v425, 4
        %v717 = vpop.permute.xlu0 %716
        %718 = vrot.lane.b32.xlu0 %v435, 4
        %v719 = vpop.permute.xlu0 %718
        %720 = vrot.lane.b32.xlu0 %v449, 4
        %v721 = vpop.permute.xlu0 %720
        %722 = vrot.lane.b32.xlu0 %v459, 4
        %v723 = vpop.permute.xlu0 %722
        %724 = vrot.lane.b32.xlu0 %v473, 4
        %v725 = vpop.permute.xlu0 %724
        %726 = vrot.lane.b32.xlu0 %v483, 4
        %v727 = vpop.permute.xlu0 %726
        %728 = vrot.lane.b32.xlu0 %v497, 4
        %v729 = vpop.permute.xlu0 %728
        %730 = vrot.lane.b32.xlu0 %v507, 4
        %v731 = vpop.permute.xlu0 %730
        %732 = vrot.lane.b32.xlu0 %v521, 4
        %v733 = vpop.permute.xlu0 %732
        %734 = vrot.lane.b32.xlu0 %v531, 4
        %v735 = vpop.permute.xlu0 %734
        %736 = vrot.lane.b32.xlu0 %v545, 4
        %v737 = vpop.permute.xlu0 %736
        %738 = vrot.lane.b32.xlu0 %v555, 4
        %v739 = vpop.permute.xlu0 %738
        %740 = vrot.lane.b32.xlu0 %v569, 4
        %v741 = vpop.permute.xlu0 %740
        %742 = vrot.lane.b32.xlu0 %v579, 4
        %v743 = vpop.permute.xlu0 %742
        %744 = vrot.lane.b32.xlu0 %v593, 4
        %v745 = vpop.permute.xlu0 %744
        %746 = vrot.lane.b32.xlu0 %v603, 4
        %v747 = vpop.permute.xlu0 %746
        %748 = vrot.lane.b32.xlu0 %v617, 4
        %v749 = vpop.permute.xlu0 %748
        %750 = vrot.lane.b32.xlu0 %v627, 4
        %v751 = vpop.permute.xlu0 %750
        %752 = vrot.lane.b32.xlu0 %v641, 4
        %v753 = vpop.permute.xlu0 %752
        %754 = vrot.lane.b32.xlu0 %v651, 4
        %v755 = vpop.permute.xlu0 %754
        %756 = vrot.lane.b32.xlu0 %v665, 4
        %v757 = vpop.permute.xlu0 %756
        %758 = vrot.lane.b32.xlu0 %v675, 4
        %v759 = vpop.permute.xlu0 %758
        %760 = vrot.lane.b32.xlu0 %v689, 4
        %v761 = vpop.permute.xlu0 %760
        %762 = vrot.lane.b32.xlu0 %v699, 4
        %v763 = vpop.permute.xlu0 %762
        %vm796 = vcmask 60448
        %797 = vst.msk [vmem:[#allocation2] sm:$0xf] %vm796, %v701
        %798 = vst.msk [vmem:[#allocation2 + $0x4] sm:$0xf] %vm796, %v703
        %799 = vst.msk [vmem:[#allocation2 + $0x8] sm:$0xf] %vm796, %v705
        %800 = vst.msk [vmem:[#allocation2 + $0xc] sm:$0xf] %vm796, %v707
        %801 = vst.msk [vmem:[#allocation2 + $0x10] sm:$0xf] %vm796, %v709
        %802 = vst.msk [vmem:[#allocation2 + $0x14] sm:$0xf] %vm796, %v711
        %803 = vst.msk [vmem:[#allocation2 + $0x18] sm:$0xf] %vm796, %v713
        %804 = vst.msk [vmem:[#allocation2 + $0x1c] sm:$0xf] %vm796, %v715
        %805 = vst.msk [vmem:[#allocation2 + $0x20] sm:$0xf] %vm796, %v717
        %806 = vst.msk [vmem:[#allocation2 + $0x24] sm:$0xf] %vm796, %v719
        %807 = vst.msk [vmem:[#allocation2 + $0x28] sm:$0xf] %vm796, %v721
        %808 = vst.msk [vmem:[#allocation2 + $0x2c] sm:$0xf] %vm796, %v723
        %809 = vst.msk [vmem:[#allocation2 + $0x30] sm:$0xf] %vm796, %v725
        %810 = vst.msk [vmem:[#allocation2 + $0x34] sm:$0xf] %vm796, %v727
        %811 = vst.msk [vmem:[#allocation2 + $0x38] sm:$0xf] %vm796, %v729
        %812 = vst.msk [vmem:[#allocation2 + $0x3c] sm:$0xf] %vm796, %v731
        %813 = vst.msk [vmem:[#allocation2 + $0x40] sm:$0xf] %vm796, %v733
        %814 = vst.msk [vmem:[#allocation2 + $0x44] sm:$0xf] %vm796, %v735
        %815 = vst.msk [vmem:[#allocation2 + $0x48] sm:$0xf] %vm796, %v737
        %816 = vst.msk [vmem:[#allocation2 + $0x4c] sm:$0xf] %vm796, %v739
        %817 = vst.msk [vmem:[#allocation2 + $0x50] sm:$0xf] %vm796, %v741
        %818 = vst.msk [vmem:[#allocation2 + $0x54] sm:$0xf] %vm796, %v743
        %819 = vst.msk [vmem:[#allocation2 + $0x58] sm:$0xf] %vm796, %v745
        %820 = vst.msk [vmem:[#allocation2 + $0x5c] sm:$0xf] %vm796, %v747
        %821 = vst.msk [vmem:[#allocation2 + $0x60] sm:$0xf] %vm796, %v749
        %822 = vst.msk [vmem:[#allocation2 + $0x64] sm:$0xf] %vm796, %v751
        %823 = vst.msk [vmem:[#allocation2 + $0x68] sm:$0xf] %vm796, %v753
        %824 = vst.msk [vmem:[#allocation2 + $0x6c] sm:$0xf] %vm796, %v755
        %825 = vst.msk [vmem:[#allocation2 + $0x70] sm:$0xf] %vm796, %v757
        %826 = vst.msk [vmem:[#allocation2 + $0x74] sm:$0xf] %vm796, %v759
        %827 = vst.msk [vmem:[#allocation2 + $0x78] sm:$0xf] %vm796, %v761
        %828 = vst.msk [vmem:[#allocation2 + $0x7c] sm:$0xf] %vm796, %v763
        %v829 = vld [vmem:[%s195] sm:$0xe]
        %v830 = vld [vmem:[%s195 + $0x4] sm:$0xf]
        %v831 = vld [vmem:[%s195 + $0x8] sm:$0x1]
        %v832 = vld [vmem:[%s195 + $0xc] sm:$0xe]
        %v833 = vld [vmem:[%s195 + $0x10] sm:$0xf]
        %v834 = vld [vmem:[%s195 + $0x14] sm:$0x1]
        %v835 = vld [vmem:[%s195 + $0x18] sm:$0xe]
        %v836 = vld [vmem:[%s195 + $0x1c] sm:$0xf]
        %v837 = vld [vmem:[%s195 + $0x20] sm:$0x1]
        %v838 = vld [vmem:[%s195 + $0x24] sm:$0xe]
        %v839 = vld [vmem:[%s195 + $0x28] sm:$0xf]
        %v840 = vld [vmem:[%s195 + $0x2c] sm:$0x1]
        %v841 = vld [vmem:[%s195 + $0x30] sm:$0xe]
        %v842 = vld [vmem:[%s195 + $0x34] sm:$0xf]
        %v843 = vld [vmem:[%s195 + $0x38] sm:$0x1]
        %v844 = vld [vmem:[%s195 + $0x3c] sm:$0xe]
        %v845 = vld [vmem:[%s195 + $0x40] sm:$0xf]
        %v846 = vld [vmem:[%s195 + $0x44] sm:$0x1]
        %v847 = vld [vmem:[%s195 + $0x48] sm:$0xe]
        %v848 = vld [vmem:[%s195 + $0x4c] sm:$0xf]
        %v849 = vld [vmem:[%s195 + $0x50] sm:$0x1]
        %v850 = vld [vmem:[%s195 + $0x54] sm:$0xe]
        %v851 = vld [vmem:[%s195 + $0x58] sm:$0xf]
        %v852 = vld [vmem:[%s195 + $0x5c] sm:$0x1]
        %v853 = vld [vmem:[%s195 + $0x60] sm:$0xe]
        %v854 = vld [vmem:[%s195 + $0x64] sm:$0xf]
        %v855 = vld [vmem:[%s195 + $0x68] sm:$0x1]
        %v856 = vld [vmem:[%s195 + $0x6c] sm:$0xe]
        %v857 = vld [vmem:[%s195 + $0x70] sm:$0xf]
        %v858 = vld [vmem:[%s195 + $0x74] sm:$0x1]
        %v859 = vld [vmem:[%s195 + $0x78] sm:$0xe]
        %v860 = vld [vmem:[%s195 + $0x7c] sm:$0xf]
        %v861 = vld [vmem:[%s195 + $0x80] sm:$0x1]
        %v862 = vld [vmem:[%s195 + $0x84] sm:$0xe]
        %v863 = vld [vmem:[%s195 + $0x88] sm:$0xf]
        %v864 = vld [vmem:[%s195 + $0x8c] sm:$0x1]
        %v865 = vld [vmem:[%s195 + $0x90] sm:$0xe]
        %v866 = vld [vmem:[%s195 + $0x94] sm:$0xf]
        %v867 = vld [vmem:[%s195 + $0x98] sm:$0x1]
        %v868 = vld [vmem:[%s195 + $0x9c] sm:$0xe]
        %v869 = vld [vmem:[%s195 + $0xa0] sm:$0xf]
        %v870 = vld [vmem:[%s195 + $0xa4] sm:$0x1]
        %v871 = vld [vmem:[%s195 + $0xa8] sm:$0xe]
        %v872 = vld [vmem:[%s195 + $0xac] sm:$0xf]
        %v873 = vld [vmem:[%s195 + $0xb0] sm:$0x1]
        %v874 = vld [vmem:[%s195 + $0xb4] sm:$0xe]
        %v875 = vld [vmem:[%s195 + $0xb8] sm:$0xf]
        %v876 = vld [vmem:[%s195 + $0xbc] sm:$0x1]
        %vm925 = vcmask 1042432
        %vm926 = vcmask 1046532
        %vm927 = vmor %vm925, %vm926
        %v928 = vrot.slane %v829, 5
        %v929 = vrot.slane %v928, 4
        %v930 = vrot.slane %v830, 5
        %v931 = vsel %vm927, %v929, %v930
        %v932 = vrot.slane %v930, 4
        %v933 = vrot.slane %v831, 5
        %v934 = vsel %vm927, %v932, %v933
        %v935 = vrot.slane %v832, 5
        %v936 = vrot.slane %v935, 4
        %v937 = vrot.slane %v833, 5
        %v938 = vsel %vm927, %v936, %v937
        %v939 = vrot.slane %v937, 4
        %v940 = vrot.slane %v834, 5
        %v941 = vsel %vm927, %v939, %v940
        %v942 = vrot.slane %v835, 5
        %v943 = vrot.slane %v942, 4
        %v944 = vrot.slane %v836, 5
        %v945 = vsel %vm927, %v943, %v944
        %v946 = vrot.slane %v944, 4
        %v947 = vrot.slane %v837, 5
        %v948 = vsel %vm927, %v946, %v947
        %v949 = vrot.slane %v838, 5
        %v950 = vrot.slane %v949, 4
        %v951 = vrot.slane %v839, 5
        %v952 = vsel %vm927, %v950, %v951
        %v953 = vrot.slane %v951, 4
        %v954 = vrot.slane %v840, 5
        %v955 = vsel %vm927, %v953, %v954
        %v956 = vrot.slane %v841, 5
        %v957 = vrot.slane %v956, 4
        %v958 = vrot.slane %v842, 5
        %v959 = vsel %vm927, %v957, %v958
        %v960 = vrot.slane %v958, 4
        %v961 = vrot.slane %v843, 5
        %v962 = vsel %vm927, %v960, %v961
        %v963 = vrot.slane %v844, 5
        %v964 = vrot.slane %v963, 4
        %v965 = vrot.slane %v845, 5
        %v966 = vsel %vm927, %v964, %v965
        %v967 = vrot.slane %v965, 4
        %v968 = vrot.slane %v846, 5
        %v969 = vsel %vm927, %v967, %v968
        %v970 = vrot.slane %v847, 5
        %v971 = vrot.slane %v970, 4
        %v972 = vrot.slane %v848, 5
        %v973 = vsel %vm927, %v971, %v972
        %v974 = vrot.slane %v972, 4
        %v975 = vrot.slane %v849, 5
        %v976 = vsel %vm927, %v974, %v975
        %v977 = vrot.slane %v850, 5
        %v978 = vrot.slane %v977, 4
        %v979 = vrot.slane %v851, 5
        %v980 = vsel %vm927, %v978, %v979
        %v981 = vrot.slane %v979, 4
        %v982 = vrot.slane %v852, 5
        %v983 = vsel %vm927, %v981, %v982
        %v984 = vrot.slane %v853, 5
        %v985 = vrot.slane %v984, 4
        %v986 = vrot.slane %v854, 5
        %v987 = vsel %vm927, %v985, %v986
        %v988 = vrot.slane %v986, 4
        %v989 = vrot.slane %v855, 5
        %v990 = vsel %vm927, %v988, %v989
        %v991 = vrot.slane %v856, 5
        %v992 = vrot.slane %v991, 4
        %v993 = vrot.slane %v857, 5
        %v994 = vsel %vm927, %v992, %v993
        %v995 = vrot.slane %v993, 4
        %v996 = vrot.slane %v858, 5
        %v997 = vsel %vm927, %v995, %v996
        %v998 = vrot.slane %v859, 5
        %v999 = vrot.slane %v998, 4
        %v1000 = vrot.slane %v860, 5
        %v1001 = vsel %vm927, %v999, %v1000
        %v1002 = vrot.slane %v1000, 4
        %v1003 = vrot.slane %v861, 5
        %v1004 = vsel %vm927, %v1002, %v1003
        %v1005 = vrot.slane %v862, 5
        %v1006 = vrot.slane %v1005, 4
        %v1007 = vrot.slane %v863, 5
        %v1008 = vsel %vm927, %v1006, %v1007
        %v1009 = vrot.slane %v1007, 4
        %v1010 = vrot.slane %v864, 5
        %v1011 = vsel %vm927, %v1009, %v1010
        %v1012 = vrot.slane %v865, 5
        %v1013 = vrot.slane %v1012, 4
        %v1014 = vrot.slane %v866, 5
        %v1015 = vsel %vm927, %v1013, %v1014
        %v1016 = vrot.slane %v1014, 4
        %v1017 = vrot.slane %v867, 5
        %v1018 = vsel %vm927, %v1016, %v1017
        %v1019 = vrot.slane %v868, 5
        %v1020 = vrot.slane %v1019, 4
        %v1021 = vrot.slane %v869, 5
        %v1022 = vsel %vm927, %v1020, %v1021
        %v1023 = vrot.slane %v1021, 4
        %v1024 = vrot.slane %v870, 5
        %v1025 = vsel %vm927, %v1023, %v1024
        %v1026 = vrot.slane %v871, 5
        %v1027 = vrot.slane %v1026, 4
        %v1028 = vrot.slane %v872, 5
        %v1029 = vsel %vm927, %v1027, %v1028
        %v1030 = vrot.slane %v1028, 4
        %v1031 = vrot.slane %v873, 5
        %v1032 = vsel %vm927, %v1030, %v1031
        %v1033 = vrot.slane %v874, 5
        %v1034 = vrot.slane %v1033, 4
        %v1035 = vrot.slane %v875, 5
        %v1036 = vsel %vm927, %v1034, %v1035
        %v1037 = vrot.slane %v1035, 4
        %v1038 = vrot.slane %v876, 5
        %v1039 = vsel %vm927, %v1037, %v1038
        %1040 = vrot.lane.b32.xlu0 %v931, 8
        %v1041 = vpop.permute.xlu0 %1040
        %1042 = vrot.lane.b32.xlu0 %v934, 8
        %v1043 = vpop.permute.xlu0 %1042
        %1044 = vrot.lane.b32.xlu0 %v938, 8
        %v1045 = vpop.permute.xlu0 %1044
        %1046 = vrot.lane.b32.xlu0 %v941, 8
        %v1047 = vpop.permute.xlu0 %1046
        %1048 = vrot.lane.b32.xlu0 %v945, 8
        %v1049 = vpop.permute.xlu0 %1048
        %1050 = vrot.lane.b32.xlu0 %v948, 8
        %v1051 = vpop.permute.xlu0 %1050
        %1052 = vrot.lane.b32.xlu0 %v952, 8
        %v1053 = vpop.permute.xlu0 %1052
        %1054 = vrot.lane.b32.xlu0 %v955, 8
        %v1055 = vpop.permute.xlu0 %1054
        %1056 = vrot.lane.b32.xlu0 %v959, 8
        %v1057 = vpop.permute.xlu0 %1056
        %1058 = vrot.lane.b32.xlu0 %v962, 8
        %v1059 = vpop.permute.xlu0 %1058
        %1060 = vrot.lane.b32.xlu0 %v966, 8
        %v1061 = vpop.permute.xlu0 %1060
        %1062 = vrot.lane.b32.xlu0 %v969, 8
        %v1063 = vpop.permute.xlu0 %1062
        %1064 = vrot.lane.b32.xlu0 %v973, 8
        %v1065 = vpop.permute.xlu0 %1064
        %1066 = vrot.lane.b32.xlu0 %v976, 8
        %v1067 = vpop.permute.xlu0 %1066
        %1068 = vrot.lane.b32.xlu0 %v980, 8
        %v1069 = vpop.permute.xlu0 %1068
        %1070 = vrot.lane.b32.xlu0 %v983, 8
        %v1071 = vpop.permute.xlu0 %1070
        %1072 = vrot.lane.b32.xlu0 %v987, 8
        %v1073 = vpop.permute.xlu0 %1072
        %1074 = vrot.lane.b32.xlu0 %v990, 8
        %v1075 = vpop.permute.xlu0 %1074
        %1076 = vrot.lane.b32.xlu0 %v994, 8
        %v1077 = vpop.permute.xlu0 %1076
        %1078 = vrot.lane.b32.xlu0 %v997, 8
        %v1079 = vpop.permute.xlu0 %1078
        %1080 = vrot.lane.b32.xlu0 %v1001, 8
        %v1081 = vpop.permute.xlu0 %1080
        %1082 = vrot.lane.b32.xlu0 %v1004, 8
        %v1083 = vpop.permute.xlu0 %1082
        %1084 = vrot.lane.b32.xlu0 %v1008, 8
        %v1085 = vpop.permute.xlu0 %1084
        %1086 = vrot.lane.b32.xlu0 %v1011, 8
        %v1087 = vpop.permute.xlu0 %1086
        %1088 = vrot.lane.b32.xlu0 %v1015, 8
        %v1089 = vpop.permute.xlu0 %1088
        %1090 = vrot.lane.b32.xlu0 %v1018, 8
        %v1091 = vpop.permute.xlu0 %1090
        %1092 = vrot.lane.b32.xlu0 %v1022, 8
        %v1093 = vpop.permute.xlu0 %1092
        %1094 = vrot.lane.b32.xlu0 %v1025, 8
        %v1095 = vpop.permute.xlu0 %1094
        %1096 = vrot.lane.b32.xlu0 %v1029, 8
        %v1097 = vpop.permute.xlu0 %1096
        %1098 = vrot.lane.b32.xlu0 %v1032, 8
        %v1099 = vpop.permute.xlu0 %1098
        %1100 = vrot.lane.b32.xlu0 %v1036, 8
        %v1101 = vpop.permute.xlu0 %1100
        %1102 = vrot.lane.b32.xlu0 %v1039, 8
        %v1103 = vpop.permute.xlu0 %1102
        %vm1136 = vcmask 93248
        %1137 = vst.msk [vmem:[#allocation2] sm:$0xf] %vm1136, %v1041
        %1138 = vst.msk [vmem:[#allocation2 + $0x4] sm:$0xf] %vm1136, %v1043
        %1139 = vst.msk [vmem:[#allocation2 + $0x8] sm:$0xf] %vm1136, %v1045
        %1140 = vst.msk [vmem:[#allocation2 + $0xc] sm:$0xf] %vm1136, %v1047
        %1141 = vst.msk [vmem:[#allocation2 + $0x10] sm:$0xf] %vm1136, %v1049
        %1142 = vst.msk [vmem:[#allocation2 + $0x14] sm:$0xf] %vm1136, %v1051
        %1143 = vst.msk [vmem:[#allocation2 + $0x18] sm:$0xf] %vm1136, %v1053
        %1144 = vst.msk [vmem:[#allocation2 + $0x1c] sm:$0xf] %vm1136, %v1055
        %1145 = vst.msk [vmem:[#allocation2 + $0x20] sm:$0xf] %vm1136, %v1057
        %1146 = vst.msk [vmem:[#allocation2 + $0x24] sm:$0xf] %vm1136, %v1059
        %1147 = vst.msk [vmem:[#allocation2 + $0x28] sm:$0xf] %vm1136, %v1061
        %1148 = vst.msk [vmem:[#allocation2 + $0x2c] sm:$0xf] %vm1136, %v1063
        %1149 = vst.msk [vmem:[#allocation2 + $0x30] sm:$0xf] %vm1136, %v1065
        %1150 = vst.msk [vmem:[#allocation2 + $0x34] sm:$0xf] %vm1136, %v1067
        %1151 = vst.msk [vmem:[#allocation2 + $0x38] sm:$0xf] %vm1136, %v1069
        %1152 = vst.msk [vmem:[#allocation2 + $0x3c] sm:$0xf] %vm1136, %v1071
        %1153 = vst.msk [vmem:[#allocation2 + $0x40] sm:$0xf] %vm1136, %v1073
        %1154 = vst.msk [vmem:[#allocation2 + $0x44] sm:$0xf] %vm1136, %v1075
        %1155 = vst.msk [vmem:[#allocation2 + $0x48] sm:$0xf] %vm1136, %v1077
        %1156 = vst.msk [vmem:[#allocation2 + $0x4c] sm:$0xf] %vm1136, %v1079
        %1157 = vst.msk [vmem:[#allocation2 + $0x50] sm:$0xf] %vm1136, %v1081
        %1158 = vst.msk [vmem:[#allocation2 + $0x54] sm:$0xf] %vm1136, %v1083
        %1159 = vst.msk [vmem:[#allocation2 + $0x58] sm:$0xf] %vm1136, %v1085
        %1160 = vst.msk [vmem:[#allocation2 + $0x5c] sm:$0xf] %vm1136, %v1087
        %1161 = vst.msk [vmem:[#allocation2 + $0x60] sm:$0xf] %vm1136, %v1089
        %1162 = vst.msk [vmem:[#allocation2 + $0x64] sm:$0xf] %vm1136, %v1091
        %1163 = vst.msk [vmem:[#allocation2 + $0x68] sm:$0xf] %vm1136, %v1093
        %1164 = vst.msk [vmem:[#allocation2 + $0x6c] sm:$0xf] %vm1136, %v1095
        %1165 = vst.msk [vmem:[#allocation2 + $0x70] sm:$0xf] %vm1136, %v1097
        %1166 = vst.msk [vmem:[#allocation2 + $0x74] sm:$0xf] %vm1136, %v1099
        %1167 = vst.msk [vmem:[#allocation2 + $0x78] sm:$0xf] %vm1136, %v1101
        %1168 = vst.msk [vmem:[#allocation2 + $0x7c] sm:$0xf] %vm1136, %v1103
        %s1169 = scalar_lea.vmem %s195, 12
        %v1170 = vld [vmem:[%s1169] sm:$0xf]
        %v1171 = vld [vmem:[%s1169 + $0x4] sm:$0xf]
        %v1172 = vld [vmem:[%s1169 + $0xc] sm:$0xf]
        %v1173 = vld [vmem:[%s1169 + $0x10] sm:$0xf]
        %v1174 = vld [vmem:[%s1169 + $0x18] sm:$0xf]
        %v1175 = vld [vmem:[%s1169 + $0x1c] sm:$0xf]
        %v1176 = vld [vmem:[%s1169 + $0x24] sm:$0xf]
        %v1177 = vld [vmem:[%s1169 + $0x28] sm:$0xf]
        %v1178 = vld [vmem:[%s1169 + $0x30] sm:$0xf]
        %v1179 = vld [vmem:[%s1169 + $0x34] sm:$0xf]
        %v1180 = vld [vmem:[%s1169 + $0x3c] sm:$0xf]
        %v1181 = vld [vmem:[%s1169 + $0x40] sm:$0xf]
        %v1182 = vld [vmem:[%s1169 + $0x48] sm:$0xf]
        %v1183 = vld [vmem:[%s1169 + $0x4c] sm:$0xf]
        %v1184 = vld [vmem:[%s1169 + $0x54] sm:$0xf]
        %v1185 = vld [vmem:[%s1169 + $0x58] sm:$0xf]
        %v1186 = vld [vmem:[%s1169 + $0x60] sm:$0xf]
        %v1187 = vld [vmem:[%s1169 + $0x64] sm:$0xf]
        %v1188 = vld [vmem:[%s1169 + $0x6c] sm:$0xf]
        %v1189 = vld [vmem:[%s1169 + $0x70] sm:$0xf]
        %v1190 = vld [vmem:[%s1169 + $0x78] sm:$0xf]
        %v1191 = vld [vmem:[%s1169 + $0x7c] sm:$0xf]
        %v1192 = vld [vmem:[%s1169 + $0x84] sm:$0xf]
        %v1193 = vld [vmem:[%s1169 + $0x88] sm:$0xf]
        %v1194 = vld [vmem:[%s1169 + $0x90] sm:$0xf]
        %v1195 = vld [vmem:[%s1169 + $0x94] sm:$0xf]
        %v1196 = vld [vmem:[%s1169 + $0x9c] sm:$0xf]
        %v1197 = vld [vmem:[%s1169 + $0xa0] sm:$0xf]
        %v1198 = vld [vmem:[%s1169 + $0xa8] sm:$0xf]
        %v1199 = vld [vmem:[%s1169 + $0xac] sm:$0xf]
        %v1200 = vld [vmem:[%s1169 + $0xb4] sm:$0xf]
        %v1201 = vld [vmem:[%s1169 + $0xb8] sm:$0xf]
        %1234 = vrot.lane.b32.xlu0 %v1170, 12
        %v1235 = vpop.permute.xlu0 %1234
        %1236 = vrot.lane.b32.xlu0 %v1171, 12
        %v1237 = vpop.permute.xlu0 %1236
        %1238 = vrot.lane.b32.xlu0 %v1172, 12
        %v1239 = vpop.permute.xlu0 %1238
        %1240 = vrot.lane.b32.xlu0 %v1173, 12
        %v1241 = vpop.permute.xlu0 %1240
        %1242 = vrot.lane.b32.xlu0 %v1174, 12
        %v1243 = vpop.permute.xlu0 %1242
        %1244 = vrot.lane.b32.xlu0 %v1175, 12
        %v1245 = vpop.permute.xlu0 %1244
        %1246 = vrot.lane.b32.xlu0 %v1176, 12
        %v1247 = vpop.permute.xlu0 %1246
        %1248 = vrot.lane.b32.xlu0 %v1177, 12
        %v1249 = vpop.permute.xlu0 %1248
        %1250 = vrot.lane.b32.xlu0 %v1178, 12
        %v1251 = vpop.permute.xlu0 %1250
        %1252 = vrot.lane.b32.xlu0 %v1179, 12
        %v1253 = vpop.permute.xlu0 %1252
        %1254 = vrot.lane.b32.xlu0 %v1180, 12
        %v1255 = vpop.permute.xlu0 %1254
        %1256 = vrot.lane.b32.xlu0 %v1181, 12
        %v1257 = vpop.permute.xlu0 %1256
        %1258 = vrot.lane.b32.xlu0 %v1182, 12
        %v1259 = vpop.permute.xlu0 %1258
        %1260 = vrot.lane.b32.xlu0 %v1183, 12
        %v1261 = vpop.permute.xlu0 %1260
        %1262 = vrot.lane.b32.xlu0 %v1184, 12
        %v1263 = vpop.permute.xlu0 %1262
        %1264 = vrot.lane.b32.xlu0 %v1185, 12
        %v1265 = vpop.permute.xlu0 %1264
        %1266 = vrot.lane.b32.xlu0 %v1186, 12
        %v1267 = vpop.permute.xlu0 %1266
        %1268 = vrot.lane.b32.xlu0 %v1187, 12
        %v1269 = vpop.permute.xlu0 %1268
        %1270 = vrot.lane.b32.xlu0 %v1188, 12
        %v1271 = vpop.permute.xlu0 %1270
        %1272 = vrot.lane.b32.xlu0 %v1189, 12
        %v1273 = vpop.permute.xlu0 %1272
        %1274 = vrot.lane.b32.xlu0 %v1190, 12
        %v1275 = vpop.permute.xlu0 %1274
        %1276 = vrot.lane.b32.xlu0 %v1191, 12
        %v1277 = vpop.permute.xlu0 %1276
        %1278 = vrot.lane.b32.xlu0 %v1192, 12
        %v1279 = vpop.permute.xlu0 %1278
        %1280 = vrot.lane.b32.xlu0 %v1193, 12
        %v1281 = vpop.permute.xlu0 %1280
        %1282 = vrot.lane.b32.xlu0 %v1194, 12
        %v1283 = vpop.permute.xlu0 %1282
        %1284 = vrot.lane.b32.xlu0 %v1195, 12
        %v1285 = vpop.permute.xlu0 %1284
        %1286 = vrot.lane.b32.xlu0 %v1196, 12
        %v1287 = vpop.permute.xlu0 %1286
        %1288 = vrot.lane.b32.xlu0 %v1197, 12
        %v1289 = vpop.permute.xlu0 %1288
        %1290 = vrot.lane.b32.xlu0 %v1198, 12
        %v1291 = vpop.permute.xlu0 %1290
        %1292 = vrot.lane.b32.xlu0 %v1199, 12
        %v1293 = vpop.permute.xlu0 %1292
        %1294 = vrot.lane.b32.xlu0 %v1200, 12
        %v1295 = vpop.permute.xlu0 %1294
        %1296 = vrot.lane.b32.xlu0 %v1201, 12
        %v1297 = vpop.permute.xlu0 %1296
        %vm1330 = vcmask 126048
        %1331 = vst.msk [vmem:[#allocation2] sm:$0xf] %vm1330, %v1235
        %1332 = vst.msk [vmem:[#allocation2 + $0x4] sm:$0xf] %vm1330, %v1237
        %1333 = vst.msk [vmem:[#allocation2 + $0x8] sm:$0xf] %vm1330, %v1239
        %1334 = vst.msk [vmem:[#allocation2 + $0xc] sm:$0xf] %vm1330, %v1241
        %1335 = vst.msk [vmem:[#allocation2 + $0x10] sm:$0xf] %vm1330, %v1243
        %1336 = vst.msk [vmem:[#allocation2 + $0x14] sm:$0xf] %vm1330, %v1245
        %1337 = vst.msk [vmem:[#allocation2 + $0x18] sm:$0xf] %vm1330, %v1247
        %1338 = vst.msk [vmem:[#allocation2 + $0x1c] sm:$0xf] %vm1330, %v1249
        %1339 = vst.msk [vmem:[#allocation2 + $0x20] sm:$0xf] %vm1330, %v1251
        %1340 = vst.msk [vmem:[#allocation2 + $0x24] sm:$0xf] %vm1330, %v1253
        %1341 = vst.msk [vmem:[#allocation2 + $0x28] sm:$0xf] %vm1330, %v1255
        %1342 = vst.msk [vmem:[#allocation2 + $0x2c] sm:$0xf] %vm1330, %v1257
        %1343 = vst.msk [vmem:[#allocation2 + $0x30] sm:$0xf] %vm1330, %v1259
        %1344 = vst.msk [vmem:[#allocation2 + $0x34] sm:$0xf] %vm1330, %v1261
        %1345 = vst.msk [vmem:[#allocation2 + $0x38] sm:$0xf] %vm1330, %v1263
        %1346 = vst.msk [vmem:[#allocation2 + $0x3c] sm:$0xf] %vm1330, %v1265
        %1347 = vst.msk [vmem:[#allocation2 + $0x40] sm:$0xf] %vm1330, %v1267
        %1348 = vst.msk [vmem:[#allocation2 + $0x44] sm:$0xf] %vm1330, %v1269
        %1349 = vst.msk [vmem:[#allocation2 + $0x48] sm:$0xf] %vm1330, %v1271
        %1350 = vst.msk [vmem:[#allocation2 + $0x4c] sm:$0xf] %vm1330, %v1273
        %1351 = vst.msk [vmem:[#allocation2 + $0x50] sm:$0xf] %vm1330, %v1275
        %1352 = vst.msk [vmem:[#allocation2 + $0x54] sm:$0xf] %vm1330, %v1277
        %1353 = vst.msk [vmem:[#allocation2 + $0x58] sm:$0xf] %vm1330, %v1279
        %1354 = vst.msk [vmem:[#allocation2 + $0x5c] sm:$0xf] %vm1330, %v1281
        %1355 = vst.msk [vmem:[#allocation2 + $0x60] sm:$0xf] %vm1330, %v1283
        %1356 = vst.msk [vmem:[#allocation2 + $0x64] sm:$0xf] %vm1330, %v1285
        %1357 = vst.msk [vmem:[#allocation2 + $0x68] sm:$0xf] %vm1330, %v1287
        %1358 = vst.msk [vmem:[#allocation2 + $0x6c] sm:$0xf] %vm1330, %v1289
        %1359 = vst.msk [vmem:[#allocation2 + $0x70] sm:$0xf] %vm1330, %v1291
        %1360 = vst.msk [vmem:[#allocation2 + $0x74] sm:$0xf] %vm1330, %v1293
        %1361 = vst.msk [vmem:[#allocation2 + $0x78] sm:$0xf] %vm1330, %v1295
        %1362 = vst.msk [vmem:[#allocation2 + $0x7c] sm:$0xf] %vm1330, %v1297
        %v1363 = vld [vmem:[%s1169] sm:$0xf]
        %v1364 = vld [vmem:[%s1169 + $0x4] sm:$0xf]
        %v1365 = vld [vmem:[%s1169 + $0x8] sm:$0x1]
        %v1366 = vld [vmem:[%s1169 + $0xc] sm:$0xf]
        %v1367 = vld [vmem:[%s1169 + $0x10] sm:$0xf]
        %v1368 = vld [vmem:[%s1169 + $0x14] sm:$0x1]
        %v1369 = vld [vmem:[%s1169 + $0x18] sm:$0xf]
        %v1370 = vld [vmem:[%s1169 + $0x1c] sm:$0xf]
        %v1371 = vld [vmem:[%s1169 + $0x20] sm:$0x1]
        %v1372 = vld [vmem:[%s1169 + $0x24] sm:$0xf]
        %v1373 = vld [vmem:[%s1169 + $0x28] sm:$0xf]
        %v1374 = vld [vmem:[%s1169 + $0x2c] sm:$0x1]
        %v1375 = vld [vmem:[%s1169 + $0x30] sm:$0xf]
        %v1376 = vld [vmem:[%s1169 + $0x34] sm:$0xf]
        %v1377 = vld [vmem:[%s1169 + $0x38] sm:$0x1]
        %v1378 = vld [vmem:[%s1169 + $0x3c] sm:$0xf]
        %v1379 = vld [vmem:[%s1169 + $0x40] sm:$0xf]
        %v1380 = vld [vmem:[%s1169 + $0x44] sm:$0x1]
        %v1381 = vld [vmem:[%s1169 + $0x48] sm:$0xf]
        %v1382 = vld [vmem:[%s1169 + $0x4c] sm:$0xf]
        %v1383 = vld [vmem:[%s1169 + $0x50] sm:$0x1]
        %v1384 = vld [vmem:[%s1169 + $0x54] sm:$0xf]
        %v1385 = vld [vmem:[%s1169 + $0x58] sm:$0xf]
        %v1386 = vld [vmem:[%s1169 + $0x5c] sm:$0x1]
        %v1387 = vld [vmem:[%s1169 + $0x60] sm:$0xf]
        %v1388 = vld [vmem:[%s1169 + $0x64] sm:$0xf]
        %v1389 = vld [vmem:[%s1169 + $0x68] sm:$0x1]
        %v1390 = vld [vmem:[%s1169 + $0x6c] sm:$0xf]
        %v1391 = vld [vmem:[%s1169 + $0x70] sm:$0xf]
        %v1392 = vld [vmem:[%s1169 + $0x74] sm:$0x1]
        %v1393 = vld [vmem:[%s1169 + $0x78] sm:$0xf]
        %v1394 = vld [vmem:[%s1169 + $0x7c] sm:$0xf]
        %v1395 = vld [vmem:[%s1169 + $0x80] sm:$0x1]
        %v1396 = vld [vmem:[%s1169 + $0x84] sm:$0xf]
        %v1397 = vld [vmem:[%s1169 + $0x88] sm:$0xf]
        %v1398 = vld [vmem:[%s1169 + $0x8c] sm:$0x1]
        %v1399 = vld [vmem:[%s1169 + $0x90] sm:$0xf]
        %v1400 = vld [vmem:[%s1169 + $0x94] sm:$0xf]
        %v1401 = vld [vmem:[%s1169 + $0x98] sm:$0x1]
        %v1402 = vld [vmem:[%s1169 + $0x9c] sm:$0xf]
        %v1403 = vld [vmem:[%s1169 + $0xa0] sm:$0xf]
        %v1404 = vld [vmem:[%s1169 + $0xa4] sm:$0x1]
        %v1405 = vld [vmem:[%s1169 + $0xa8] sm:$0xf]
        %v1406 = vld [vmem:[%s1169 + $0xac] sm:$0xf]
        %v1407 = vld [vmem:[%s1169 + $0xb0] sm:$0x1]
        %v1408 = vld [vmem:[%s1169 + $0xb4] sm:$0xf]
        %v1409 = vld [vmem:[%s1169 + $0xb8] sm:$0xf]
        %v1410 = vld [vmem:[%s1169 + $0xbc] sm:$0x1]
        %v1412 = vshrl.u32 %v1363, 16
        %v1414 = vrot.slane %v1412, 4
        %v1415 = vshll.u32 %v1363, 16
        %v1417 = vrot.slane %v1415, 5
        %v1418 = vor.u32 %v1414, %v1417
        %v1419 = vrot.slane %v1418, 4
        %v1421 = vshll.u32 %v1364, 16
        %v1423 = vrot.slane %v1421, 5
        %v1424 = vsel %vm315, %v1419, %v1423
        %v1425 = vshrl.u32 %v1364, 16
        %v1427 = vrot.slane %v1425, 4
        %v1428 = vor.u32 %v1427, %v1423
        %v1429 = vrot.slane %v1428, 4
        %v1431 = vshll.u32 %v1365, 16
        %v1433 = vrot.slane %v1431, 5
        %v1434 = vsel %vm315, %v1429, %v1433
        %v1436 = vshrl.u32 %v1366, 16
        %v1438 = vrot.slane %v1436, 4
        %v1439 = vshll.u32 %v1366, 16
        %v1441 = vrot.slane %v1439, 5
        %v1442 = vor.u32 %v1438, %v1441
        %v1443 = vrot.slane %v1442, 4
        %v1445 = vshll.u32 %v1367, 16
        %v1447 = vrot.slane %v1445, 5
        %v1448 = vsel %vm315, %v1443, %v1447
        %v1449 = vshrl.u32 %v1367, 16
        %v1451 = vrot.slane %v1449, 4
        %v1452 = vor.u32 %v1451, %v1447
        %v1453 = vrot.slane %v1452, 4
        %v1455 = vshll.u32 %v1368, 16
        %v1457 = vrot.slane %v1455, 5
        %v1458 = vsel %vm315, %v1453, %v1457
        %v1460 = vshrl.u32 %v1369, 16
        %v1462 = vrot.slane %v1460, 4
        %v1463 = vshll.u32 %v1369, 16
        %v1465 = vrot.slane %v1463, 5
        %v1466 = vor.u32 %v1462, %v1465
        %v1467 = vrot.slane %v1466, 4
        %v1469 = vshll.u32 %v1370, 16
        %v1471 = vrot.slane %v1469, 5
        %v1472 = vsel %vm315, %v1467, %v1471
        %v1473 = vshrl.u32 %v1370, 16
        %v1475 = vrot.slane %v1473, 4
        %v1476 = vor.u32 %v1475, %v1471
        %v1477 = vrot.slane %v1476, 4
        %v1479 = vshll.u32 %v1371, 16
        %v1481 = vrot.slane %v1479, 5
        %v1482 = vsel %vm315, %v1477, %v1481
        %v1484 = vshrl.u32 %v1372, 16
        %v1486 = vrot.slane %v1484, 4
        %v1487 = vshll.u32 %v1372, 16
        %v1489 = vrot.slane %v1487, 5
        %v1490 = vor.u32 %v1486, %v1489
        %v1491 = vrot.slane %v1490, 4
        %v1493 = vshll.u32 %v1373, 16
        %v1495 = vrot.slane %v1493, 5
        %v1496 = vsel %vm315, %v1491, %v1495
        %v1497 = vshrl.u32 %v1373, 16
        %v1499 = vrot.slane %v1497, 4
        %v1500 = vor.u32 %v1499, %v1495
        %v1501 = vrot.slane %v1500, 4
        %v1503 = vshll.u32 %v1374, 16
        %v1505 = vrot.slane %v1503, 5
        %v1506 = vsel %vm315, %v1501, %v1505
        %v1508 = vshrl.u32 %v1375, 16
        %v1510 = vrot.slane %v1508, 4
        %v1511 = vshll.u32 %v1375, 16
        %v1513 = vrot.slane %v1511, 5
        %v1514 = vor.u32 %v1510, %v1513
        %v1515 = vrot.slane %v1514, 4
        %v1517 = vshll.u32 %v1376, 16
        %v1519 = vrot.slane %v1517, 5
        %v1520 = vsel %vm315, %v1515, %v1519
        %v1521 = vshrl.u32 %v1376, 16
        %v1523 = vrot.slane %v1521, 4
        %v1524 = vor.u32 %v1523, %v1519
        %v1525 = vrot.slane %v1524, 4
        %v1527 = vshll.u32 %v1377, 16
        %v1529 = vrot.slane %v1527, 5
        %v1530 = vsel %vm315, %v1525, %v1529
        %v1532 = vshrl.u32 %v1378, 16
        %v1534 = vrot.slane %v1532, 4
        %v1535 = vshll.u32 %v1378, 16
        %v1537 = vrot.slane %v1535, 5
        %v1538 = vor.u32 %v1534, %v1537
        %v1539 = vrot.slane %v1538, 4
        %v1541 = vshll.u32 %v1379, 16
        %v1543 = vrot.slane %v1541, 5
        %v1544 = vsel %vm315, %v1539, %v1543
        %v1545 = vshrl.u32 %v1379, 16
        %v1547 = vrot.slane %v1545, 4
        %v1548 = vor.u32 %v1547, %v1543
        %v1549 = vrot.slane %v1548, 4
        %v1551 = vshll.u32 %v1380, 16
        %v1553 = vrot.slane %v1551, 5
        %v1554 = vsel %vm315, %v1549, %v1553
        %v1556 = vshrl.u32 %v1381, 16
        %v1558 = vrot.slane %v1556, 4
        %v1559 = vshll.u32 %v1381, 16
        %v1561 = vrot.slane %v1559, 5
        %v1562 = vor.u32 %v1558, %v1561
        %v1563 = vrot.slane %v1562, 4
        %v1565 = vshll.u32 %v1382, 16
        %v1567 = vrot.slane %v1565, 5
        %v1568 = vsel %vm315, %v1563, %v1567
        %v1569 = vshrl.u32 %v1382, 16
        %v1571 = vrot.slane %v1569, 4
        %v1572 = vor.u32 %v1571, %v1567
        %v1573 = vrot.slane %v1572, 4
        %v1575 = vshll.u32 %v1383, 16
        %v1577 = vrot.slane %v1575, 5
        %v1578 = vsel %vm315, %v1573, %v1577
        %v1580 = vshrl.u32 %v1384, 16
        %v1582 = vrot.slane %v1580, 4
        %v1583 = vshll.u32 %v1384, 16
        %v1585 = vrot.slane %v1583, 5
        %v1586 = vor.u32 %v1582, %v1585
        %v1587 = vrot.slane %v1586, 4
        %v1589 = vshll.u32 %v1385, 16
        %v1591 = vrot.slane %v1589, 5
        %v1592 = vsel %vm315, %v1587, %v1591
        %v1593 = vshrl.u32 %v1385, 16
        %v1595 = vrot.slane %v1593, 4
        %v1596 = vor.u32 %v1595, %v1591
        %v1597 = vrot.slane %v1596, 4
        %v1599 = vshll.u32 %v1386, 16
        %v1601 = vrot.slane %v1599, 5
        %v1602 = vsel %vm315, %v1597, %v1601
        %v1604 = vshrl.u32 %v1387, 16
        %v1606 = vrot.slane %v1604, 4
        %v1607 = vshll.u32 %v1387, 16
        %v1609 = vrot.slane %v1607, 5
        %v1610 = vor.u32 %v1606, %v1609
        %v1611 = vrot.slane %v1610, 4
        %v1613 = vshll.u32 %v1388, 16
        %v1615 = vrot.slane %v1613, 5
        %v1616 = vsel %vm315, %v1611, %v1615
        %v1617 = vshrl.u32 %v1388, 16
        %v1619 = vrot.slane %v1617, 4
        %v1620 = vor.u32 %v1619, %v1615
        %v1621 = vrot.slane %v1620, 4
        %v1623 = vshll.u32 %v1389, 16
        %v1625 = vrot.slane %v1623, 5
        %v1626 = vsel %vm315, %v1621, %v1625
        %v1628 = vshrl.u32 %v1390, 16
        %v1630 = vrot.slane %v1628, 4
        %v1631 = vshll.u32 %v1390, 16
        %v1633 = vrot.slane %v1631, 5
        %v1634 = vor.u32 %v1630, %v1633
        %v1635 = vrot.slane %v1634, 4
        %v1637 = vshll.u32 %v1391, 16
        %v1639 = vrot.slane %v1637, 5
        %v1640 = vsel %vm315, %v1635, %v1639
        %v1641 = vshrl.u32 %v1391, 16
        %v1643 = vrot.slane %v1641, 4
        %v1644 = vor.u32 %v1643, %v1639
        %v1645 = vrot.slane %v1644, 4
        %v1647 = vshll.u32 %v1392, 16
        %v1649 = vrot.slane %v1647, 5
        %v1650 = vsel %vm315, %v1645, %v1649
        %v1652 = vshrl.u32 %v1393, 16
        %v1654 = vrot.slane %v1652, 4
        %v1655 = vshll.u32 %v1393, 16
        %v1657 = vrot.slane %v1655, 5
        %v1658 = vor.u32 %v1654, %v1657
        %v1659 = vrot.slane %v1658, 4
        %v1661 = vshll.u32 %v1394, 16
        %v1663 = vrot.slane %v1661, 5
        %v1664 = vsel %vm315, %v1659, %v1663
        %v1665 = vshrl.u32 %v1394, 16
        %v1667 = vrot.slane %v1665, 4
        %v1668 = vor.u32 %v1667, %v1663
        %v1669 = vrot.slane %v1668, 4
        %v1671 = vshll.u32 %v1395, 16
        %v1673 = vrot.slane %v1671, 5
        %v1674 = vsel %vm315, %v1669, %v1673
        %v1676 = vshrl.u32 %v1396, 16
        %v1678 = vrot.slane %v1676, 4
        %v1679 = vshll.u32 %v1396, 16
        %v1681 = vrot.slane %v1679, 5
        %v1682 = vor.u32 %v1678, %v1681
        %v1683 = vrot.slane %v1682, 4
        %v1685 = vshll.u32 %v1397, 16
        %v1687 = vrot.slane %v1685, 5
        %v1688 = vsel %vm315, %v1683, %v1687
        %v1689 = vshrl.u32 %v1397, 16
        %v1691 = vrot.slane %v1689, 4
        %v1692 = vor.u32 %v1691, %v1687
        %v1693 = vrot.slane %v1692, 4
        %v1695 = vshll.u32 %v1398, 16
        %v1697 = vrot.slane %v1695, 5
        %v1698 = vsel %vm315, %v1693, %v1697
        %v1700 = vshrl.u32 %v1399, 16
        %v1702 = vrot.slane %v1700, 4
        %v1703 = vshll.u32 %v1399, 16
        %v1705 = vrot.slane %v1703, 5
        %v1706 = vor.u32 %v1702, %v1705
        %v1707 = vrot.slane %v1706, 4
        %v1709 = vshll.u32 %v1400, 16
        %v1711 = vrot.slane %v1709, 5
        %v1712 = vsel %vm315, %v1707, %v1711
        %v1713 = vshrl.u32 %v1400, 16
        %v1715 = vrot.slane %v1713, 4
        %v1716 = vor.u32 %v1715, %v1711
        %v1717 = vrot.slane %v1716, 4
        %v1719 = vshll.u32 %v1401, 16
        %v1721 = vrot.slane %v1719, 5
        %v1722 = vsel %vm315, %v1717, %v1721
        %v1724 = vshrl.u32 %v1402, 16
        %v1726 = vrot.slane %v1724, 4
        %v1727 = vshll.u32 %v1402, 16
        %v1729 = vrot.slane %v1727, 5
        %v1730 = vor.u32 %v1726, %v1729
        %v1731 = vrot.slane %v1730, 4
        %v1733 = vshll.u32 %v1403, 16
        %v1735 = vrot.slane %v1733, 5
        %v1736 = vsel %vm315, %v1731, %v1735
        %v1737 = vshrl.u32 %v1403, 16
        %v1739 = vrot.slane %v1737, 4
        %v1740 = vor.u32 %v1739, %v1735
        %v1741 = vrot.slane %v1740, 4
        %v1743 = vshll.u32 %v1404, 16
        %v1745 = vrot.slane %v1743, 5
        %v1746 = vsel %vm315, %v1741, %v1745
        %v1748 = vshrl.u32 %v1405, 16
        %v1750 = vrot.slane %v1748, 4
        %v1751 = vshll.u32 %v1405, 16
        %v1753 = vrot.slane %v1751, 5
        %v1754 = vor.u32 %v1750, %v1753
        %v1755 = vrot.slane %v1754, 4
        %v1757 = vshll.u32 %v1406, 16
        %v1759 = vrot.slane %v1757, 5
        %v1760 = vsel %vm315, %v1755, %v1759
        %v1761 = vshrl.u32 %v1406, 16
        %v1763 = vrot.slane %v1761, 4
        %v1764 = vor.u32 %v1763, %v1759
        %v1765 = vrot.slane %v1764, 4
        %v1767 = vshll.u32 %v1407, 16
        %v1769 = vrot.slane %v1767, 5
        %v1770 = vsel %vm315, %v1765, %v1769
        %v1772 = vshrl.u32 %v1408, 16
        %v1774 = vrot.slane %v1772, 4
        %v1775 = vshll.u32 %v1408, 16
        %v1777 = vrot.slane %v1775, 5
        %v1778 = vor.u32 %v1774, %v1777
        %v1779 = vrot.slane %v1778, 4
        %v1781 = vshll.u32 %v1409, 16
        %v1783 = vrot.slane %v1781, 5
        %v1784 = vsel %vm315, %v1779, %v1783
        %v1785 = vshrl.u32 %v1409, 16
        %v1787 = vrot.slane %v1785, 4
        %v1788 = vor.u32 %v1787, %v1783
        %v1789 = vrot.slane %v1788, 4
        %v1791 = vshll.u32 %v1410, 16
        %v1793 = vrot.slane %v1791, 5
        %v1794 = vsel %vm315, %v1789, %v1793
        %1795 = vrot.lane.b32.xlu0 %v1424, 16
        %v1796 = vpop.permute.xlu0 %1795
        %1797 = vrot.lane.b32.xlu0 %v1434, 16
        %v1798 = vpop.permute.xlu0 %1797
        %1799 = vrot.lane.b32.xlu0 %v1448, 16
        %v1800 = vpop.permute.xlu0 %1799
        %1801 = vrot.lane.b32.xlu0 %v1458, 16
        %v1802 = vpop.permute.xlu0 %1801
        %1803 = vrot.lane.b32.xlu0 %v1472, 16
        %v1804 = vpop.permute.xlu0 %1803
        %1805 = vrot.lane.b32.xlu0 %v1482, 16
        %v1806 = vpop.permute.xlu0 %1805
        %1807 = vrot.lane.b32.xlu0 %v1496, 16
        %v1808 = vpop.permute.xlu0 %1807
        %1809 = vrot.lane.b32.xlu0 %v1506, 16
        %v1810 = vpop.permute.xlu0 %1809
        %1811 = vrot.lane.b32.xlu0 %v1520, 16
        %v1812 = vpop.permute.xlu0 %1811
        %1813 = vrot.lane.b32.xlu0 %v1530, 16
        %v1814 = vpop.permute.xlu0 %1813
        %1815 = vrot.lane.b32.xlu0 %v1544, 16
        %v1816 = vpop.permute.xlu0 %1815
        %1817 = vrot.lane.b32.xlu0 %v1554, 16
        %v1818 = vpop.permute.xlu0 %1817
        %1819 = vrot.lane.b32.xlu0 %v1568, 16
        %v1820 = vpop.permute.xlu0 %1819
        %1821 = vrot.lane.b32.xlu0 %v1578, 16
        %v1822 = vpop.permute.xlu0 %1821
        %1823 = vrot.lane.b32.xlu0 %v1592, 16
        %v1824 = vpop.permute.xlu0 %1823
        %1825 = vrot.lane.b32.xlu0 %v1602, 16
        %v1826 = vpop.permute.xlu0 %1825
        %1827 = vrot.lane.b32.xlu0 %v1616, 16
        %v1828 = vpop.permute.xlu0 %1827
        %1829 = vrot.lane.b32.xlu0 %v1626, 16
        %v1830 = vpop.permute.xlu0 %1829
        %1831 = vrot.lane.b32.xlu0 %v1640, 16
        %v1832 = vpop.permute.xlu0 %1831
        %1833 = vrot.lane.b32.xlu0 %v1650, 16
        %v1834 = vpop.permute.xlu0 %1833
        %1835 = vrot.lane.b32.xlu0 %v1664, 16
        %v1836 = vpop.permute.xlu0 %1835
        %1837 = vrot.lane.b32.xlu0 %v1674, 16
        %v1838 = vpop.permute.xlu0 %1837
        %1839 = vrot.lane.b32.xlu0 %v1688, 16
        %v1840 = vpop.permute.xlu0 %1839
        %1841 = vrot.lane.b32.xlu0 %v1698, 16
        %v1842 = vpop.permute.xlu0 %1841
        %1843 = vrot.lane.b32.xlu0 %v1712, 16
        %v1844 = vpop.permute.xlu0 %1843
        %1845 = vrot.lane.b32.xlu0 %v1722, 16
        %v1846 = vpop.permute.xlu0 %1845
        %1847 = vrot.lane.b32.xlu0 %v1736, 16
        %v1848 = vpop.permute.xlu0 %1847
        %1849 = vrot.lane.b32.xlu0 %v1746, 16
        %v1850 = vpop.permute.xlu0 %1849
        %1851 = vrot.lane.b32.xlu0 %v1760, 16
        %v1852 = vpop.permute.xlu0 %1851
        %1853 = vrot.lane.b32.xlu0 %v1770, 16
        %v1854 = vpop.permute.xlu0 %1853
        %1855 = vrot.lane.b32.xlu0 %v1784, 16
        %v1856 = vpop.permute.xlu0 %1855
        %1857 = vrot.lane.b32.xlu0 %v1794, 16
        %v1858 = vpop.permute.xlu0 %1857
        %vm1891 = vcmask 158848
        %1892 = vst.msk [vmem:[#allocation2] sm:$0xf] %vm1891, %v1796
        %1893 = vst.msk [vmem:[#allocation2 + $0x4] sm:$0xf] %vm1891, %v1798
        %1894 = vst.msk [vmem:[#allocation2 + $0x8] sm:$0xf] %vm1891, %v1800
        %1895 = vst.msk [vmem:[#allocation2 + $0xc] sm:$0xf] %vm1891, %v1802
        %1896 = vst.msk [vmem:[#allocation2 + $0x10] sm:$0xf] %vm1891, %v1804
        %1897 = vst.msk [vmem:[#allocation2 + $0x14] sm:$0xf] %vm1891, %v1806
        %1898 = vst.msk [vmem:[#allocation2 + $0x18] sm:$0xf] %vm1891, %v1808
        %1899 = vst.msk [vmem:[#allocation2 + $0x1c] sm:$0xf] %vm1891, %v1810
        %1900 = vst.msk [vmem:[#allocation2 + $0x20] sm:$0xf] %vm1891, %v1812
        %1901 = vst.msk [vmem:[#allocation2 + $0x24] sm:$0xf] %vm1891, %v1814
        %1902 = vst.msk [vmem:[#allocation2 + $0x28] sm:$0xf] %vm1891, %v1816
        %1903 = vst.msk [vmem:[#allocation2 + $0x2c] sm:$0xf] %vm1891, %v1818
        %1904 = vst.msk [vmem:[#allocation2 + $0x30] sm:$0xf] %vm1891, %v1820
        %1905 = vst.msk [vmem:[#allocation2 + $0x34] sm:$0xf] %vm1891, %v1822
        %1906 = vst.msk [vmem:[#allocation2 + $0x38] sm:$0xf] %vm1891, %v1824
        %1907 = vst.msk [vmem:[#allocation2 + $0x3c] sm:$0xf] %vm1891, %v1826
        %1908 = vst.msk [vmem:[#allocation2 + $0x40] sm:$0xf] %vm1891, %v1828
        %1909 = vst.msk [vmem:[#allocation2 + $0x44] sm:$0xf] %vm1891, %v1830
        %1910 = vst.msk [vmem:[#allocation2 + $0x48] sm:$0xf] %vm1891, %v1832
        %1911 = vst.msk [vmem:[#allocation2 + $0x4c] sm:$0xf] %vm1891, %v1834
        %1912 = vst.msk [vmem:[#allocation2 + $0x50] sm:$0xf] %vm1891, %v1836
        %1913 = vst.msk [vmem:[#allocation2 + $0x54] sm:$0xf] %vm1891, %v1838
        %1914 = vst.msk [vmem:[#allocation2 + $0x58] sm:$0xf] %vm1891, %v1840
        %1915 = vst.msk [vmem:[#allocation2 + $0x5c] sm:$0xf] %vm1891, %v1842
        %1916 = vst.msk [vmem:[#allocation2 + $0x60] sm:$0xf] %vm1891, %v1844
        %1917 = vst.msk [vmem:[#allocation2 + $0x64] sm:$0xf] %vm1891, %v1846
        %1918 = vst.msk [vmem:[#allocation2 + $0x68] sm:$0xf] %vm1891, %v1848
        %1919 = vst.msk [vmem:[#allocation2 + $0x6c] sm:$0xf] %vm1891, %v1850
        %1920 = vst.msk [vmem:[#allocation2 + $0x70] sm:$0xf] %vm1891, %v1852
        %1921 = vst.msk [vmem:[#allocation2 + $0x74] sm:$0xf] %vm1891, %v1854
        %1922 = vst.msk [vmem:[#allocation2 + $0x78] sm:$0xf] %vm1891, %v1856
        %1923 = vst.msk [vmem:[#allocation2 + $0x7c] sm:$0xf] %vm1891, %v1858
        %v1924 = vld [vmem:[%s1169] sm:$0xe]
        %v1925 = vld [vmem:[%s1169 + $0x4] sm:$0xf]
        %v1926 = vld [vmem:[%s1169 + $0x8] sm:$0x1]
        %v1927 = vld [vmem:[%s1169 + $0xc] sm:$0xe]
        %v1928 = vld [vmem:[%s1169 + $0x10] sm:$0xf]
        %v1929 = vld [vmem:[%s1169 + $0x14] sm:$0x1]
        %v1930 = vld [vmem:[%s1169 + $0x18] sm:$0xe]
        %v1931 = vld [vmem:[%s1169 + $0x1c] sm:$0xf]
        %v1932 = vld [vmem:[%s1169 + $0x20] sm:$0x1]
        %v1933 = vld [vmem:[%s1169 + $0x24] sm:$0xe]
        %v1934 = vld [vmem:[%s1169 + $0x28] sm:$0xf]
        %v1935 = vld [vmem:[%s1169 + $0x2c] sm:$0x1]
        %v1936 = vld [vmem:[%s1169 + $0x30] sm:$0xe]
        %v1937 = vld [vmem:[%s1169 + $0x34] sm:$0xf]
        %v1938 = vld [vmem:[%s1169 + $0x38] sm:$0x1]
        %v1939 = vld [vmem:[%s1169 + $0x3c] sm:$0xe]
        %v1940 = vld [vmem:[%s1169 + $0x40] sm:$0xf]
        %v1941 = vld [vmem:[%s1169 + $0x44] sm:$0x1]
        %v1942 = vld [vmem:[%s1169 + $0x48] sm:$0xe]
        %v1943 = vld [vmem:[%s1169 + $0x4c] sm:$0xf]
        %v1944 = vld [vmem:[%s1169 + $0x50] sm:$0x1]
        %v1945 = vld [vmem:[%s1169 + $0x54] sm:$0xe]
        %v1946 = vld [vmem:[%s1169 + $0x58] sm:$0xf]
        %v1947 = vld [vmem:[%s1169 + $0x5c] sm:$0x1]
        %v1948 = vld [vmem:[%s1169 + $0x60] sm:$0xe]
        %v1949 = vld [vmem:[%s1169 + $0x64] sm:$0xf]
        %v1950 = vld [vmem:[%s1169 + $0x68] sm:$0x1]
        %v1951 = vld [vmem:[%s1169 + $0x6c] sm:$0xe]
        %v1952 = vld [vmem:[%s1169 + $0x70] sm:$0xf]
        %v1953 = vld [vmem:[%s1169 + $0x74] sm:$0x1]
        %v1954 = vld [vmem:[%s1169 + $0x78] sm:$0xe]
        %v1955 = vld [vmem:[%s1169 + $0x7c] sm:$0xf]
        %v1956 = vld [vmem:[%s1169 + $0x80] sm:$0x1]
        %v1957 = vld [vmem:[%s1169 + $0x84] sm:$0xe]
        %v1958 = vld [vmem:[%s1169 + $0x88] sm:$0xf]
        %v1959 = vld [vmem:[%s1169 + $0x8c] sm:$0x1]
        %v1960 = vld [vmem:[%s1169 + $0x90] sm:$0xe]
        %v1961 = vld [vmem:[%s1169 + $0x94] sm:$0xf]
        %v1962 = vld [vmem:[%s1169 + $0x98] sm:$0x1]
        %v1963 = vld [vmem:[%s1169 + $0x9c] sm:$0xe]
        %v1964 = vld [vmem:[%s1169 + $0xa0] sm:$0xf]
        %v1965 = vld [vmem:[%s1169 + $0xa4] sm:$0x1]
        %v1966 = vld [vmem:[%s1169 + $0xa8] sm:$0xe]
        %v1967 = vld [vmem:[%s1169 + $0xac] sm:$0xf]
        %v1968 = vld [vmem:[%s1169 + $0xb0] sm:$0x1]
        %v1969 = vld [vmem:[%s1169 + $0xb4] sm:$0xe]
        %v1970 = vld [vmem:[%s1169 + $0xb8] sm:$0xf]
        %v1971 = vld [vmem:[%s1169 + $0xbc] sm:$0x1]
        %v2020 = vrot.slane %v1924, 5
        %v2021 = vrot.slane %v2020, 4
        %v2022 = vrot.slane %v1925, 5
        %v2023 = vsel %vm927, %v2021, %v2022
        %v2024 = vrot.slane %v2022, 4
        %v2025 = vrot.slane %v1926, 5
        %v2026 = vsel %vm927, %v2024, %v2025
        %v2027 = vrot.slane %v1927, 5
        %v2028 = vrot.slane %v2027, 4
        %v2029 = vrot.slane %v1928, 5
        %v2030 = vsel %vm927, %v2028, %v2029
        %v2031 = vrot.slane %v2029, 4
        %v2032 = vrot.slane %v1929, 5
        %v2033 = vsel %vm927, %v2031, %v2032
        %v2034 = vrot.slane %v1930, 5
        %v2035 = vrot.slane %v2034, 4
        %v2036 = vrot.slane %v1931, 5
        %v2037 = vsel %vm927, %v2035, %v2036
        %v2038 = vrot.slane %v2036, 4
        %v2039 = vrot.slane %v1932, 5
        %v2040 = vsel %vm927, %v2038, %v2039
        %v2041 = vrot.slane %v1933, 5
        %v2042 = vrot.slane %v2041, 4
        %v2043 = vrot.slane %v1934, 5
        %v2044 = vsel %vm927, %v2042, %v2043
        %v2045 = vrot.slane %v2043, 4
        %v2046 = vrot.slane %v1935, 5
        %v2047 = vsel %vm927, %v2045, %v2046
        %v2048 = vrot.slane %v1936, 5
        %v2049 = vrot.slane %v2048, 4
        %v2050 = vrot.slane %v1937, 5
        %v2051 = vsel %vm927, %v2049, %v2050
        %v2052 = vrot.slane %v2050, 4
        %v2053 = vrot.slane %v1938, 5
        %v2054 = vsel %vm927, %v2052, %v2053
        %v2055 = vrot.slane %v1939, 5
        %v2056 = vrot.slane %v2055, 4
        %v2057 = vrot.slane %v1940, 5
        %v2058 = vsel %vm927, %v2056, %v2057
        %v2059 = vrot.slane %v2057, 4
        %v2060 = vrot.slane %v1941, 5
        %v2061 = vsel %vm927, %v2059, %v2060
        %v2062 = vrot.slane %v1942, 5
        %v2063 = vrot.slane %v2062, 4
        %v2064 = vrot.slane %v1943, 5
        %v2065 = vsel %vm927, %v2063, %v2064
        %v2066 = vrot.slane %v2064, 4
        %v2067 = vrot.slane %v1944, 5
        %v2068 = vsel %vm927, %v2066, %v2067
        %v2069 = vrot.slane %v1945, 5
        %v2070 = vrot.slane %v2069, 4
        %v2071 = vrot.slane %v1946, 5
        %v2072 = vsel %vm927, %v2070, %v2071
        %v2073 = vrot.slane %v2071, 4
        %v2074 = vrot.slane %v1947, 5
        %v2075 = vsel %vm927, %v2073, %v2074
        %v2076 = vrot.slane %v1948, 5
        %v2077 = vrot.slane %v2076, 4
        %v2078 = vrot.slane %v1949, 5
        %v2079 = vsel %vm927, %v2077, %v2078
        %v2080 = vrot.slane %v2078, 4
        %v2081 = vrot.slane %v1950, 5
        %v2082 = vsel %vm927, %v2080, %v2081
        %v2083 = vrot.slane %v1951, 5
        %v2084 = vrot.slane %v2083, 4
        %v2085 = vrot.slane %v1952, 5
        %v2086 = vsel %vm927, %v2084, %v2085
        %v2087 = vrot.slane %v2085, 4
        %v2088 = vrot.slane %v1953, 5
        %v2089 = vsel %vm927, %v2087, %v2088
        %v2090 = vrot.slane %v1954, 5
        %v2091 = vrot.slane %v2090, 4
        %v2092 = vrot.slane %v1955, 5
        %v2093 = vsel %vm927, %v2091, %v2092
        %v2094 = vrot.slane %v2092, 4
        %v2095 = vrot.slane %v1956, 5
        %v2096 = vsel %vm927, %v2094, %v2095
        %v2097 = vrot.slane %v1957, 5
        %v2098 = vrot.slane %v2097, 4
        %v2099 = vrot.slane %v1958, 5
        %v2100 = vsel %vm927, %v2098, %v2099
        %v2101 = vrot.slane %v2099, 4
        %v2102 = vrot.slane %v1959, 5
        %v2103 = vsel %vm927, %v2101, %v2102
        %v2104 = vrot.slane %v1960, 5
        %v2105 = vrot.slane %v2104, 4
        %v2106 = vrot.slane %v1961, 5
        %v2107 = vsel %vm927, %v2105, %v2106
        %v2108 = vrot.slane %v2106, 4
        %v2109 = vrot.slane %v1962, 5
        %v2110 = vsel %vm927, %v2108, %v2109
        %v2111 = vrot.slane %v1963, 5
        %v2112 = vrot.slane %v2111, 4
        %v2113 = vrot.slane %v1964, 5
        %v2114 = vsel %vm927, %v2112, %v2113
        %v2115 = vrot.slane %v2113, 4
        %v2116 = vrot.slane %v1965, 5
        %v2117 = vsel %vm927, %v2115, %v2116
        %v2118 = vrot.slane %v1966, 5
        %v2119 = vrot.slane %v2118, 4
        %v2120 = vrot.slane %v1967, 5
        %v2121 = vsel %vm927, %v2119, %v2120
        %v2122 = vrot.slane %v2120, 4
        %v2123 = vrot.slane %v1968, 5
        %v2124 = vsel %vm927, %v2122, %v2123
        %v2125 = vrot.slane %v1969, 5
        %v2126 = vrot.slane %v2125, 4
        %v2127 = vrot.slane %v1970, 5
        %v2128 = vsel %vm927, %v2126, %v2127
        %v2129 = vrot.slane %v2127, 4
        %v2130 = vrot.slane %v1971, 5
        %v2131 = vsel %vm927, %v2129, %v2130
        %2132 = vrot.lane.b32.xlu0 %v2023, 20
        %v2133 = vpop.permute.xlu0 %2132
        %2134 = vrot.lane.b32.xlu0 %v2026, 20
        %v2135 = vpop.permute.xlu0 %2134
        %2136 = vrot.lane.b32.xlu0 %v2030, 20
        %v2137 = vpop.permute.xlu0 %2136
        %2138 = vrot.lane.b32.xlu0 %v2033, 20
        %v2139 = vpop.permute.xlu0 %2138
        %2140 = vrot.lane.b32.xlu0 %v2037, 20
        %v2141 = vpop.permute.xlu0 %2140
        %2142 = vrot.lane.b32.xlu0 %v2040, 20
        %v2143 = vpop.permute.xlu0 %2142
        %2144 = vrot.lane.b32.xlu0 %v2044, 20
        %v2145 = vpop.permute.xlu0 %2144
        %2146 = vrot.lane.b32.xlu0 %v2047, 20
        %v2147 = vpop.permute.xlu0 %2146
        %2148 = vrot.lane.b32.xlu0 %v2051, 20
        %v2149 = vpop.permute.xlu0 %2148
        %2150 = vrot.lane.b32.xlu0 %v2054, 20
        %v2151 = vpop.permute.xlu0 %2150
        %2152 = vrot.lane.b32.xlu0 %v2058, 20
        %v2153 = vpop.permute.xlu0 %2152
        %2154 = vrot.lane.b32.xlu0 %v2061, 20
        %v2155 = vpop.permute.xlu0 %2154
        %2156 = vrot.lane.b32.xlu0 %v2065, 20
        %v2157 = vpop.permute.xlu0 %2156
        %2158 = vrot.lane.b32.xlu0 %v2068, 20
        %v2159 = vpop.permute.xlu0 %2158
        %2160 = vrot.lane.b32.xlu0 %v2072, 20
        %v2161 = vpop.permute.xlu0 %2160
        %2162 = vrot.lane.b32.xlu0 %v2075, 20
        %v2163 = vpop.permute.xlu0 %2162
        %2164 = vrot.lane.b32.xlu0 %v2079, 20
        %v2165 = vpop.permute.xlu0 %2164
        %2166 = vrot.lane.b32.xlu0 %v2082, 20
        %v2167 = vpop.permute.xlu0 %2166
        %2168 = vrot.lane.b32.xlu0 %v2086, 20
        %v2169 = vpop.permute.xlu0 %2168
        %2170 = vrot.lane.b32.xlu0 %v2089, 20
        %v2171 = vpop.permute.xlu0 %2170
        %2172 = vrot.lane.b32.xlu0 %v2093, 20
        %v2173 = vpop.permute.xlu0 %2172
        %2174 = vrot.lane.b32.xlu0 %v2096, 20
        %v2175 = vpop.permute.xlu0 %2174
        %2176 = vrot.lane.b32.xlu0 %v2100, 20
        %v2177 = vpop.permute.xlu0 %2176
        %2178 = vrot.lane.b32.xlu0 %v2103, 20
        %v2179 = vpop.permute.xlu0 %2178
        %2180 = vrot.lane.b32.xlu0 %v2107, 20
        %v2181 = vpop.permute.xlu0 %2180
        %2182 = vrot.lane.b32.xlu0 %v2110, 20
        %v2183 = vpop.permute.xlu0 %2182
        %2184 = vrot.lane.b32.xlu0 %v2114, 20
        %v2185 = vpop.permute.xlu0 %2184
        %2186 = vrot.lane.b32.xlu0 %v2117, 20
        %v2187 = vpop.permute.xlu0 %2186
        %2188 = vrot.lane.b32.xlu0 %v2121, 20
        %v2189 = vpop.permute.xlu0 %2188
        %2190 = vrot.lane.b32.xlu0 %v2124, 20
        %v2191 = vpop.permute.xlu0 %2190
        %2192 = vrot.lane.b32.xlu0 %v2128, 20
        %v2193 = vpop.permute.xlu0 %2192
        %2194 = vrot.lane.b32.xlu0 %v2131, 20
        %v2195 = vpop.permute.xlu0 %2194
        %vm2228 = vcmask 191648
        %2229 = vst.msk [vmem:[#allocation2] sm:$0xf] %vm2228, %v2133
        %2230 = vst.msk [vmem:[#allocation2 + $0x4] sm:$0xf] %vm2228, %v2135
        %2231 = vst.msk [vmem:[#allocation2 + $0x8] sm:$0xf] %vm2228, %v2137
        %2232 = vst.msk [vmem:[#allocation2 + $0xc] sm:$0xf] %vm2228, %v2139
        %2233 = vst.msk [vmem:[#allocation2 + $0x10] sm:$0xf] %vm2228, %v2141
        %2234 = vst.msk [vmem:[#allocation2 + $0x14] sm:$0xf] %vm2228, %v2143
        %2235 = vst.msk [vmem:[#allocation2 + $0x18] sm:$0xf] %vm2228, %v2145
        %2236 = vst.msk [vmem:[#allocation2 + $0x1c] sm:$0xf] %vm2228, %v2147
        %2237 = vst.msk [vmem:[#allocation2 + $0x20] sm:$0xf] %vm2228, %v2149
        %2238 = vst.msk [vmem:[#allocation2 + $0x24] sm:$0xf] %vm2228, %v2151
        %2239 = vst.msk [vmem:[#allocation2 + $0x28] sm:$0xf] %vm2228, %v2153
        %2240 = vst.msk [vmem:[#allocation2 + $0x2c] sm:$0xf] %vm2228, %v2155
        %2241 = vst.msk [vmem:[#allocation2 + $0x30] sm:$0xf] %vm2228, %v2157
        %2242 = vst.msk [vmem:[#allocation2 + $0x34] sm:$0xf] %vm2228, %v2159
        %2243 = vst.msk [vmem:[#allocation2 + $0x38] sm:$0xf] %vm2228, %v2161
        %2244 = vst.msk [vmem:[#allocation2 + $0x3c] sm:$0xf] %vm2228, %v2163
        %2245 = vst.msk [vmem:[#allocation2 + $0x40] sm:$0xf] %vm2228, %v2165
        %2246 = vst.msk [vmem:[#allocation2 + $0x44] sm:$0xf] %vm2228, %v2167
        %2247 = vst.msk [vmem:[#allocation2 + $0x48] sm:$0xf] %vm2228, %v2169
        %2248 = vst.msk [vmem:[#allocation2 + $0x4c] sm:$0xf] %vm2228, %v2171
        %2249 = vst.msk [vmem:[#allocation2 + $0x50] sm:$0xf] %vm2228, %v2173
        %2250 = vst.msk [vmem:[#allocation2 + $0x54] sm:$0xf] %vm2228, %v2175
        %2251 = vst.msk [vmem:[#allocation2 + $0x58] sm:$0xf] %vm2228, %v2177
        %2252 = vst.msk [vmem:[#allocation2 + $0x5c] sm:$0xf] %vm2228, %v2179
        %2253 = vst.msk [vmem:[#allocation2 + $0x60] sm:$0xf] %vm2228, %v2181
        %2254 = vst.msk [vmem:[#allocation2 + $0x64] sm:$0xf] %vm2228, %v2183
        %2255 = vst.msk [vmem:[#allocation2 + $0x68] sm:$0xf] %vm2228, %v2185
        %2256 = vst.msk [vmem:[#allocation2 + $0x6c] sm:$0xf] %vm2228, %v2187
        %2257 = vst.msk [vmem:[#allocation2 + $0x70] sm:$0xf] %vm2228, %v2189
        %2258 = vst.msk [vmem:[#allocation2 + $0x74] sm:$0xf] %vm2228, %v2191
        %2259 = vst.msk [vmem:[#allocation2 + $0x78] sm:$0xf] %vm2228, %v2193
        %2260 = vst.msk [vmem:[#allocation2 + $0x7c] sm:$0xf] %vm2228, %v2195
        %s2261 = scalar_lea.vmem %s195, 24
        %v2262 = vld [vmem:[%s2261] sm:$0xf]
        %v2263 = vld [vmem:[%s2261 + $0x4] sm:$0xf]
        %v2264 = vld [vmem:[%s2261 + $0xc] sm:$0xf]
        %v2265 = vld [vmem:[%s2261 + $0x10] sm:$0xf]
        %v2266 = vld [vmem:[%s2261 + $0x18] sm:$0xf]
        %v2267 = vld [vmem:[%s2261 + $0x1c] sm:$0xf]
        %v2268 = vld [vmem:[%s2261 + $0x24] sm:$0xf]
        %v2269 = vld [vmem:[%s2261 + $0x28] sm:$0xf]
        %v2270 = vld [vmem:[%s2261 + $0x30] sm:$0xf]
        %v2271 = vld [vmem:[%s2261 + $0x34] sm:$0xf]
        %v2272 = vld [vmem:[%s2261 + $0x3c] sm:$0xf]
        %v2273 = vld [vmem:[%s2261 + $0x40] sm:$0xf]
        %v2274 = vld [vmem:[%s2261 + $0x48] sm:$0xf]
        %v2275 = vld [vmem:[%s2261 + $0x4c] sm:$0xf]
        %v2276 = vld [vmem:[%s2261 + $0x54] sm:$0xf]
        %v2277 = vld [vmem:[%s2261 + $0x58] sm:$0xf]
        %v2278 = vld [vmem:[%s2261 + $0x60] sm:$0xf]
        %v2279 = vld [vmem:[%s2261 + $0x64] sm:$0xf]
        %v2280 = vld [vmem:[%s2261 + $0x6c] sm:$0xf]
        %v2281 = vld [vmem:[%s2261 + $0x70] sm:$0xf]
        %v2282 = vld [vmem:[%s2261 + $0x78] sm:$0xf]
        %v2283 = vld [vmem:[%s2261 + $0x7c] sm:$0xf]
        %v2284 = vld [vmem:[%s2261 + $0x84] sm:$0xf]
        %v2285 = vld [vmem:[%s2261 + $0x88] sm:$0xf]
        %v2286 = vld [vmem:[%s2261 + $0x90] sm:$0xf]
        %v2287 = vld [vmem:[%s2261 + $0x94] sm:$0xf]
        %v2288 = vld [vmem:[%s2261 + $0x9c] sm:$0xf]
        %v2289 = vld [vmem:[%s2261 + $0xa0] sm:$0xf]
        %v2290 = vld [vmem:[%s2261 + $0xa8] sm:$0xf]
        %v2291 = vld [vmem:[%s2261 + $0xac] sm:$0xf]
        %v2292 = vld [vmem:[%s2261 + $0xb4] sm:$0xf]
        %v2293 = vld [vmem:[%s2261 + $0xb8] sm:$0xf]
        %2326 = vrot.lane.b32.xlu0 %v2262, 24
        %v2327 = vpop.permute.xlu0 %2326
        %2328 = vrot.lane.b32.xlu0 %v2263, 24
        %v2329 = vpop.permute.xlu0 %2328
        %2330 = vrot.lane.b32.xlu0 %v2264, 24
        %v2331 = vpop.permute.xlu0 %2330
        %2332 = vrot.lane.b32.xlu0 %v2265, 24
        %v2333 = vpop.permute.xlu0 %2332
        %2334 = vrot.lane.b32.xlu0 %v2266, 24
        %v2335 = vpop.permute.xlu0 %2334
        %2336 = vrot.lane.b32.xlu0 %v2267, 24
        %v2337 = vpop.permute.xlu0 %2336
        %2338 = vrot.lane.b32.xlu0 %v2268, 24
        %v2339 = vpop.permute.xlu0 %2338
        %2340 = vrot.lane.b32.xlu0 %v2269, 24
        %v2341 = vpop.permute.xlu0 %2340
        %2342 = vrot.lane.b32.xlu0 %v2270, 24
        %v2343 = vpop.permute.xlu0 %2342
        %2344 = vrot.lane.b32.xlu0 %v2271, 24
        %v2345 = vpop.permute.xlu0 %2344
        %2346 = vrot.lane.b32.xlu0 %v2272, 24
        %v2347 = vpop.permute.xlu0 %2346
        %2348 = vrot.lane.b32.xlu0 %v2273, 24
        %v2349 = vpop.permute.xlu0 %2348
        %2350 = vrot.lane.b32.xlu0 %v2274, 24
        %v2351 = vpop.permute.xlu0 %2350
        %2352 = vrot.lane.b32.xlu0 %v2275, 24
        %v2353 = vpop.permute.xlu0 %2352
        %2354 = vrot.lane.b32.xlu0 %v2276, 24
        %v2355 = vpop.permute.xlu0 %2354
        %2356 = vrot.lane.b32.xlu0 %v2277, 24
        %v2357 = vpop.permute.xlu0 %2356
        %2358 = vrot.lane.b32.xlu0 %v2278, 24
        %v2359 = vpop.permute.xlu0 %2358
        %2360 = vrot.lane.b32.xlu0 %v2279, 24
        %v2361 = vpop.permute.xlu0 %2360
        %2362 = vrot.lane.b32.xlu0 %v2280, 24
        %v2363 = vpop.permute.xlu0 %2362
        %2364 = vrot.lane.b32.xlu0 %v2281, 24
        %v2365 = vpop.permute.xlu0 %2364
        %2366 = vrot.lane.b32.xlu0 %v2282, 24
        %v2367 = vpop.permute.xlu0 %2366
        %2368 = vrot.lane.b32.xlu0 %v2283, 24
        %v2369 = vpop.permute.xlu0 %2368
        %2370 = vrot.lane.b32.xlu0 %v2284, 24
        %v2371 = vpop.permute.xlu0 %2370
        %2372 = vrot.lane.b32.xlu0 %v2285, 24
        %v2373 = vpop.permute.xlu0 %2372
        %2374 = vrot.lane.b32.xlu0 %v2286, 24
        %v2375 = vpop.permute.xlu0 %2374
        %2376 = vrot.lane.b32.xlu0 %v2287, 24
        %v2377 = vpop.permute.xlu0 %2376
        %2378 = vrot.lane.b32.xlu0 %v2288, 24
        %v2379 = vpop.permute.xlu0 %2378
        %2380 = vrot.lane.b32.xlu0 %v2289, 24
        %v2381 = vpop.permute.xlu0 %2380
        %2382 = vrot.lane.b32.xlu0 %v2290, 24
        %v2383 = vpop.permute.xlu0 %2382
        %2384 = vrot.lane.b32.xlu0 %v2291, 24
        %v2385 = vpop.permute.xlu0 %2384
        %2386 = vrot.lane.b32.xlu0 %v2292, 24
        %v2387 = vpop.permute.xlu0 %2386
        %2388 = vrot.lane.b32.xlu0 %v2293, 24
        %v2389 = vpop.permute.xlu0 %2388
        %vm2422 = vcmask 224448
        %2423 = vst.msk [vmem:[#allocation2] sm:$0xf] %vm2422, %v2327
        %2424 = vst.msk [vmem:[#allocation2 + $0x4] sm:$0xf] %vm2422, %v2329
        %2425 = vst.msk [vmem:[#allocation2 + $0x8] sm:$0xf] %vm2422, %v2331
        %2426 = vst.msk [vmem:[#allocation2 + $0xc] sm:$0xf] %vm2422, %v2333
        %2427 = vst.msk [vmem:[#allocation2 + $0x10] sm:$0xf] %vm2422, %v2335
        %2428 = vst.msk [vmem:[#allocation2 + $0x14] sm:$0xf] %vm2422, %v2337
        %2429 = vst.msk [vmem:[#allocation2 + $0x18] sm:$0xf] %vm2422, %v2339
        %2430 = vst.msk [vmem:[#allocation2 + $0x1c] sm:$0xf] %vm2422, %v2341
        %2431 = vst.msk [vmem:[#allocation2 + $0x20] sm:$0xf] %vm2422, %v2343
        %2432 = vst.msk [vmem:[#allocation2 + $0x24] sm:$0xf] %vm2422, %v2345
        %2433 = vst.msk [vmem:[#allocation2 + $0x28] sm:$0xf] %vm2422, %v2347
        %2434 = vst.msk [vmem:[#allocation2 + $0x2c] sm:$0xf] %vm2422, %v2349
        %2435 = vst.msk [vmem:[#allocation2 + $0x30] sm:$0xf] %vm2422, %v2351
        %2436 = vst.msk [vmem:[#allocation2 + $0x34] sm:$0xf] %vm2422, %v2353
        %2437 = vst.msk [vmem:[#allocation2 + $0x38] sm:$0xf] %vm2422, %v2355
        %2438 = vst.msk [vmem:[#allocation2 + $0x3c] sm:$0xf] %vm2422, %v2357
        %2439 = vst.msk [vmem:[#allocation2 + $0x40] sm:$0xf] %vm2422, %v2359
        %2440 = vst.msk [vmem:[#allocation2 + $0x44] sm:$0xf] %vm2422, %v2361
        %2441 = vst.msk [vmem:[#allocation2 + $0x48] sm:$0xf] %vm2422, %v2363
        %2442 = vst.msk [vmem:[#allocation2 + $0x4c] sm:$0xf] %vm2422, %v2365
        %2443 = vst.msk [vmem:[#allocation2 + $0x50] sm:$0xf] %vm2422, %v2367
        %2444 = vst.msk [vmem:[#allocation2 + $0x54] sm:$0xf] %vm2422, %v2369
        %2445 = vst.msk [vmem:[#allocation2 + $0x58] sm:$0xf] %vm2422, %v2371
        %2446 = vst.msk [vmem:[#allocation2 + $0x5c] sm:$0xf] %vm2422, %v2373
        %2447 = vst.msk [vmem:[#allocation2 + $0x60] sm:$0xf] %vm2422, %v2375
        %2448 = vst.msk [vmem:[#allocation2 + $0x64] sm:$0xf] %vm2422, %v2377
        %2449 = vst.msk [vmem:[#allocation2 + $0x68] sm:$0xf] %vm2422, %v2379
        %2450 = vst.msk [vmem:[#allocation2 + $0x6c] sm:$0xf] %vm2422, %v2381
        %2451 = vst.msk [vmem:[#allocation2 + $0x70] sm:$0xf] %vm2422, %v2383
        %2452 = vst.msk [vmem:[#allocation2 + $0x74] sm:$0xf] %vm2422, %v2385
        %2453 = vst.msk [vmem:[#allocation2 + $0x78] sm:$0xf] %vm2422, %v2387
        %2454 = vst.msk [vmem:[#allocation2 + $0x7c] sm:$0xf] %vm2422, %v2389
        %v2455 = vld [vmem:[%s2261] sm:$0xf]
        %v2456 = vld [vmem:[%s2261 + $0x4] sm:$0xf]
        %v2457 = vld [vmem:[%s2261 + $0x8] sm:$0x1]
        %v2458 = vld [vmem:[%s2261 + $0xc] sm:$0xf]
        %v2459 = vld [vmem:[%s2261 + $0x10] sm:$0xf]
        %v2460 = vld [vmem:[%s2261 + $0x14] sm:$0x1]
        %v2461 = vld [vmem:[%s2261 + $0x18] sm:$0xf]
        %v2462 = vld [vmem:[%s2261 + $0x1c] sm:$0xf]
        %v2463 = vld [vmem:[%s2261 + $0x20] sm:$0x1]
        %v2464 = vld [vmem:[%s2261 + $0x24] sm:$0xf]
        %v2465 = vld [vmem:[%s2261 + $0x28] sm:$0xf]
        %v2466 = vld [vmem:[%s2261 + $0x2c] sm:$0x1]
        %v2467 = vld [vmem:[%s2261 + $0x30] sm:$0xf]
        %v2468 = vld [vmem:[%s2261 + $0x34] sm:$0xf]
        %v2469 = vld [vmem:[%s2261 + $0x38] sm:$0x1]
        %v2470 = vld [vmem:[%s2261 + $0x3c] sm:$0xf]
        %v2471 = vld [vmem:[%s2261 + $0x40] sm:$0xf]
        %v2472 = vld [vmem:[%s2261 + $0x44] sm:$0x1]
        %v2473 = vld [vmem:[%s2261 + $0x48] sm:$0xf]
        %v2474 = vld [vmem:[%s2261 + $0x4c] sm:$0xf]
        %v2475 = vld [vmem:[%s2261 + $0x50] sm:$0x1]
        %v2476 = vld [vmem:[%s2261 + $0x54] sm:$0xf]
        %v2477 = vld [vmem:[%s2261 + $0x58] sm:$0xf]
        %v2478 = vld [vmem:[%s2261 + $0x5c] sm:$0x1]
        %v2479 = vld [vmem:[%s2261 + $0x60] sm:$0xf]
        %v2480 = vld [vmem:[%s2261 + $0x64] sm:$0xf]
        %v2481 = vld [vmem:[%s2261 + $0x68] sm:$0x1]
        %v2482 = vld [vmem:[%s2261 + $0x6c] sm:$0xf]
        %v2483 = vld [vmem:[%s2261 + $0x70] sm:$0xf]
        %v2484 = vld [vmem:[%s2261 + $0x74] sm:$0x1]
        %v2485 = vld [vmem:[%s2261 + $0x78] sm:$0xf]
        %v2486 = vld [vmem:[%s2261 + $0x7c] sm:$0xf]
        %v2487 = vld [vmem:[%s2261 + $0x80] sm:$0x1]
        %v2488 = vld [vmem:[%s2261 + $0x84] sm:$0xf]
        %v2489 = vld [vmem:[%s2261 + $0x88] sm:$0xf]
        %v2490 = vld [vmem:[%s2261 + $0x8c] sm:$0x1]
        %v2491 = vld [vmem:[%s2261 + $0x90] sm:$0xf]
        %v2492 = vld [vmem:[%s2261 + $0x94] sm:$0xf]
        %v2493 = vld [vmem:[%s2261 + $0x98] sm:$0x1]
        %v2494 = vld [vmem:[%s2261 + $0x9c] sm:$0xf]
        %v2495 = vld [vmem:[%s2261 + $0xa0] sm:$0xf]
        %v2496 = vld [vmem:[%s2261 + $0xa4] sm:$0x1]
        %v2497 = vld [vmem:[%s2261 + $0xa8] sm:$0xf]
        %v2498 = vld [vmem:[%s2261 + $0xac] sm:$0xf]
        %v2499 = vld [vmem:[%s2261 + $0xb0] sm:$0x1]
        %v2500 = vld [vmem:[%s2261 + $0xb4] sm:$0xf]
        %v2501 = vld [vmem:[%s2261 + $0xb8] sm:$0xf]
        %v2502 = vld [vmem:[%s2261 + $0xbc] sm:$0x1]
        %v2504 = vshrl.u32 %v2455, 16
        %v2506 = vrot.slane %v2504, 4
        %v2507 = vshll.u32 %v2455, 16
        %v2509 = vrot.slane %v2507, 5
        %v2510 = vor.u32 %v2506, %v2509
        %v2511 = vrot.slane %v2510, 4
        %v2513 = vshll.u32 %v2456, 16
        %v2515 = vrot.slane %v2513, 5
        %v2516 = vsel %vm315, %v2511, %v2515
        %v2517 = vshrl.u32 %v2456, 16
        %v2519 = vrot.slane %v2517, 4
        %v2520 = vor.u32 %v2519, %v2515
        %v2521 = vrot.slane %v2520, 4
        %v2523 = vshll.u32 %v2457, 16
        %v2525 = vrot.slane %v2523, 5
        %v2526 = vsel %vm315, %v2521, %v2525
        %v2528 = vshrl.u32 %v2458, 16
        %v2530 = vrot.slane %v2528, 4
        %v2531 = vshll.u32 %v2458, 16
        %v2533 = vrot.slane %v2531, 5
        %v2534 = vor.u32 %v2530, %v2533
        %v2535 = vrot.slane %v2534, 4
        %v2537 = vshll.u32 %v2459, 16
        %v2539 = vrot.slane %v2537, 5
        %v2540 = vsel %vm315, %v2535, %v2539
        %v2541 = vshrl.u32 %v2459, 16
        %v2543 = vrot.slane %v2541, 4
        %v2544 = vor.u32 %v2543, %v2539
        %v2545 = vrot.slane %v2544, 4
        %v2547 = vshll.u32 %v2460, 16
        %v2549 = vrot.slane %v2547, 5
        %v2550 = vsel %vm315, %v2545, %v2549
        %v2552 = vshrl.u32 %v2461, 16
        %v2554 = vrot.slane %v2552, 4
        %v2555 = vshll.u32 %v2461, 16
        %v2557 = vrot.slane %v2555, 5
        %v2558 = vor.u32 %v2554, %v2557
        %v2559 = vrot.slane %v2558, 4
        %v2561 = vshll.u32 %v2462, 16
        %v2563 = vrot.slane %v2561, 5
        %v2564 = vsel %vm315, %v2559, %v2563
        %v2565 = vshrl.u32 %v2462, 16
        %v2567 = vrot.slane %v2565, 4
        %v2568 = vor.u32 %v2567, %v2563
        %v2569 = vrot.slane %v2568, 4
        %v2571 = vshll.u32 %v2463, 16
        %v2573 = vrot.slane %v2571, 5
        %v2574 = vsel %vm315, %v2569, %v2573
        %v2576 = vshrl.u32 %v2464, 16
        %v2578 = vrot.slane %v2576, 4
        %v2579 = vshll.u32 %v2464, 16
        %v2581 = vrot.slane %v2579, 5
        %v2582 = vor.u32 %v2578, %v2581
        %v2583 = vrot.slane %v2582, 4
        %v2585 = vshll.u32 %v2465, 16
        %v2587 = vrot.slane %v2585, 5
        %v2588 = vsel %vm315, %v2583, %v2587
        %v2589 = vshrl.u32 %v2465, 16
        %v2591 = vrot.slane %v2589, 4
        %v2592 = vor.u32 %v2591, %v2587
        %v2593 = vrot.slane %v2592, 4
        %v2595 = vshll.u32 %v2466, 16
        %v2597 = vrot.slane %v2595, 5
        %v2598 = vsel %vm315, %v2593, %v2597
        %v2600 = vshrl.u32 %v2467, 16
        %v2602 = vrot.slane %v2600, 4
        %v2603 = vshll.u32 %v2467, 16
        %v2605 = vrot.slane %v2603, 5
        %v2606 = vor.u32 %v2602, %v2605
        %v2607 = vrot.slane %v2606, 4
        %v2609 = vshll.u32 %v2468, 16
        %v2611 = vrot.slane %v2609, 5
        %v2612 = vsel %vm315, %v2607, %v2611
        %v2613 = vshrl.u32 %v2468, 16
        %v2615 = vrot.slane %v2613, 4
        %v2616 = vor.u32 %v2615, %v2611
        %v2617 = vrot.slane %v2616, 4
        %v2619 = vshll.u32 %v2469, 16
        %v2621 = vrot.slane %v2619, 5
        %v2622 = vsel %vm315, %v2617, %v2621
        %v2624 = vshrl.u32 %v2470, 16
        %v2626 = vrot.slane %v2624, 4
        %v2627 = vshll.u32 %v2470, 16
        %v2629 = vrot.slane %v2627, 5
        %v2630 = vor.u32 %v2626, %v2629
        %v2631 = vrot.slane %v2630, 4
        %v2633 = vshll.u32 %v2471, 16
        %v2635 = vrot.slane %v2633, 5
        %v2636 = vsel %vm315, %v2631, %v2635
        %v2637 = vshrl.u32 %v2471, 16
        %v2639 = vrot.slane %v2637, 4
        %v2640 = vor.u32 %v2639, %v2635
        %v2641 = vrot.slane %v2640, 4
        %v2643 = vshll.u32 %v2472, 16
        %v2645 = vrot.slane %v2643, 5
        %v2646 = vsel %vm315, %v2641, %v2645
        %v2648 = vshrl.u32 %v2473, 16
        %v2650 = vrot.slane %v2648, 4
        %v2651 = vshll.u32 %v2473, 16
        %v2653 = vrot.slane %v2651, 5
        %v2654 = vor.u32 %v2650, %v2653
        %v2655 = vrot.slane %v2654, 4
        %v2657 = vshll.u32 %v2474, 16
        %v2659 = vrot.slane %v2657, 5
        %v2660 = vsel %vm315, %v2655, %v2659
        %v2661 = vshrl.u32 %v2474, 16
        %v2663 = vrot.slane %v2661, 4
        %v2664 = vor.u32 %v2663, %v2659
        %v2665 = vrot.slane %v2664, 4
        %v2667 = vshll.u32 %v2475, 16
        %v2669 = vrot.slane %v2667, 5
        %v2670 = vsel %vm315, %v2665, %v2669
        %v2672 = vshrl.u32 %v2476, 16
        %v2674 = vrot.slane %v2672, 4
        %v2675 = vshll.u32 %v2476, 16
        %v2677 = vrot.slane %v2675, 5
        %v2678 = vor.u32 %v2674, %v2677
        %v2679 = vrot.slane %v2678, 4
        %v2681 = vshll.u32 %v2477, 16
        %v2683 = vrot.slane %v2681, 5
        %v2684 = vsel %vm315, %v2679, %v2683
        %v2685 = vshrl.u32 %v2477, 16
        %v2687 = vrot.slane %v2685, 4
        %v2688 = vor.u32 %v2687, %v2683
        %v2689 = vrot.slane %v2688, 4
        %v2691 = vshll.u32 %v2478, 16
        %v2693 = vrot.slane %v2691, 5
        %v2694 = vsel %vm315, %v2689, %v2693
        %v2696 = vshrl.u32 %v2479, 16
        %v2698 = vrot.slane %v2696, 4
        %v2699 = vshll.u32 %v2479, 16
        %v2701 = vrot.slane %v2699, 5
        %v2702 = vor.u32 %v2698, %v2701
        %v2703 = vrot.slane %v2702, 4
        %v2705 = vshll.u32 %v2480, 16
        %v2707 = vrot.slane %v2705, 5
        %v2708 = vsel %vm315, %v2703, %v2707
        %v2709 = vshrl.u32 %v2480, 16
        %v2711 = vrot.slane %v2709, 4
        %v2712 = vor.u32 %v2711, %v2707
        %v2713 = vrot.slane %v2712, 4
        %v2715 = vshll.u32 %v2481, 16
        %v2717 = vrot.slane %v2715, 5
        %v2718 = vsel %vm315, %v2713, %v2717
        %v2720 = vshrl.u32 %v2482, 16
        %v2722 = vrot.slane %v2720, 4
        %v2723 = vshll.u32 %v2482, 16
        %v2725 = vrot.slane %v2723, 5
        %v2726 = vor.u32 %v2722, %v2725
        %v2727 = vrot.slane %v2726, 4
        %v2729 = vshll.u32 %v2483, 16
        %v2731 = vrot.slane %v2729, 5
        %v2732 = vsel %vm315, %v2727, %v2731
        %v2733 = vshrl.u32 %v2483, 16
        %v2735 = vrot.slane %v2733, 4
        %v2736 = vor.u32 %v2735, %v2731
        %v2737 = vrot.slane %v2736, 4
        %v2739 = vshll.u32 %v2484, 16
        %v2741 = vrot.slane %v2739, 5
        %v2742 = vsel %vm315, %v2737, %v2741
        %v2744 = vshrl.u32 %v2485, 16
        %v2746 = vrot.slane %v2744, 4
        %v2747 = vshll.u32 %v2485, 16
        %v2749 = vrot.slane %v2747, 5
        %v2750 = vor.u32 %v2746, %v2749
        %v2751 = vrot.slane %v2750, 4
        %v2753 = vshll.u32 %v2486, 16
        %v2755 = vrot.slane %v2753, 5
        %v2756 = vsel %vm315, %v2751, %v2755
        %v2757 = vshrl.u32 %v2486, 16
        %v2759 = vrot.slane %v2757, 4
        %v2760 = vor.u32 %v2759, %v2755
        %v2761 = vrot.slane %v2760, 4
        %v2763 = vshll.u32 %v2487, 16
        %v2765 = vrot.slane %v2763, 5
        %v2766 = vsel %vm315, %v2761, %v2765
        %v2768 = vshrl.u32 %v2488, 16
        %v2770 = vrot.slane %v2768, 4
        %v2771 = vshll.u32 %v2488, 16
        %v2773 = vrot.slane %v2771, 5
        %v2774 = vor.u32 %v2770, %v2773
        %v2775 = vrot.slane %v2774, 4
        %v2777 = vshll.u32 %v2489, 16
        %v2779 = vrot.slane %v2777, 5
        %v2780 = vsel %vm315, %v2775, %v2779
        %v2781 = vshrl.u32 %v2489, 16
        %v2783 = vrot.slane %v2781, 4
        %v2784 = vor.u32 %v2783, %v2779
        %v2785 = vrot.slane %v2784, 4
        %v2787 = vshll.u32 %v2490, 16
        %v2789 = vrot.slane %v2787, 5
        %v2790 = vsel %vm315, %v2785, %v2789
        %v2792 = vshrl.u32 %v2491, 16
        %v2794 = vrot.slane %v2792, 4
        %v2795 = vshll.u32 %v2491, 16
        %v2797 = vrot.slane %v2795, 5
        %v2798 = vor.u32 %v2794, %v2797
        %v2799 = vrot.slane %v2798, 4
        %v2801 = vshll.u32 %v2492, 16
        %v2803 = vrot.slane %v2801, 5
        %v2804 = vsel %vm315, %v2799, %v2803
        %v2805 = vshrl.u32 %v2492, 16
        %v2807 = vrot.slane %v2805, 4
        %v2808 = vor.u32 %v2807, %v2803
        %v2809 = vrot.slane %v2808, 4
        %v2811 = vshll.u32 %v2493, 16
        %v2813 = vrot.slane %v2811, 5
        %v2814 = vsel %vm315, %v2809, %v2813
        %v2816 = vshrl.u32 %v2494, 16
        %v2818 = vrot.slane %v2816, 4
        %v2819 = vshll.u32 %v2494, 16
        %v2821 = vrot.slane %v2819, 5
        %v2822 = vor.u32 %v2818, %v2821
        %v2823 = vrot.slane %v2822, 4
        %v2825 = vshll.u32 %v2495, 16
        %v2827 = vrot.slane %v2825, 5
        %v2828 = vsel %vm315, %v2823, %v2827
        %v2829 = vshrl.u32 %v2495, 16
        %v2831 = vrot.slane %v2829, 4
        %v2832 = vor.u32 %v2831, %v2827
        %v2833 = vrot.slane %v2832, 4
        %v2835 = vshll.u32 %v2496, 16
        %v2837 = vrot.slane %v2835, 5
        %v2838 = vsel %vm315, %v2833, %v2837
        %v2840 = vshrl.u32 %v2497, 16
        %v2842 = vrot.slane %v2840, 4
        %v2843 = vshll.u32 %v2497, 16
        %v2845 = vrot.slane %v2843, 5
        %v2846 = vor.u32 %v2842, %v2845
        %v2847 = vrot.slane %v2846, 4
        %v2849 = vshll.u32 %v2498, 16
        %v2851 = vrot.slane %v2849, 5
        %v2852 = vsel %vm315, %v2847, %v2851
        %v2853 = vshrl.u32 %v2498, 16
        %v2855 = vrot.slane %v2853, 4
        %v2856 = vor.u32 %v2855, %v2851
        %v2857 = vrot.slane %v2856, 4
        %v2859 = vshll.u32 %v2499, 16
        %v2861 = vrot.slane %v2859, 5
        %v2862 = vsel %vm315, %v2857, %v2861
        %v2864 = vshrl.u32 %v2500, 16
        %v2866 = vrot.slane %v2864, 4
        %v2867 = vshll.u32 %v2500, 16
        %v2869 = vrot.slane %v2867, 5
        %v2870 = vor.u32 %v2866, %v2869
        %v2871 = vrot.slane %v2870, 4
        %v2873 = vshll.u32 %v2501, 16
        %v2875 = vrot.slane %v2873, 5
        %v2876 = vsel %vm315, %v2871, %v2875
        %v2877 = vshrl.u32 %v2501, 16
        %v2879 = vrot.slane %v2877, 4
        %v2880 = vor.u32 %v2879, %v2875
        %v2881 = vrot.slane %v2880, 4
        %v2883 = vshll.u32 %v2502, 16
        %v2885 = vrot.slane %v2883, 5
        %v2886 = vsel %vm315, %v2881, %v2885
        %2887 = vrot.lane.b32.xlu0 %v2516, 28
        %v2888 = vpop.permute.xlu0 %2887
        %2889 = vrot.lane.b32.xlu0 %v2526, 28
        %v2890 = vpop.permute.xlu0 %2889
        %2891 = vrot.lane.b32.xlu0 %v2540, 28
        %v2892 = vpop.permute.xlu0 %2891
        %2893 = vrot.lane.b32.xlu0 %v2550, 28
        %v2894 = vpop.permute.xlu0 %2893
        %2895 = vrot.lane.b32.xlu0 %v2564, 28
        %v2896 = vpop.permute.xlu0 %2895
        %2897 = vrot.lane.b32.xlu0 %v2574, 28
        %v2898 = vpop.permute.xlu0 %2897
        %2899 = vrot.lane.b32.xlu0 %v2588, 28
        %v2900 = vpop.permute.xlu0 %2899
        %2901 = vrot.lane.b32.xlu0 %v2598, 28
        %v2902 = vpop.permute.xlu0 %2901
        %2903 = vrot.lane.b32.xlu0 %v2612, 28
        %v2904 = vpop.permute.xlu0 %2903
        %2905 = vrot.lane.b32.xlu0 %v2622, 28
        %v2906 = vpop.permute.xlu0 %2905
        %2907 = vrot.lane.b32.xlu0 %v2636, 28
        %v2908 = vpop.permute.xlu0 %2907
        %2909 = vrot.lane.b32.xlu0 %v2646, 28
        %v2910 = vpop.permute.xlu0 %2909
        %2911 = vrot.lane.b32.xlu0 %v2660, 28
        %v2912 = vpop.permute.xlu0 %2911
        %2913 = vrot.lane.b32.xlu0 %v2670, 28
        %v2914 = vpop.permute.xlu0 %2913
        %2915 = vrot.lane.b32.xlu0 %v2684, 28
        %v2916 = vpop.permute.xlu0 %2915
        %2917 = vrot.lane.b32.xlu0 %v2694, 28
        %v2918 = vpop.permute.xlu0 %2917
        %2919 = vrot.lane.b32.xlu0 %v2708, 28
        %v2920 = vpop.permute.xlu0 %2919
        %2921 = vrot.lane.b32.xlu0 %v2718, 28
        %v2922 = vpop.permute.xlu0 %2921
        %2923 = vrot.lane.b32.xlu0 %v2732, 28
        %v2924 = vpop.permute.xlu0 %2923
        %2925 = vrot.lane.b32.xlu0 %v2742, 28
        %v2926 = vpop.permute.xlu0 %2925
        %2927 = vrot.lane.b32.xlu0 %v2756, 28
        %v2928 = vpop.permute.xlu0 %2927
        %2929 = vrot.lane.b32.xlu0 %v2766, 28
        %v2930 = vpop.permute.xlu0 %2929
        %2931 = vrot.lane.b32.xlu0 %v2780, 28
        %v2932 = vpop.permute.xlu0 %2931
        %2933 = vrot.lane.b32.xlu0 %v2790, 28
        %v2934 = vpop.permute.xlu0 %2933
        %2935 = vrot.lane.b32.xlu0 %v2804, 28
        %v2936 = vpop.permute.xlu0 %2935
        %2937 = vrot.lane.b32.xlu0 %v2814, 28
        %v2938 = vpop.permute.xlu0 %2937
        %2939 = vrot.lane.b32.xlu0 %v2828, 28
        %v2940 = vpop.permute.xlu0 %2939
        %2941 = vrot.lane.b32.xlu0 %v2838, 28
        %v2942 = vpop.permute.xlu0 %2941
        %2943 = vrot.lane.b32.xlu0 %v2852, 28
        %v2944 = vpop.permute.xlu0 %2943
        %2945 = vrot.lane.b32.xlu0 %v2862, 28
        %v2946 = vpop.permute.xlu0 %2945
        %2947 = vrot.lane.b32.xlu0 %v2876, 28
        %v2948 = vpop.permute.xlu0 %2947
        %2949 = vrot.lane.b32.xlu0 %v2886, 28
        %v2950 = vpop.permute.xlu0 %2949
        %vm2983 = vcmask 257248
        %2984 = vst.msk [vmem:[#allocation2] sm:$0xf] %vm2983, %v2888
        %2985 = vst.msk [vmem:[#allocation2 + $0x4] sm:$0xf] %vm2983, %v2890
        %2986 = vst.msk [vmem:[#allocation2 + $0x8] sm:$0xf] %vm2983, %v2892
        %2987 = vst.msk [vmem:[#allocation2 + $0xc] sm:$0xf] %vm2983, %v2894
        %2988 = vst.msk [vmem:[#allocation2 + $0x10] sm:$0xf] %vm2983, %v2896
        %2989 = vst.msk [vmem:[#allocation2 + $0x14] sm:$0xf] %vm2983, %v2898
        %2990 = vst.msk [vmem:[#allocation2 + $0x18] sm:$0xf] %vm2983, %v2900
        %2991 = vst.msk [vmem:[#allocation2 + $0x1c] sm:$0xf] %vm2983, %v2902
        %2992 = vst.msk [vmem:[#allocation2 + $0x20] sm:$0xf] %vm2983, %v2904
        %2993 = vst.msk [vmem:[#allocation2 + $0x24] sm:$0xf] %vm2983, %v2906
        %2994 = vst.msk [vmem:[#allocation2 + $0x28] sm:$0xf] %vm2983, %v2908
        %2995 = vst.msk [vmem:[#allocation2 + $0x2c] sm:$0xf] %vm2983, %v2910
        %2996 = vst.msk [vmem:[#allocation2 + $0x30] sm:$0xf] %vm2983, %v2912
        %2997 = vst.msk [vmem:[#allocation2 + $0x34] sm:$0xf] %vm2983, %v2914
        %2998 = vst.msk [vmem:[#allocation2 + $0x38] sm:$0xf] %vm2983, %v2916
        %2999 = vst.msk [vmem:[#allocation2 + $0x3c] sm:$0xf] %vm2983, %v2918
        %3000 = vst.msk [vmem:[#allocation2 + $0x40] sm:$0xf] %vm2983, %v2920
        %3001 = vst.msk [vmem:[#allocation2 + $0x44] sm:$0xf] %vm2983, %v2922
        %3002 = vst.msk [vmem:[#allocation2 + $0x48] sm:$0xf] %vm2983, %v2924
        %3003 = vst.msk [vmem:[#allocation2 + $0x4c] sm:$0xf] %vm2983, %v2926
        %3004 = vst.msk [vmem:[#allocation2 + $0x50] sm:$0xf] %vm2983, %v2928
        %3005 = vst.msk [vmem:[#allocation2 + $0x54] sm:$0xf] %vm2983, %v2930
        %3006 = vst.msk [vmem:[#allocation2 + $0x58] sm:$0xf] %vm2983, %v2932
        %3007 = vst.msk [vmem:[#allocation2 + $0x5c] sm:$0xf] %vm2983, %v2934
        %3008 = vst.msk [vmem:[#allocation2 + $0x60] sm:$0xf] %vm2983, %v2936
        %3009 = vst.msk [vmem:[#allocation2 + $0x64] sm:$0xf] %vm2983, %v2938
        %3010 = vst.msk [vmem:[#allocation2 + $0x68] sm:$0xf] %vm2983, %v2940
        %3011 = vst.msk [vmem:[#allocation2 + $0x6c] sm:$0xf] %vm2983, %v2942
        %3012 = vst.msk [vmem:[#allocation2 + $0x70] sm:$0xf] %vm2983, %v2944
        %3013 = vst.msk [vmem:[#allocation2 + $0x74] sm:$0xf] %vm2983, %v2946
        %3014 = vst.msk [vmem:[#allocation2 + $0x78] sm:$0xf] %vm2983, %v2948
        %3015 = vst.msk [vmem:[#allocation2 + $0x7c] sm:$0xf] %vm2983, %v2950
        %v3016 = vld [vmem:[%s2261] sm:$0xe]
        %v3017 = vld [vmem:[%s2261 + $0x4] sm:$0xf]
        %v3018 = vld [vmem:[%s2261 + $0x8] sm:$0x1]
        %v3019 = vld [vmem:[%s2261 + $0xc] sm:$0xe]
        %v3020 = vld [vmem:[%s2261 + $0x10] sm:$0xf]
        %v3021 = vld [vmem:[%s2261 + $0x14] sm:$0x1]
        %v3022 = vld [vmem:[%s2261 + $0x18] sm:$0xe]
        %v3023 = vld [vmem:[%s2261 + $0x1c] sm:$0xf]
        %v3024 = vld [vmem:[%s2261 + $0x20] sm:$0x1]
        %v3025 = vld [vmem:[%s2261 + $0x24] sm:$0xe]
        %v3026 = vld [vmem:[%s2261 + $0x28] sm:$0xf]
        %v3027 = vld [vmem:[%s2261 + $0x2c] sm:$0x1]
        %v3028 = vld [vmem:[%s2261 + $0x30] sm:$0xe]
        %v3029 = vld [vmem:[%s2261 + $0x34] sm:$0xf]
        %v3030 = vld [vmem:[%s2261 + $0x38] sm:$0x1]
        %v3031 = vld [vmem:[%s2261 + $0x3c] sm:$0xe]
        %v3032 = vld [vmem:[%s2261 + $0x40] sm:$0xf]
        %v3033 = vld [vmem:[%s2261 + $0x44] sm:$0x1]
        %v3034 = vld [vmem:[%s2261 + $0x48] sm:$0xe]
        %v3035 = vld [vmem:[%s2261 + $0x4c] sm:$0xf]
        %v3036 = vld [vmem:[%s2261 + $0x50] sm:$0x1]
        %v3037 = vld [vmem:[%s2261 + $0x54] sm:$0xe]
        %v3038 = vld [vmem:[%s2261 + $0x58] sm:$0xf]
        %v3039 = vld [vmem:[%s2261 + $0x5c] sm:$0x1]
        %v3040 = vld [vmem:[%s2261 + $0x60] sm:$0xe]
        %v3041 = vld [vmem:[%s2261 + $0x64] sm:$0xf]
        %v3042 = vld [vmem:[%s2261 + $0x68] sm:$0x1]
        %v3043 = vld [vmem:[%s2261 + $0x6c] sm:$0xe]
        %v3044 = vld [vmem:[%s2261 + $0x70] sm:$0xf]
        %v3045 = vld [vmem:[%s2261 + $0x74] sm:$0x1]
        %v3046 = vld [vmem:[%s2261 + $0x78] sm:$0xe]
        %v3047 = vld [vmem:[%s2261 + $0x7c] sm:$0xf]
        %v3048 = vld [vmem:[%s2261 + $0x80] sm:$0x1]
        %v3049 = vld [vmem:[%s2261 + $0x84] sm:$0xe]
        %v3050 = vld [vmem:[%s2261 + $0x88] sm:$0xf]
        %v3051 = vld [vmem:[%s2261 + $0x8c] sm:$0x1]
        %v3052 = vld [vmem:[%s2261 + $0x90] sm:$0xe]
        %v3053 = vld [vmem:[%s2261 + $0x94] sm:$0xf]
        %v3054 = vld [vmem:[%s2261 + $0x98] sm:$0x1]
        %v3055 = vld [vmem:[%s2261 + $0x9c] sm:$0xe]
        %v3056 = vld [vmem:[%s2261 + $0xa0] sm:$0xf]
        %v3057 = vld [vmem:[%s2261 + $0xa4] sm:$0x1]
        %v3058 = vld [vmem:[%s2261 + $0xa8] sm:$0xe]
        %v3059 = vld [vmem:[%s2261 + $0xac] sm:$0xf]
        %v3060 = vld [vmem:[%s2261 + $0xb0] sm:$0x1]
        %v3061 = vld [vmem:[%s2261 + $0xb4] sm:$0xe]
        %v3062 = vld [vmem:[%s2261 + $0xb8] sm:$0xf]
        %v3063 = vld [vmem:[%s2261 + $0xbc] sm:$0x1]
        %v3112 = vrot.slane %v3016, 5
        %v3113 = vrot.slane %v3112, 4
        %v3114 = vrot.slane %v3017, 5
        %v3115 = vsel %vm927, %v3113, %v3114
        %v3116 = vrot.slane %v3114, 4
        %v3117 = vrot.slane %v3018, 5
        %v3118 = vsel %vm927, %v3116, %v3117
        %v3119 = vrot.slane %v3019, 5
        %v3120 = vrot.slane %v3119, 4
        %v3121 = vrot.slane %v3020, 5
        %v3122 = vsel %vm927, %v3120, %v3121
        %v3123 = vrot.slane %v3121, 4
        %v3124 = vrot.slane %v3021, 5
        %v3125 = vsel %vm927, %v3123, %v3124
        %v3126 = vrot.slane %v3022, 5
        %v3127 = vrot.slane %v3126, 4
        %v3128 = vrot.slane %v3023, 5
        %v3129 = vsel %vm927, %v3127, %v3128
        %v3130 = vrot.slane %v3128, 4
        %v3131 = vrot.slane %v3024, 5
        %v3132 = vsel %vm927, %v3130, %v3131
        %v3133 = vrot.slane %v3025, 5
        %v3134 = vrot.slane %v3133, 4
        %v3135 = vrot.slane %v3026, 5
        %v3136 = vsel %vm927, %v3134, %v3135
        %v3137 = vrot.slane %v3135, 4
        %v3138 = vrot.slane %v3027, 5
        %v3139 = vsel %vm927, %v3137, %v3138
        %v3140 = vrot.slane %v3028, 5
        %v3141 = vrot.slane %v3140, 4
        %v3142 = vrot.slane %v3029, 5
        %v3143 = vsel %vm927, %v3141, %v3142
        %v3144 = vrot.slane %v3142, 4
        %v3145 = vrot.slane %v3030, 5
        %v3146 = vsel %vm927, %v3144, %v3145
        %v3147 = vrot.slane %v3031, 5
        %v3148 = vrot.slane %v3147, 4
        %v3149 = vrot.slane %v3032, 5
        %v3150 = vsel %vm927, %v3148, %v3149
        %v3151 = vrot.slane %v3149, 4
        %v3152 = vrot.slane %v3033, 5
        %v3153 = vsel %vm927, %v3151, %v3152
        %v3154 = vrot.slane %v3034, 5
        %v3155 = vrot.slane %v3154, 4
        %v3156 = vrot.slane %v3035, 5
        %v3157 = vsel %vm927, %v3155, %v3156
        %v3158 = vrot.slane %v3156, 4
        %v3159 = vrot.slane %v3036, 5
        %v3160 = vsel %vm927, %v3158, %v3159
        %v3161 = vrot.slane %v3037, 5
        %v3162 = vrot.slane %v3161, 4
        %v3163 = vrot.slane %v3038, 5
        %v3164 = vsel %vm927, %v3162, %v3163
        %v3165 = vrot.slane %v3163, 4
        %v3166 = vrot.slane %v3039, 5
        %v3167 = vsel %vm927, %v3165, %v3166
        %v3168 = vrot.slane %v3040, 5
        %v3169 = vrot.slane %v3168, 4
        %v3170 = vrot.slane %v3041, 5
        %v3171 = vsel %vm927, %v3169, %v3170
        %v3172 = vrot.slane %v3170, 4
        %v3173 = vrot.slane %v3042, 5
        %v3174 = vsel %vm927, %v3172, %v3173
        %v3175 = vrot.slane %v3043, 5
        %v3176 = vrot.slane %v3175, 4
        %v3177 = vrot.slane %v3044, 5
        %v3178 = vsel %vm927, %v3176, %v3177
        %v3179 = vrot.slane %v3177, 4
        %v3180 = vrot.slane %v3045, 5
        %v3181 = vsel %vm927, %v3179, %v3180
        %v3182 = vrot.slane %v3046, 5
        %v3183 = vrot.slane %v3182, 4
        %v3184 = vrot.slane %v3047, 5
        %v3185 = vsel %vm927, %v3183, %v3184
        %v3186 = vrot.slane %v3184, 4
        %v3187 = vrot.slane %v3048, 5
        %v3188 = vsel %vm927, %v3186, %v3187
        %v3189 = vrot.slane %v3049, 5
        %v3190 = vrot.slane %v3189, 4
        %v3191 = vrot.slane %v3050, 5
        %v3192 = vsel %vm927, %v3190, %v3191
        %v3193 = vrot.slane %v3191, 4
        %v3194 = vrot.slane %v3051, 5
        %v3195 = vsel %vm927, %v3193, %v3194
        %v3196 = vrot.slane %v3052, 5
        %v3197 = vrot.slane %v3196, 4
        %v3198 = vrot.slane %v3053, 5
        %v3199 = vsel %vm927, %v3197, %v3198
        %v3200 = vrot.slane %v3198, 4
        %v3201 = vrot.slane %v3054, 5
        %v3202 = vsel %vm927, %v3200, %v3201
        %v3203 = vrot.slane %v3055, 5
        %v3204 = vrot.slane %v3203, 4
        %v3205 = vrot.slane %v3056, 5
        %v3206 = vsel %vm927, %v3204, %v3205
        %v3207 = vrot.slane %v3205, 4
        %v3208 = vrot.slane %v3057, 5
        %v3209 = vsel %vm927, %v3207, %v3208
        %v3210 = vrot.slane %v3058, 5
        %v3211 = vrot.slane %v3210, 4
        %v3212 = vrot.slane %v3059, 5
        %v3213 = vsel %vm927, %v3211, %v3212
        %v3214 = vrot.slane %v3212, 4
        %v3215 = vrot.slane %v3060, 5
        %v3216 = vsel %vm927, %v3214, %v3215
        %v3217 = vrot.slane %v3061, 5
        %v3218 = vrot.slane %v3217, 4
        %v3219 = vrot.slane %v3062, 5
        %v3220 = vsel %vm927, %v3218, %v3219
        %v3221 = vrot.slane %v3219, 4
        %v3222 = vrot.slane %v3063, 5
        %v3223 = vsel %vm927, %v3221, %v3222
        %3224 = vrot.lane.b32.xlu0 %v3115, 32
        %v3225 = vpop.permute.xlu0 %3224
        %3226 = vrot.lane.b32.xlu0 %v3118, 32
        %v3227 = vpop.permute.xlu0 %3226
        %3228 = vrot.lane.b32.xlu0 %v3122, 32
        %v3229 = vpop.permute.xlu0 %3228
        %3230 = vrot.lane.b32.xlu0 %v3125, 32
        %v3231 = vpop.permute.xlu0 %3230
        %3232 = vrot.lane.b32.xlu0 %v3129, 32
        %v3233 = vpop.permute.xlu0 %3232
        %3234 = vrot.lane.b32.xlu0 %v3132, 32
        %v3235 = vpop.permute.xlu0 %3234
        %3236 = vrot.lane.b32.xlu0 %v3136, 32
        %v3237 = vpop.permute.xlu0 %3236
        %3238 = vrot.lane.b32.xlu0 %v3139, 32
        %v3239 = vpop.permute.xlu0 %3238
        %3240 = vrot.lane.b32.xlu0 %v3143, 32
        %v3241 = vpop.permute.xlu0 %3240
        %3242 = vrot.lane.b32.xlu0 %v3146, 32
        %v3243 = vpop.permute.xlu0 %3242
        %3244 = vrot.lane.b32.xlu0 %v3150, 32
        %v3245 = vpop.permute.xlu0 %3244
        %3246 = vrot.lane.b32.xlu0 %v3153, 32
        %v3247 = vpop.permute.xlu0 %3246
        %3248 = vrot.lane.b32.xlu0 %v3157, 32
        %v3249 = vpop.permute.xlu0 %3248
        %3250 = vrot.lane.b32.xlu0 %v3160, 32
        %v3251 = vpop.permute.xlu0 %3250
        %3252 = vrot.lane.b32.xlu0 %v3164, 32
        %v3253 = vpop.permute.xlu0 %3252
        %3254 = vrot.lane.b32.xlu0 %v3167, 32
        %v3255 = vpop.permute.xlu0 %3254
        %3256 = vrot.lane.b32.xlu0 %v3171, 32
        %v3257 = vpop.permute.xlu0 %3256
        %3258 = vrot.lane.b32.xlu0 %v3174, 32
        %v3259 = vpop.permute.xlu0 %3258
        %3260 = vrot.lane.b32.xlu0 %v3178, 32
        %v3261 = vpop.permute.xlu0 %3260
        %3262 = vrot.lane.b32.xlu0 %v3181, 32
        %v3263 = vpop.permute.xlu0 %3262
        %3264 = vrot.lane.b32.xlu0 %v3185, 32
        %v3265 = vpop.permute.xlu0 %3264
        %3266 = vrot.lane.b32.xlu0 %v3188, 32
        %v3267 = vpop.permute.xlu0 %3266
        %3268 = vrot.lane.b32.xlu0 %v3192, 32
        %v3269 = vpop.permute.xlu0 %3268
        %3270 = vrot.lane.b32.xlu0 %v3195, 32
        %v3271 = vpop.permute.xlu0 %3270
        %3272 = vrot.lane.b32.xlu0 %v3199, 32
        %v3273 = vpop.permute.xlu0 %3272
        %3274 = vrot.lane.b32.xlu0 %v3202, 32
        %v3275 = vpop.permute.xlu0 %3274
        %3276 = vrot.lane.b32.xlu0 %v3206, 32
        %v3277 = vpop.permute.xlu0 %3276
        %3278 = vrot.lane.b32.xlu0 %v3209, 32
        %v3279 = vpop.permute.xlu0 %3278
        %3280 = vrot.lane.b32.xlu0 %v3213, 32
        %v3281 = vpop.permute.xlu0 %3280
        %3282 = vrot.lane.b32.xlu0 %v3216, 32
        %v3283 = vpop.permute.xlu0 %3282
        %3284 = vrot.lane.b32.xlu0 %v3220, 32
        %v3285 = vpop.permute.xlu0 %3284
        %3286 = vrot.lane.b32.xlu0 %v3223, 32
        %v3287 = vpop.permute.xlu0 %3286
        %vm3320 = vcmask 290048
        %3321 = vst.msk [vmem:[#allocation2] sm:$0xf] %vm3320, %v3225
        %3322 = vst.msk [vmem:[#allocation2 + $0x4] sm:$0xf] %vm3320, %v3227
        %3323 = vst.msk [vmem:[#allocation2 + $0x8] sm:$0xf] %vm3320, %v3229
        %3324 = vst.msk [vmem:[#allocation2 + $0xc] sm:$0xf] %vm3320, %v3231
        %3325 = vst.msk [vmem:[#allocation2 + $0x10] sm:$0xf] %vm3320, %v3233
        %3326 = vst.msk [vmem:[#allocation2 + $0x14] sm:$0xf] %vm3320, %v3235
        %3327 = vst.msk [vmem:[#allocation2 + $0x18] sm:$0xf] %vm3320, %v3237
        %3328 = vst.msk [vmem:[#allocation2 + $0x1c] sm:$0xf] %vm3320, %v3239
        %3329 = vst.msk [vmem:[#allocation2 + $0x20] sm:$0xf] %vm3320, %v3241
        %3330 = vst.msk [vmem:[#allocation2 + $0x24] sm:$0xf] %vm3320, %v3243
        %3331 = vst.msk [vmem:[#allocation2 + $0x28] sm:$0xf] %vm3320, %v3245
        %3332 = vst.msk [vmem:[#allocation2 + $0x2c] sm:$0xf] %vm3320, %v3247
        %3333 = vst.msk [vmem:[#allocation2 + $0x30] sm:$0xf] %vm3320, %v3249
        %3334 = vst.msk [vmem:[#allocation2 + $0x34] sm:$0xf] %vm3320, %v3251
        %3335 = vst.msk [vmem:[#allocation2 + $0x38] sm:$0xf] %vm3320, %v3253
        %3336 = vst.msk [vmem:[#allocation2 + $0x3c] sm:$0xf] %vm3320, %v3255
        %3337 = vst.msk [vmem:[#allocation2 + $0x40] sm:$0xf] %vm3320, %v3257
        %3338 = vst.msk [vmem:[#allocation2 + $0x44] sm:$0xf] %vm3320, %v3259
        %3339 = vst.msk [vmem:[#allocation2 + $0x48] sm:$0xf] %vm3320, %v3261
        %3340 = vst.msk [vmem:[#allocation2 + $0x4c] sm:$0xf] %vm3320, %v3263
        %3341 = vst.msk [vmem:[#allocation2 + $0x50] sm:$0xf] %vm3320, %v3265
        %3342 = vst.msk [vmem:[#allocation2 + $0x54] sm:$0xf] %vm3320, %v3267
        %3343 = vst.msk [vmem:[#allocation2 + $0x58] sm:$0xf] %vm3320, %v3269
        %3344 = vst.msk [vmem:[#allocation2 + $0x5c] sm:$0xf] %vm3320, %v3271
        %3345 = vst.msk [vmem:[#allocation2 + $0x60] sm:$0xf] %vm3320, %v3273
        %3346 = vst.msk [vmem:[#allocation2 + $0x64] sm:$0xf] %vm3320, %v3275
        %3347 = vst.msk [vmem:[#allocation2 + $0x68] sm:$0xf] %vm3320, %v3277
        %3348 = vst.msk [vmem:[#allocation2 + $0x6c] sm:$0xf] %vm3320, %v3279
        %3349 = vst.msk [vmem:[#allocation2 + $0x70] sm:$0xf] %vm3320, %v3281
        %3350 = vst.msk [vmem:[#allocation2 + $0x74] sm:$0xf] %vm3320, %v3283
        %3351 = vst.msk [vmem:[#allocation2 + $0x78] sm:$0xf] %vm3320, %v3285
        %3352 = vst.msk [vmem:[#allocation2 + $0x7c] sm:$0xf] %vm3320, %v3287
        %v3353 = vld [vmem:[#allocation2] sm:$0xf]
        %v3354 = vld [vmem:[#allocation2 + $0x4] sm:$0xf]
        %v3355 = vld [vmem:[#allocation2 + $0x8] sm:$0xf]
        %v3356 = vld [vmem:[#allocation2 + $0xc] sm:$0xf]
        %v3357 = vld [vmem:[#allocation2 + $0x10] sm:$0xf]
        %v3358 = vld [vmem:[#allocation2 + $0x14] sm:$0xf]
        %v3359 = vld [vmem:[#allocation2 + $0x18] sm:$0xf]
        %v3360 = vld [vmem:[#allocation2 + $0x1c] sm:$0xf]
        %v3361 = vld [vmem:[#allocation2 + $0x20] sm:$0xf]
        %v3362 = vld [vmem:[#allocation2 + $0x24] sm:$0xf]
        %v3363 = vld [vmem:[#allocation2 + $0x28] sm:$0xf]
        %v3364 = vld [vmem:[#allocation2 + $0x2c] sm:$0xf]
        %v3365 = vld [vmem:[#allocation2 + $0x30] sm:$0xf]
        %v3366 = vld [vmem:[#allocation2 + $0x34] sm:$0xf]
        %v3367 = vld [vmem:[#allocation2 + $0x38] sm:$0xf]
        %v3368 = vld [vmem:[#allocation2 + $0x3c] sm:$0xf]
        %v3369 = vld [vmem:[#allocation2 + $0x40] sm:$0xf]
        %v3370 = vld [vmem:[#allocation2 + $0x44] sm:$0xf]
        %v3371 = vld [vmem:[#allocation2 + $0x48] sm:$0xf]
        %v3372 = vld [vmem:[#allocation2 + $0x4c] sm:$0xf]
        %v3373 = vld [vmem:[#allocation2 + $0x50] sm:$0xf]
        %v3374 = vld [vmem:[#allocation2 + $0x54] sm:$0xf]
        %v3375 = vld [vmem:[#allocation2 + $0x58] sm:$0xf]
        %v3376 = vld [vmem:[#allocation2 + $0x5c] sm:$0xf]
        %v3377 = vld [vmem:[#allocation2 + $0x60] sm:$0xf]
        %v3378 = vld [vmem:[#allocation2 + $0x64] sm:$0xf]
        %v3379 = vld [vmem:[#allocation2 + $0x68] sm:$0xf]
        %v3380 = vld [vmem:[#allocation2 + $0x6c] sm:$0xf]
        %v3381 = vld [vmem:[#allocation2 + $0x70] sm:$0xf]
        %v3382 = vld [vmem:[#allocation2 + $0x74] sm:$0xf]
        %v3383 = vld [vmem:[#allocation2 + $0x78] sm:$0xf]
        %v3384 = vld [vmem:[#allocation2 + $0x7c] sm:$0xf]
        %v3417 = vunpack.c.l.b16 %v3353
        %v3418 = vunpack.c.l.b16 %v3354
        %v3419 = vunpack.c.l.b16 %v3355
        %v3420 = vunpack.c.l.b16 %v3356
        %v3421 = vunpack.c.l.b16 %v3357
        %v3422 = vunpack.c.l.b16 %v3358
        %v3423 = vunpack.c.l.b16 %v3359
        %v3424 = vunpack.c.l.b16 %v3360
        %v3425 = vunpack.c.l.b16 %v3361
        %v3426 = vunpack.c.l.b16 %v3362
        %v3427 = vunpack.c.l.b16 %v3363
        %v3428 = vunpack.c.l.b16 %v3364
        %v3429 = vunpack.c.l.b16 %v3365
        %v3430 = vunpack.c.l.b16 %v3366
        %v3431 = vunpack.c.l.b16 %v3367
        %v3432 = vunpack.c.l.b16 %v3368
        %v3433 = vunpack.c.l.b16 %v3369
        %v3434 = vunpack.c.l.b16 %v3370
        %v3435 = vunpack.c.l.b16 %v3371
        %v3436 = vunpack.c.l.b16 %v3372
        %v3437 = vunpack.c.l.b16 %v3373
        %v3438 = vunpack.c.l.b16 %v3374
        %v3439 = vunpack.c.l.b16 %v3375
        %v3440 = vunpack.c.l.b16 %v3376
        %v3441 = vunpack.c.l.b16 %v3377
        %v3442 = vunpack.c.l.b16 %v3378
        %v3443 = vunpack.c.l.b16 %v3379
        %v3444 = vunpack.c.l.b16 %v3380
        %v3445 = vunpack.c.l.b16 %v3381
        %v3446 = vunpack.c.l.b16 %v3382
        %v3447 = vunpack.c.l.b16 %v3383
        %v3448 = vunpack.c.l.b16 %v3384
        %v3449 = vpack.c.b16 %v3418, %v3417
        %v3450 = vpack.c.b16 %v3420, %v3419
        %v3451 = vpack.c.b16 %v3422, %v3421
        %v3452 = vpack.c.b16 %v3424, %v3423
        %v3453 = vpack.c.b16 %v3426, %v3425
        %v3454 = vpack.c.b16 %v3428, %v3427
        %v3455 = vpack.c.b16 %v3430, %v3429
        %v3456 = vpack.c.b16 %v3432, %v3431
        %v3457 = vpack.c.b16 %v3434, %v3433
        %v3458 = vpack.c.b16 %v3436, %v3435
        %v3459 = vpack.c.b16 %v3438, %v3437
        %v3460 = vpack.c.b16 %v3440, %v3439
        %v3461 = vpack.c.b16 %v3442, %v3441
        %v3462 = vpack.c.b16 %v3444, %v3443
        %v3463 = vpack.c.b16 %v3446, %v3445
        %v3464 = vpack.c.b16 %v3448, %v3447
        %vm3465 = vcmask 293888
        %v3467 = vsel %vm3465, %v197, 0
        %v3470 = vsel %vm3465, %v3449, 0
        %v3473 = vsel %vm3465, %v3450, 0
        %v3476 = vsel %vm3465, %v3451, 0
        %v3479 = vsel %vm3465, %v3452, 0
        %v3482 = vsel %vm3465, %v3453, 0
        %v3485 = vsel %vm3465, %v3454, 0
        %v3488 = vsel %vm3465, %v3455, 0
        %v3491 = vsel %vm3465, %v3456, 0
        %v3494 = vsel %vm3465, %v3457, 0
        %v3497 = vsel %vm3465, %v3458, 0
        %v3500 = vsel %vm3465, %v3459, 0
        %v3503 = vsel %vm3465, %v3460, 0
        %v3506 = vsel %vm3465, %v3461, 0
        %v3509 = vsel %vm3465, %v3462, 0
        %v3512 = vsel %vm3465, %v3463, 0
        %v3515 = vsel %vm3465, %v3464, 0
        %3517 = vmatprep.subr.bf16.mxu0 0
        %3518 = vmatpush1.bf16.xpose.msra.mxu0 %v3491
        %3519 = vmatprep.subr.bf16.mxu0 0
        %3520 = vmatpush1.bf16.xpose.msra.mxu0 %v3488
        %3521 = vmatprep.subr.bf16.mxu0 0
        %3522 = vmatpush1.bf16.xpose.msra.mxu0 %v3485
        %3523 = vmatprep.subr.bf16.mxu0 0
        %3524 = vmatpush1.bf16.xpose.msra.mxu0 %v3482
        %3525 = vmatprep.subr.bf16.mxu0 0
        %3526 = vmatpush1.bf16.xpose.msra.mxu0 %v3479
        %3527 = vmatprep.subr.bf16.mxu0 0
        %3528 = vmatpush1.bf16.xpose.msra.mxu0 %v3476
        %3529 = vmatprep.subr.bf16.mxu0 0
        %3530 = vmatpush1.bf16.xpose.msra.mxu0 %v3473
        %3531 = vmatprep.subr.bf16.mxu0 0
        %3532 = vmatpush1.bf16.xpose.msra.mxu0 %v3470
        %3533 = vmatprep.subr.bf16.mxu0 0
        %3534 = vmatpush2.bf16.xpose.msra.mxu0 %v3515
        %3535 = vmatprep.subr.bf16.mxu0 0
        %3536 = vmatpush2.bf16.xpose.msra.mxu0 %v3512
        %3537 = vmatprep.subr.bf16.mxu0 0
        %3538 = vmatpush2.bf16.xpose.msra.mxu0 %v3509
        %3539 = vmatprep.subr.bf16.mxu0 0
        %3540 = vmatpush2.bf16.xpose.msra.mxu0 %v3506
        %3541 = vmatprep.subr.bf16.mxu0 0
        %3542 = vmatpush2.bf16.xpose.msra.mxu0 %v3503
        %3543 = vmatprep.subr.bf16.mxu0 0
        %3544 = vmatpush2.bf16.xpose.msra.mxu0 %v3500
        %3545 = vmatprep.subr.bf16.mxu0 0
        %3546 = vmatpush2.bf16.xpose.msra.mxu0 %v3497
        %3547 = vmatprep.subr.bf16.mxu0 0
        %3548 = vmatpush2.bf16.xpose.msra.mxu0 %v3494
        %3549 = vmatprep.mubr.bf16.mxu0 0
        %3550 = vmatmul.mubr.bf16.gmra.mxu0 %v3467
        %v3551 = vpop.f32.mrf.mxu0
        %v3552 = vadd.f32 0.0, %v3551
        %v3553 = vpop.f32.mrf.mxu0
        %v3554 = vadd.f32 0.0, %v3553
        %v3555 = vpop.f32.mrf.mxu0
        %v3556 = vpop.f32.mrf.mxu0
        %3557 = vdwg.mxu0
        %v3558 = vadd.f32 %v3552, %v3554
        %3559 = vadd.xlane.f32.xlu0 %v3558
        %v3560 = vpop.xlane.xlu0 %3559
        %v3561 = vrot.slane %v3560, 4
        %v3562 = vadd.f32 %v3560, %v3561
        %v3563 = vrot.slane %v3562, 2
        %v3564 = vadd.f32 %v3562, %v3563
        %v3565 = vrot.slane %v3564, 1
        %v3566 = vadd.f32 %v3564, %v3565
        %s3567 = vtos %v3566
        %v3568 = vrcp.pop 2048.0
        %s3569 = vtos %v3568
        %s3570 = smul.f32 %s3567, %s3569
        %v3571 = vstv %s3570
        %v3572 = vsub.f32 %v3552, %v3571
        %v3573 = vsub.f32 %v3554, %v3571
        %v3574 = vmul.f32 %v3572, %v3572
        %v3575 = vmul.f32 %v3573, %v3573
        %v3576 = vadd.f32 %v3574, %v3575
        %3577 = vadd.xlane.f32.xlu0 %v3576
        %v3578 = vpop.xlane.xlu0 %3577
        %v3579 = vrot.slane %v3578, 4
        %v3580 = vadd.f32 %v3578, %v3579
        %v3581 = vrot.slane %v3580, 2
        %v3582 = vadd.f32 %v3580, %v3581
        %v3583 = vrot.slane %v3582, 1
        %v3584 = vadd.f32 %v3582, %v3583
        %s3585 = vtos %v3584
        %v3586 = vrcp.pop 2048.0
        %s3587 = vtos %v3586
        %s3588 = smul.f32 %s3585, %s3587
        %s3589 = sadd.f32 %s3588, 1e-05
        %v3590 = vstv %s3589
        %v3591 = vrsqrt.pop %v3590
        %s3592 = vtos %v3591
        %v3593 = vstv %s3592
        %v3594 = vmul.f32 %v3572, %v3593
        %v3595 = vmul.f32 %v3573, %v3593
        %3597 = vset.pattern.permute.xlu0 0
        %3598 = vperm.xlu0 %3597, %v198
        %v3599 = vpop.permute.xlu0 %3598
        %v3601 = vmul.f32 %v3594, %v3599
        %v3602 = vmul.f32 %v3595, %v3599
        %3604 = vset.pattern.permute.xlu0 0
        %3605 = vperm.xlu0 %3604, %v199
        %v3606 = vpop.permute.xlu0 %3605
        %v3608 = vadd.f32 %v3601, %v3606
        %v3609 = vadd.f32 %v3602, %v3606
        %v3610 = vmax.f32 %v3608, 0.0
        %v3611 = vmax.f32 %v3609, 0.0
        %3612 = vst [vmem:[%s190] sm:$0xff] %v3610
        %3613 = vst [vmem:[%s190 + $0x8] sm:$0xff] %v3611
        %s3614 = sand.u32 %s115, 1
        %s3615 = scalar_lea.sflag [#allocation4], %s3614
        %s3616 = sand.u32 %s115, 1
        %s3617 = smul.addr %s3616, 16
        %s3618 = scalar_lea.vmem [#allocation3], %s3617
        // Predicated region
        $region37: #{tpu_custom_call.1} parent=35 // pred_check
          %p3619 = pneg %p125
        $region38: #{tpu_custom_call.1} parent=35 // pred_check_branch
          %3621 = sbr.rel (%p3619) target = $region40
        $region39: #{tpu_custom_call.1} parent=35 // pred_region
          %s3623 = ssub.s32 256, 256
          %3624 = vsyncadd %s3615, %s3623
          %s3625 = smul.addr %s18, 2
          %s3626 = smul.addr %s3625, 128
          %s3627 = scalar_lea.hbm %s4, %s3626
          %s3629 = sshll.u32 %s3618, 4
          %s3630 = int_to_ptr.vmem [resolvable:$true] %s3629
          %3632 = dma.vmem_to_hbm [thread:$0]  %s3630, 256, %s3627, %s3615
        $region40: #{tpu_custom_call.1} parent=35 // pred_fallthru
          _
      $region36: #{tpu_custom_call.1} parent=5 // pred_fallthru
        _
      %p3633 = scmp.le.s32.totalorder 2, %s13
      // Predicated region
      $region41: #{tpu_custom_call.1} parent=5 // pred_check
        %p3634 = pneg %p3633
      $region42: #{tpu_custom_call.1} parent=5 // pred_check_branch
        %3636 = sbr.rel (%p3634) target = $region44
      $region43: #{tpu_custom_call.1} parent=5 // pred_region
        %s3637 = ssub.s32 %s13, 2
        // Predicated region
        $region45: #{tpu_custom_call.1} parent=43 // pred_check
          %p3638 = pneg %p131
        $region46: #{tpu_custom_call.1} parent=43 // pred_check_branch
          %3640 = sbr.rel (%p3638) target = $region48
        $region47: #{tpu_custom_call.1} parent=43 // pred_region
          %s3641 = sand.u32 %s116, 1
          %s3642 = scalar_lea.sflag [#allocation4], %s3641
          %s3643 = sand.u32 %s116, 1
          %s3644 = smul.addr %s3643, 16
          %s3645 = scalar_lea.vmem [#allocation3], %s3644
          %3646 = dma.done %s3642, 256
        $region48: #{tpu_custom_call.1} parent=43 // pred_fallthru
          _
      $region44: #{tpu_custom_call.1} parent=5 // pred_fallthru
        _
    $region6: #{tpu_custom_call.1} parent=1 // loop_footer
      %s17 = sadd.s32 1, %s13
    $region7: #{tpu_custom_call.1} parent=1 // loop_footer_branch
      %12 = sbr.rel target = $region3
    $region8: #{tpu_custom_call.1} parent=1 // loop_exit
      _
    %3647 = vsyncpa [#allocation4], 1
    %s3648 = scalar_lea.sflag [#allocation4], 1
    %3649 = vsyncpa %s3648, 1

</llo_original>
